<compile_context>
chip_gen: v7x
topology: tpu7x:2x2x1
jax: 0.10.0
libtpu: 0.0.40
codegen_flags: <defaults>
</compile_context>

<pallas_src>
import functools

import numpy as np
import jax
import jax.numpy as jnp
from jax.experimental import pallas as pl
from jax.experimental.pallas import tpu as pltpu


# ---------------------------------------------------------------------------
# Fused Pallas kernel: stacked bi-LSTM + last-step features + Linear
# ---------------------------------------------------------------------------
def type4py_fused_kernel(x_ref, xt_ref, mg_ref, mh_ref, *rest, T, B, H, num_layers):
    """All refs are full-array VMEM blocks.

    x_ref:   (T*B, Din)  time-major flattened input (row t*B+b = x[b, t, :])
    xt_ref:  (B, aval)   available-type features
    mg_ref:  (1, 8H)     1.0 on forward-direction gate columns, 0.0 on backward ones
    mh_ref:  (1, 2H)     1.0 on forward-direction hidden columns
    rest:    per layer (w_ih (Din_l,8H), w_hh (2H,8H) block-diag, b (1,8H)),
             then lin_w_lstm (2H,O), lin_w_type (aval,O), lin_b (1,O),
             then out_ref (B,O), proj_ref VMEM (T*B,8H), seq_ref VMEM (T*B,2H).
    Gate column layout (gate-major, direction-minor): [i_f,i_b,f_f,f_b,g_f,g_b,o_f,o_b].
    """
    nl = 3 * num_layers
    layer_refs = rest[:nl]
    w_lstm_ref, w_type_ref, b_lin_ref, out_ref, proj_ref, seq_ref = rest[nl:]

    H2 = 2 * H
    mask_g = mg_ref[...]          # (1, 8H)
    mask_h = mh_ref[...]          # (1, 2H)

    h_first = h_last = None
    for layer in range(num_layers):
        # Weights hoisted out of the recurrence (loaded into vregs once per layer).
        w_ih = layer_refs[3 * layer][...]       # (Din_l, 8H)
        w_hh = layer_refs[3 * layer + 1][...]   # (2H, 8H) block-diagonal per direction
        bias = layer_refs[3 * layer + 2][...]   # (1, 8H)

        x_seq = x_ref[...] if layer == 0 else seq_ref[...]   # (T*B, Din_l)

        # Hoisted input projection: one MXU pass for all timesteps & both directions.
        proj_ref[...] = (
            jnp.dot(x_seq, w_ih, preferred_element_type=jnp.float32) + bias
        )  # (T*B, 8H)

        h = None                  # (B, 2H) = [h_fwd | h_bwd]
        c = None                  # (B, 2H) = [c_fwd | c_bwd]
        h_steps = []
        # Fully unrolled recurrence: step s consumes x[s] (fwd) and x[T-1-s] (bwd).
        for s in range(T):
            p_f = proj_ref[pl.ds(s * B, B), :]
            if s == T - 1 - s:
                gx = p_f                                       # both directions read same step
            else:
                p_b = proj_ref[pl.ds((T - 1 - s) * B, B), :]
                gx = p_b + mask_g * (p_f - p_b)                # per-direction time select

            if s == 0:
                gates = gx                                     # h == 0: skip recurrent matmul
            else:
                gates = gx + jnp.dot(h, w_hh, preferred_element_type=jnp.float32)  # (B, 8H)

            i_g = jax.nn.sigmoid(gates[:, 0 * H2:1 * H2])      # [i_f | i_b]
            g_g = jnp.tanh(gates[:, 2 * H2:3 * H2])            # [g_f | g_b]
            o_g = jax.nn.sigmoid(gates[:, 3 * H2:4 * H2])      # [o_f | o_b]
            if s == 0:
                c = i_g * g_g                                  # c == 0: skip forget path
            else:
                f_g = jax.nn.sigmoid(gates[:, 1 * H2:2 * H2])  # [f_f | f_b]
                c = f_g * c + i_g * g_g
            h = o_g * jnp.tanh(c)
            h_steps.append(h)

        if layer + 1 < num_layers:
            # Next-layer input in original time order:
            #   x_{l+1}[t] = [h_fwd(step t) | h_bwd(step T-1-t)]
            for t in range(T):
                seq_ref[pl.ds(t * B, B), :] = (
                    h_steps[T - 1 - t] + mask_h * (h_steps[t] - h_steps[T - 1 - t])
                )
        h_first, h_last = h_steps[0], h_steps[T - 1]

    # Last-timestep bidirectional features of the top layer:
    #   fwd hidden from the last step, bwd hidden from step 0 (which processed x[T-1]).
    feats = h_first + mask_h * (h_last - h_first)              # (B, 2H)

    # Fused Linear on cat([feats, x_type]) done as two matmuls (avoids a lane concat).
    out_ref[...] = (
        jnp.dot(feats, w_lstm_ref[...], preferred_element_type=jnp.float32)
        + jnp.dot(xt_ref[...], w_type_ref[...], preferred_element_type=jnp.float32)
        + b_lin_ref[...]
    )


# ---------------------------------------------------------------------------
# Wrapper
# ---------------------------------------------------------------------------
def type4py_forward(params, x_id, x_type):
    B, T, Din = x_id.shape
    H = params["hidden_size"]
    layers = params["lstm_layers"]
    num_layers = len(layers)
    O = params["lin_b"].shape[-1]
    H2, G = 2 * H, 8 * H

    # dropout == identity (inference)
    x_flat = jnp.transpose(x_id, (1, 0, 2)).reshape(T * B, Din)   # time-major, flattened
    mask_g = jnp.asarray((np.arange(G) % H2) < H, jnp.float32)[None, :]   # (1, 8H)
    mask_h = jnp.asarray(np.arange(H2) < H, jnp.float32)[None, :]         # (1, 2H)

    inputs = [x_flat, x_type, mask_g, mask_h]
    for lp in layers:
        inputs += [lp["w_ih"], lp["w_hh"], lp["b"]]
    inputs += [params["lin_w_lstm"], params["lin_w_type"], params["lin_b"]]

    kernel = functools.partial(
        type4py_fused_kernel, T=T, B=B, H=H, num_layers=num_layers)

    def zmap(i):
        return (0, 0)

    return pl.pallas_call(
        kernel,
        out_shape=jax.ShapeDtypeStruct((B, O), jnp.float32),
        grid=(1,),
        in_specs=[pl.BlockSpec(a.shape, zmap) for a in inputs],
        out_specs=pl.BlockSpec((B, O), zmap),
        scratch_shapes=[
            pltpu.VMEM((T * B, G), jnp.float32),    # hoisted gate projections (all steps)
            pltpu.VMEM((T * B, H2), jnp.float32),   # inter-layer sequence buffer
        ],
        compiler_params=pltpu.CompilerParams(
            dimension_semantics=("arbitrary",)),
    )(*inputs)


# ---------------------------------------------------------------------------
# Parameter construction (PyTorch-shaped raw params -> fused layout)
# ---------------------------------------------------------------------------
def pack_bidir_layer(fwd, bwd, H):
    """Pack per-direction PyTorch-shaped LSTM params into the fused-gate layout.

    fwd/bwd = (w_ih (4H,Din), w_hh (4H,H), b = b_ih + b_hh (4H,)), gate row order i,f,g,o.
    Fused gate columns (width 8H): [i_f,i_b,f_f,f_b,g_f,g_b,o_f,o_b], each H lanes.
    """
    ih_cols, b_cols = [], []
    w_hh_blk = jnp.zeros((2 * H, 8 * H), jnp.float32)
    for g in range(4):
        for d, (w_ih, w_hh, b) in enumerate((fwd, bwd)):
            ih_cols.append(w_ih[g * H:(g + 1) * H, :].T)          # (Din, H)
            b_cols.append(b[g * H:(g + 1) * H])
            col = g * 2 * H + d * H
            w_hh_blk = w_hh_blk.at[d * H:(d + 1) * H, col:col + H].set(
                w_hh[g * H:(g + 1) * H, :].T)
    return dict(
        w_ih=jnp.concatenate(ih_cols, axis=1),     # (Din, 8H)
        w_hh=w_hh_blk,                             # (2H, 8H) block-diagonal per direction
        b=jnp.concatenate(b_cols)[None, :],        # (1, 8H)
    )


def init_params(key, input_size, hidden_size, aval_type_size, num_layers, output_size):
    H = hidden_size
    bound = 1.0 / float(H) ** 0.5
    packed_layers, raw_layers = [], []
    for layer in range(num_layers):
        d_in = input_size if layer == 0 else 2 * H
        dirs = []
        for _ in range(2):
            key, k1, k2, k3, k4 = jax.random.split(key, 5)
            w_ih = jax.random.uniform(k1, (4 * H, d_in), minval=-bound, maxval=bound,
                                      dtype=jnp.float32)
            w_hh = jax.random.uniform(k2, (4 * H, H), minval=-bound, maxval=bound,
                                      dtype=jnp.float32)
            b_ih = jax.random.uniform(k3, (4 * H,), minval=-bound, maxval=bound,
                                      dtype=jnp.float32)
            b_hh = jax.random.uniform(k4, (4 * H,), minval=-bound, maxval=bound,
                                      dtype=jnp.float32)
            dirs.append((w_ih, w_hh, b_ih + b_hh))
        raw_layers.append(tuple(dirs))
        packed_layers.append(pack_bidir_layer(dirs[0], dirs[1], H))

    lin_in = 2 * H + aval_type_size
    lb = 1.0 / float(lin_in) ** 0.5
    key, kw, kb = jax.random.split(key, 3)
    lin_w = jax.random.uniform(kw, (output_size, lin_in), minval=-lb, maxval=lb,
                               dtype=jnp.float32)
    lin_b = jax.random.uniform(kb, (output_size,), minval=-lb, maxval=lb,
                               dtype=jnp.float32)
    lin_w_t = jnp.transpose(lin_w)                 # (lin_in, O)
    params = dict(
        hidden_size=H,
        lstm_layers=packed_layers,
        lin_w_lstm=lin_w_t[:2 * H, :],             # (2H, O)
        lin_w_type=lin_w_t[2 * H:, :],             # (aval, O)
        lin_b=lin_b[None, :],                      # (1, O)
    )
    raw = dict(lstm_layers=raw_layers, lin_w=lin_w, lin_b=lin_b)
    return key, params, raw


# ---------------------------------------------------------------------------
# Pure-JAX reference (for a correctness self-check)
# ---------------------------------------------------------------------------
def _lstm_dir_ref(x_tbd, w_ih, w_hh, b):
    T, B, _ = x_tbd.shape
    H = w_hh.shape[1]
    h = jnp.zeros((B, H), jnp.float32)
    c = jnp.zeros((B, H), jnp.float32)
    ys = []
    for t in range(T):
        gates = x_tbd[t] @ w_ih.T + h @ w_hh.T + b
        i = jax.nn.sigmoid(gates[:, :H])
        f = jax.nn.sigmoid(gates[:, H:2 * H])
        g = jnp.tanh(gates[:, 2 * H:3 * H])
        o = jax.nn.sigmoid(gates[:, 3 * H:4 * H])
        c = f * c + i * g
        h = o * jnp.tanh(c)
        ys.append(h)
    return jnp.stack(ys)


def type4py_forward_ref(raw, x_id, x_type):
    x = jnp.transpose(x_id, (1, 0, 2))
    for fwd, bwd in raw["lstm_layers"]:
        yf = _lstm_dir_ref(x, *fwd)
        yb = _lstm_dir_ref(x[::-1], *bwd)[::-1]
        x = jnp.concatenate([yf, yb], axis=-1)
    feats = jnp.concatenate([x[-1], x_type], axis=1)
    return feats @ raw["lin_w"].T + raw["lin_b"][None, :]


# ---------------------------------------------------------------------------
# Main
# ---------------------------------------------------------------------------
if __name__ == "__main__":
    B, T = 2, 8
    input_size = 32
    hidden_size = 16          # 8*H = 128 -> fused gates fill exactly one vreg lane width
    aval_type_size = 8
    num_layers = 2
    output_size = 10

    key = jax.random.PRNGKey(0)
    key, params, raw = init_params(key, input_size, hidden_size, aval_type_size,
                                   num_layers, output_size)

    key, k1, k2 = jax.random.split(key, 3)
    x_id = jax.random.normal(k1, (B, T, input_size), dtype=jnp.float32)
    x_type = jax.random.normal(k2, (B, aval_type_size), dtype=jnp.float32)

    out = type4py_forward(params, x_id, x_type)
    out = jax.block_until_ready(out)
    assert out.shape == (B, output_size), out.shape
    assert out.dtype == jnp.float32

    ref = jax.block_until_ready(type4py_forward_ref(raw, x_id, x_type))
    err = float(jnp.max(jnp.abs(out - ref)))
    assert err < 5e-2, f"mismatch vs reference: max abs err = {err}"

    print("KERNEL_OK")
</pallas_src>

<mosaic_0001>
module attributes {stable_mosaic.version = 11 : i64} {
  func.func @type4py_fused_kernel(%arg0: i32, %arg1: memref<16x32xf32, #tpu.memory_space<vmem>>, %arg2: memref<2x8xf32, #tpu.memory_space<vmem>>, %arg3: memref<1x128xf32, #tpu.memory_space<vmem>>, %arg4: memref<1x32xf32, #tpu.memory_space<vmem>>, %arg5: memref<32x128xf32, #tpu.memory_space<vmem>>, %arg6: memref<32x128xf32, #tpu.memory_space<vmem>>, %arg7: memref<1x128xf32, #tpu.memory_space<vmem>>, %arg8: memref<32x128xf32, #tpu.memory_space<vmem>>, %arg9: memref<32x128xf32, #tpu.memory_space<vmem>>, %arg10: memref<1x128xf32, #tpu.memory_space<vmem>>, %arg11: memref<32x10xf32, #tpu.memory_space<vmem>>, %arg12: memref<8x10xf32, #tpu.memory_space<vmem>>, %arg13: memref<1x10xf32, #tpu.memory_space<vmem>>, %arg14: memref<2x10xf32, #tpu.memory_space<vmem>>, %arg15: memref<16x128xf32, #tpu.memory_space<vmem>>, %arg16: memref<16x32xf32, #tpu.memory_space<vmem>>) attributes {dimension_semantics = [#tpu.dimension_semantics<arbitrary>], iteration_bounds = array<i64: 1>, scalar_prefetch = 0 : i64, scratch_operands = 2 : i64, tpu.core_type = #tpu.core_type<tc>, window_params = [{pipeline_mode = #tpu.pipeline_mode<synchronous>, transform_indices = @transform_0, window_bounds = array<i64: 16, 32>}, {pipeline_mode = #tpu.pipeline_mode<synchronous>, transform_indices = @transform_1, window_bounds = array<i64: 2, 8>}, {pipeline_mode = #tpu.pipeline_mode<synchronous>, transform_indices = @transform_2, window_bounds = array<i64: 1, 128>}, {pipeline_mode = #tpu.pipeline_mode<synchronous>, transform_indices = @transform_3, window_bounds = array<i64: 1, 32>}, {pipeline_mode = #tpu.pipeline_mode<synchronous>, transform_indices = @transform_4, window_bounds = array<i64: 32, 128>}, {pipeline_mode = #tpu.pipeline_mode<synchronous>, transform_indices = @transform_5, window_bounds = array<i64: 32, 128>}, {pipeline_mode = #tpu.pipeline_mode<synchronous>, transform_indices = @transform_6, window_bounds = array<i64: 1, 128>}, {pipeline_mode = #tpu.pipeline_mode<synchronous>, transform_indices = @transform_7, window_bounds = array<i64: 32, 128>}, {pipeline_mode = #tpu.pipeline_mode<synchronous>, transform_indices = @transform_8, window_bounds = array<i64: 32, 128>}, {pipeline_mode = #tpu.pipeline_mode<synchronous>, transform_indices = @transform_9, window_bounds = array<i64: 1, 128>}, {pipeline_mode = #tpu.pipeline_mode<synchronous>, transform_indices = @transform_10, window_bounds = array<i64: 32, 10>}, {pipeline_mode = #tpu.pipeline_mode<synchronous>, transform_indices = @transform_11, window_bounds = array<i64: 8, 10>}, {pipeline_mode = #tpu.pipeline_mode<synchronous>, transform_indices = @transform_12, window_bounds = array<i64: 1, 10>}, {pipeline_mode = #tpu.pipeline_mode<synchronous>, transform_indices = @transform_13, window_bounds = array<i64: 2, 10>}]} {
    %c0 = arith.constant 0 : index
    %c0_0 = arith.constant 0 : index
    %0 = vector.load %arg3[%c0, %c0_0] : memref<1x128xf32, #tpu.memory_space<vmem>>, vector<1x128xf32>
    %c0_1 = arith.constant 0 : index
    %c0_2 = arith.constant 0 : index
    %1 = vector.load %arg4[%c0_1, %c0_2] : memref<1x32xf32, #tpu.memory_space<vmem>>, vector<1x32xf32>
    %c0_3 = arith.constant 0 : index
    %c0_4 = arith.constant 0 : index
    %2 = vector.load %arg5[%c0_3, %c0_4] : memref<32x128xf32, #tpu.memory_space<vmem>>, vector<32x128xf32>
    %c0_5 = arith.constant 0 : index
    %c0_6 = arith.constant 0 : index
    %3 = vector.load %arg6[%c0_5, %c0_6] : memref<32x128xf32, #tpu.memory_space<vmem>>, vector<32x128xf32>
    %c0_7 = arith.constant 0 : index
    %c0_8 = arith.constant 0 : index
    %4 = vector.load %arg7[%c0_7, %c0_8] : memref<1x128xf32, #tpu.memory_space<vmem>>, vector<1x128xf32>
    %c0_9 = arith.constant 0 : index
    %c0_10 = arith.constant 0 : index
    %5 = vector.load %arg1[%c0_9, %c0_10] : memref<16x32xf32, #tpu.memory_space<vmem>>, vector<16x32xf32>
    %cst = arith.constant dense<0.000000e+00> : vector<16x128xf32>
    %6 = tpu.matmul %5, %2, %cst {dimension_numbers = #tpu.dot_dimension_numbers<[1], [0], [0], [1], [0, 0, 1, 1], [], []>} : vector<16x32xf32>, vector<32x128xf32>, vector<16x128xf32> -> vector<16x128xf32>
    %7 = vector.broadcast %4 : vector<1x128xf32> to vector<16x128xf32>
    %8 = arith.addf %6, %7 : vector<16x128xf32>
    %c0_11 = arith.constant 0 : index
    %c0_12 = arith.constant 0 : index
    %9 = vector.load %arg15[%c0_11, %c0_12] : memref<16x128xf32, #tpu.memory_space<vmem>>, vector<16x128xf32>
    tpu.vector_store %arg15[%c0_11, %c0_12], %8 {strides = array<i32>} : memref<16x128xf32, #tpu.memory_space<vmem>>, vector<16x128xf32>,
    %c0_13 = arith.constant 0 : index
    %c0_14 = arith.constant 0 : index
    %10 = vector.load %arg15[%c0_13, %c0_14] : memref<16x128xf32, #tpu.memory_space<vmem>>, vector<2x128xf32>
    %c14 = arith.constant 14 : index
    %c0_15 = arith.constant 0 : index
    %11 = vector.load %arg15[%c14, %c0_15] : memref<16x128xf32, #tpu.memory_space<vmem>>, vector<2x128xf32>
    %12 = arith.subf %10, %11 : vector<2x128xf32>
    %13 = vector.broadcast %0 : vector<1x128xf32> to vector<2x128xf32>
    %14 = arith.mulf %13, %12 : vector<2x128xf32>
    %15 = arith.addf %11, %14 : vector<2x128xf32>
    %16 = vector.extract_strided_slice %15 {offsets = [0, 0], sizes = [2, 32], strides = [1, 1]} : vector<2x128xf32> to vector<2x32xf32>
    %17 = arith.negf %16 : vector<2x32xf32>
    %18 = math.exp %17 : vector<2x32xf32>
    %cst_16 = arith.constant 1.000000e+00 : f32
    %19 = vector.broadcast %cst_16 : f32 to vector<2x32xf32>
    %20 = arith.addf %19, %18 : vector<2x32xf32>
    %21 = arith.divf %19, %20 : vector<2x32xf32>
    %22 = vector.extract_strided_slice %15 {offsets = [0, 64], sizes = [2, 32], strides = [1, 1]} : vector<2x128xf32> to vector<2x32xf32>
    %23 = math.tanh %22 : vector<2x32xf32>
    %24 = vector.extract_strided_slice %15 {offsets = [0, 96], sizes = [2, 32], strides = [1, 1]} : vector<2x128xf32> to vector<2x32xf32>
    %25 = arith.negf %24 : vector<2x32xf32>
    %26 = math.exp %25 : vector<2x32xf32>
    %cst_17 = arith.constant 1.000000e+00 : f32
    %27 = vector.broadcast %cst_17 : f32 to vector<2x32xf32>
    %28 = arith.addf %27, %26 : vector<2x32xf32>
    %29 = arith.divf %27, %28 : vector<2x32xf32>
    %30 = arith.mulf %21, %23 : vector<2x32xf32>
    %31 = math.tanh %30 : vector<2x32xf32>
    %32 = arith.mulf %29, %31 : vector<2x32xf32>
    %c2 = arith.constant 2 : index
    %c0_18 = arith.constant 0 : index
    %33 = vector.load %arg15[%c2, %c0_18] : memref<16x128xf32, #tpu.memory_space<vmem>>, vector<2x128xf32>
    %c12 = arith.constant 12 : index
    %c0_19 = arith.constant 0 : index
    %34 = vector.load %arg15[%c12, %c0_19] : memref<16x128xf32, #tpu.memory_space<vmem>>, vector<2x128xf32>
    %35 = arith.subf %33, %34 : vector<2x128xf32>
    %36 = vector.broadcast %0 : vector<1x128xf32> to vector<2x128xf32>
    %37 = arith.mulf %36, %35 : vector<2x128xf32>
    %38 = arith.addf %34, %37 : vector<2x128xf32>
    %cst_20 = arith.constant dense<0.000000e+00> : vector<2x128xf32>
    %39 = tpu.matmul %32, %3, %cst_20 {dimension_numbers = #tpu.dot_dimension_numbers<[1], [0], [0], [1], [0, 0, 1, 1], [], []>} : vector<2x32xf32>, vector<32x128xf32>, vector<2x128xf32> -> vector<2x128xf32>
    %40 = arith.addf %38, %39 : vector<2x128xf32>
    %41 = vector.extract_strided_slice %40 {offsets = [0, 0], sizes = [2, 32], strides = [1, 1]} : vector<2x128xf32> to vector<2x32xf32>
    %42 = arith.negf %41 : vector<2x32xf32>
    %43 = math.exp %42 : vector<2x32xf32>
    %cst_21 = arith.constant 1.000000e+00 : f32
    %44 = vector.broadcast %cst_21 : f32 to vector<2x32xf32>
    %45 = arith.addf %44, %43 : vector<2x32xf32>
    %46 = arith.divf %44, %45 : vector<2x32xf32>
    %47 = vector.extract_strided_slice %40 {offsets = [0, 64], sizes = [2, 32], strides = [1, 1]} : vector<2x128xf32> to vector<2x32xf32>
    %48 = math.tanh %47 : vector<2x32xf32>
    %49 = vector.extract_strided_slice %40 {offsets = [0, 96], sizes = [2, 32], strides = [1, 1]} : vector<2x128xf32> to vector<2x32xf32>
    %50 = arith.negf %49 : vector<2x32xf32>
    %51 = math.exp %50 : vector<2x32xf32>
    %cst_22 = arith.constant 1.000000e+00 : f32
    %52 = vector.broadcast %cst_22 : f32 to vector<2x32xf32>
    %53 = arith.addf %52, %51 : vector<2x32xf32>
    %54 = arith.divf %52, %53 : vector<2x32xf32>
    %55 = vector.extract_strided_slice %40 {offsets = [0, 32], sizes = [2, 32], strides = [1, 1]} : vector<2x128xf32> to vector<2x32xf32>
    %56 = arith.negf %55 : vector<2x32xf32>
    %57 = math.exp %56 : vector<2x32xf32>
    %cst_23 = arith.constant 1.000000e+00 : f32
    %58 = vector.broadcast %cst_23 : f32 to vector<2x32xf32>
    %59 = arith.addf %58, %57 : vector<2x32xf32>
    %60 = arith.divf %58, %59 : vector<2x32xf32>
    %61 = arith.mulf %60, %30 : vector<2x32xf32>
    %62 = arith.mulf %46, %48 : vector<2x32xf32>
    %63 = arith.addf %61, %62 : vector<2x32xf32>
    %64 = math.tanh %63 : vector<2x32xf32>
    %65 = arith.mulf %54, %64 : vector<2x32xf32>
    %c4 = arith.constant 4 : index
    %c0_24 = arith.constant 0 : index
    %66 = vector.load %arg15[%c4, %c0_24] : memref<16x128xf32, #tpu.memory_space<vmem>>, vector<2x128xf32>
    %c10 = arith.constant 10 : index
    %c0_25 = arith.constant 0 : index
    %67 = vector.load %arg15[%c10, %c0_25] : memref<16x128xf32, #tpu.memory_space<vmem>>, vector<2x128xf32>
    %68 = arith.subf %66, %67 : vector<2x128xf32>
    %69 = vector.broadcast %0 : vector<1x128xf32> to vector<2x128xf32>
    %70 = arith.mulf %69, %68 : vector<2x128xf32>
    %71 = arith.addf %67, %70 : vector<2x128xf32>
    %cst_26 = arith.constant dense<0.000000e+00> : vector<2x128xf32>
    %72 = tpu.matmul %65, %3, %cst_26 {dimension_numbers = #tpu.dot_dimension_numbers<[1], [0], [0], [1], [0, 0, 1, 1], [], []>} : vector<2x32xf32>, vector<32x128xf32>, vector<2x128xf32> -> vector<2x128xf32>
    %73 = arith.addf %71, %72 : vector<2x128xf32>
    %74 = vector.extract_strided_slice %73 {offsets = [0, 0], sizes = [2, 32], strides = [1, 1]} : vector<2x128xf32> to vector<2x32xf32>
    %75 = arith.negf %74 : vector<2x32xf32>
    %76 = math.exp %75 : vector<2x32xf32>
    %cst_27 = arith.constant 1.000000e+00 : f32
    %77 = vector.broadcast %cst_27 : f32 to vector<2x32xf32>
    %78 = arith.addf %77, %76 : vector<2x32xf32>
    %79 = arith.divf %77, %78 : vector<2x32xf32>
    %80 = vector.extract_strided_slice %73 {offsets = [0, 64], sizes = [2, 32], strides = [1, 1]} : vector<2x128xf32> to vector<2x32xf32>
    %81 = math.tanh %80 : vector<2x32xf32>
    %82 = vector.extract_strided_slice %73 {offsets = [0, 96], sizes = [2, 32], strides = [1, 1]} : vector<2x128xf32> to vector<2x32xf32>
    %83 = arith.negf %82 : vector<2x32xf32>
    %84 = math.exp %83 : vector<2x32xf32>
    %cst_28 = arith.constant 1.000000e+00 : f32
    %85 = vector.broadcast %cst_28 : f32 to vector<2x32xf32>
    %86 = arith.addf %85, %84 : vector<2x32xf32>
    %87 = arith.divf %85, %86 : vector<2x32xf32>
    %88 = vector.extract_strided_slice %73 {offsets = [0, 32], sizes = [2, 32], strides = [1, 1]} : vector<2x128xf32> to vector<2x32xf32>
    %89 = arith.negf %88 : vector<2x32xf32>
    %90 = math.exp %89 : vector<2x32xf32>
    %cst_29 = arith.constant 1.000000e+00 : f32
    %91 = vector.broadcast %cst_29 : f32 to vector<2x32xf32>
    %92 = arith.addf %91, %90 : vector<2x32xf32>
    %93 = arith.divf %91, %92 : vector<2x32xf32>
    %94 = arith.mulf %93, %63 : vector<2x32xf32>
    %95 = arith.mulf %79, %81 : vector<2x32xf32>
    %96 = arith.addf %94, %95 : vector<2x32xf32>
    %97 = math.tanh %96 : vector<2x32xf32>
    %98 = arith.mulf %87, %97 : vector<2x32xf32>
    %c6 = arith.constant 6 : index
    %c0_30 = arith.constant 0 : index
    %99 = vector.load %arg15[%c6, %c0_30] : memref<16x128xf32, #tpu.memory_space<vmem>>, vector<2x128xf32>
    %c8 = arith.constant 8 : index
    %c0_31 = arith.constant 0 : index
    %100 = vector.load %arg15[%c8, %c0_31] : memref<16x128xf32, #tpu.memory_space<vmem>>, vector<2x128xf32>
    %101 = arith.subf %99, %100 : vector<2x128xf32>
    %102 = vector.broadcast %0 : vector<1x128xf32> to vector<2x128xf32>
    %103 = arith.mulf %102, %101 : vector<2x128xf32>
    %104 = arith.addf %100, %103 : vector<2x128xf32>
    %cst_32 = arith.constant dense<0.000000e+00> : vector<2x128xf32>
    %105 = tpu.matmul %98, %3, %cst_32 {dimension_numbers = #tpu.dot_dimension_numbers<[1], [0], [0], [1], [0, 0, 1, 1], [], []>} : vector<2x32xf32>, vector<32x128xf32>, vector<2x128xf32> -> vector<2x128xf32>
    %106 = arith.addf %104, %105 : vector<2x128xf32>
    %107 = vector.extract_strided_slice %106 {offsets = [0, 0], sizes = [2, 32], strides = [1, 1]} : vector<2x128xf32> to vector<2x32xf32>
    %108 = arith.negf %107 : vector<2x32xf32>
    %109 = math.exp %108 : vector<2x32xf32>
    %cst_33 = arith.constant 1.000000e+00 : f32
    %110 = vector.broadcast %cst_33 : f32 to vector<2x32xf32>
    %111 = arith.addf %110, %109 : vector<2x32xf32>
    %112 = arith.divf %110, %111 : vector<2x32xf32>
    %113 = vector.extract_strided_slice %106 {offsets = [0, 64], sizes = [2, 32], strides = [1, 1]} : vector<2x128xf32> to vector<2x32xf32>
    %114 = math.tanh %113 : vector<2x32xf32>
    %115 = vector.extract_strided_slice %106 {offsets = [0, 96], sizes = [2, 32], strides = [1, 1]} : vector<2x128xf32> to vector<2x32xf32>
    %116 = arith.negf %115 : vector<2x32xf32>
    %117 = math.exp %116 : vector<2x32xf32>
    %cst_34 = arith.constant 1.000000e+00 : f32
    %118 = vector.broadcast %cst_34 : f32 to vector<2x32xf32>
    %119 = arith.addf %118, %117 : vector<2x32xf32>
    %120 = arith.divf %118, %119 : vector<2x32xf32>
    %121 = vector.extract_strided_slice %106 {offsets = [0, 32], sizes = [2, 32], strides = [1, 1]} : vector<2x128xf32> to vector<2x32xf32>
    %122 = arith.negf %121 : vector<2x32xf32>
    %123 = math.exp %122 : vector<2x32xf32>
    %cst_35 = arith.constant 1.000000e+00 : f32
    %124 = vector.broadcast %cst_35 : f32 to vector<2x32xf32>
    %125 = arith.addf %124, %123 : vector<2x32xf32>
    %126 = arith.divf %124, %125 : vector<2x32xf32>
    %127 = arith.mulf %126, %96 : vector<2x32xf32>
    %128 = arith.mulf %112, %114 : vector<2x32xf32>
    %129 = arith.addf %127, %128 : vector<2x32xf32>
    %130 = math.tanh %129 : vector<2x32xf32>
    %131 = arith.mulf %120, %130 : vector<2x32xf32>
    %c8_36 = arith.constant 8 : index
    %c0_37 = arith.constant 0 : index
    %132 = vector.load %arg15[%c8_36, %c0_37] : memref<16x128xf32, #tpu.memory_space<vmem>>, vector<2x128xf32>
    %c6_38 = arith.constant 6 : index
    %c0_39 = arith.constant 0 : index
    %133 = vector.load %arg15[%c6_38, %c0_39] : memref<16x128xf32, #tpu.memory_space<vmem>>, vector<2x128xf32>
    %134 = arith.subf %132, %133 : vector<2x128xf32>
    %135 = vector.broadcast %0 : vector<1x128xf32> to vector<2x128xf32>
    %136 = arith.mulf %135, %134 : vector<2x128xf32>
    %137 = arith.addf %133, %136 : vector<2x128xf32>
    %cst_40 = arith.constant dense<0.000000e+00> : vector<2x128xf32>
    %138 = tpu.matmul %131, %3, %cst_40 {dimension_numbers = #tpu.dot_dimension_numbers<[1], [0], [0], [1], [0, 0, 1, 1], [], []>} : vector<2x32xf32>, vector<32x128xf32>, vector<2x128xf32> -> vector<2x128xf32>
    %139 = arith.addf %137, %138 : vector<2x128xf32>
    %140 = vector.extract_strided_slice %139 {offsets = [0, 0], sizes = [2, 32], strides = [1, 1]} : vector<2x128xf32> to vector<2x32xf32>
    %141 = arith.negf %140 : vector<2x32xf32>
    %142 = math.exp %141 : vector<2x32xf32>
    %cst_41 = arith.constant 1.000000e+00 : f32
    %143 = vector.broadcast %cst_41 : f32 to vector<2x32xf32>
    %144 = arith.addf %143, %142 : vector<2x32xf32>
    %145 = arith.divf %143, %144 : vector<2x32xf32>
    %146 = vector.extract_strided_slice %139 {offsets = [0, 64], sizes = [2, 32], strides = [1, 1]} : vector<2x128xf32> to vector<2x32xf32>
    %147 = math.tanh %146 : vector<2x32xf32>
    %148 = vector.extract_strided_slice %139 {offsets = [0, 96], sizes = [2, 32], strides = [1, 1]} : vector<2x128xf32> to vector<2x32xf32>
    %149 = arith.negf %148 : vector<2x32xf32>
    %150 = math.exp %149 : vector<2x32xf32>
    %cst_42 = arith.constant 1.000000e+00 : f32
    %151 = vector.broadcast %cst_42 : f32 to vector<2x32xf32>
    %152 = arith.addf %151, %150 : vector<2x32xf32>
    %153 = arith.divf %151, %152 : vector<2x32xf32>
    %154 = vector.extract_strided_slice %139 {offsets = [0, 32], sizes = [2, 32], strides = [1, 1]} : vector<2x128xf32> to vector<2x32xf32>
    %155 = arith.negf %154 : vector<2x32xf32>
    %156 = math.exp %155 : vector<2x32xf32>
    %cst_43 = arith.constant 1.000000e+00 : f32
    %157 = vector.broadcast %cst_43 : f32 to vector<2x32xf32>
    %158 = arith.addf %157, %156 : vector<2x32xf32>
    %159 = arith.divf %157, %158 : vector<2x32xf32>
    %160 = arith.mulf %159, %129 : vector<2x32xf32>
    %161 = arith.mulf %145, %147 : vector<2x32xf32>
    %162 = arith.addf %160, %161 : vector<2x32xf32>
    %163 = math.tanh %162 : vector<2x32xf32>
    %164 = arith.mulf %153, %163 : vector<2x32xf32>
    %c10_44 = arith.constant 10 : index
    %c0_45 = arith.constant 0 : index
    %165 = vector.load %arg15[%c10_44, %c0_45] : memref<16x128xf32, #tpu.memory_space<vmem>>, vector<2x128xf32>
    %c4_46 = arith.constant 4 : index
    %c0_47 = arith.constant 0 : index
    %166 = vector.load %arg15[%c4_46, %c0_47] : memref<16x128xf32, #tpu.memory_space<vmem>>, vector<2x128xf32>
    %167 = arith.subf %165, %166 : vector<2x128xf32>
    %168 = vector.broadcast %0 : vector<1x128xf32> to vector<2x128xf32>
    %169 = arith.mulf %168, %167 : vector<2x128xf32>
    %170 = arith.addf %166, %169 : vector<2x128xf32>
    %cst_48 = arith.constant dense<0.000000e+00> : vector<2x128xf32>
    %171 = tpu.matmul %164, %3, %cst_48 {dimension_numbers = #tpu.dot_dimension_numbers<[1], [0], [0], [1], [0, 0, 1, 1], [], []>} : vector<2x32xf32>, vector<32x128xf32>, vector<2x128xf32> -> vector<2x128xf32>
    %172 = arith.addf %170, %171 : vector<2x128xf32>
    %173 = vector.extract_strided_slice %172 {offsets = [0, 0], sizes = [2, 32], strides = [1, 1]} : vector<2x128xf32> to vector<2x32xf32>
    %174 = arith.negf %173 : vector<2x32xf32>
    %175 = math.exp %174 : vector<2x32xf32>
    %cst_49 = arith.constant 1.000000e+00 : f32
    %176 = vector.broadcast %cst_49 : f32 to vector<2x32xf32>
    %177 = arith.addf %176, %175 : vector<2x32xf32>
    %178 = arith.divf %176, %177 : vector<2x32xf32>
    %179 = vector.extract_strided_slice %172 {offsets = [0, 64], sizes = [2, 32], strides = [1, 1]} : vector<2x128xf32> to vector<2x32xf32>
    %180 = math.tanh %179 : vector<2x32xf32>
    %181 = vector.extract_strided_slice %172 {offsets = [0, 96], sizes = [2, 32], strides = [1, 1]} : vector<2x128xf32> to vector<2x32xf32>
    %182 = arith.negf %181 : vector<2x32xf32>
    %183 = math.exp %182 : vector<2x32xf32>
    %cst_50 = arith.constant 1.000000e+00 : f32
    %184 = vector.broadcast %cst_50 : f32 to vector<2x32xf32>
    %185 = arith.addf %184, %183 : vector<2x32xf32>
    %186 = arith.divf %184, %185 : vector<2x32xf32>
    %187 = vector.extract_strided_slice %172 {offsets = [0, 32], sizes = [2, 32], strides = [1, 1]} : vector<2x128xf32> to vector<2x32xf32>
    %188 = arith.negf %187 : vector<2x32xf32>
    %189 = math.exp %188 : vector<2x32xf32>
    %cst_51 = arith.constant 1.000000e+00 : f32
    %190 = vector.broadcast %cst_51 : f32 to vector<2x32xf32>
    %191 = arith.addf %190, %189 : vector<2x32xf32>
    %192 = arith.divf %190, %191 : vector<2x32xf32>
    %193 = arith.mulf %192, %162 : vector<2x32xf32>
    %194 = arith.mulf %178, %180 : vector<2x32xf32>
    %195 = arith.addf %193, %194 : vector<2x32xf32>
    %196 = math.tanh %195 : vector<2x32xf32>
    %197 = arith.mulf %186, %196 : vector<2x32xf32>
    %c12_52 = arith.constant 12 : index
    %c0_53 = arith.constant 0 : index
    %198 = vector.load %arg15[%c12_52, %c0_53] : memref<16x128xf32, #tpu.memory_space<vmem>>, vector<2x128xf32>
    %c2_54 = arith.constant 2 : index
    %c0_55 = arith.constant 0 : index
    %199 = vector.load %arg15[%c2_54, %c0_55] : memref<16x128xf32, #tpu.memory_space<vmem>>, vector<2x128xf32>
    %200 = arith.subf %198, %199 : vector<2x128xf32>
    %201 = vector.broadcast %0 : vector<1x128xf32> to vector<2x128xf32>
    %202 = arith.mulf %201, %200 : vector<2x128xf32>
    %203 = arith.addf %199, %202 : vector<2x128xf32>
    %cst_56 = arith.constant dense<0.000000e+00> : vector<2x128xf32>
    %204 = tpu.matmul %197, %3, %cst_56 {dimension_numbers = #tpu.dot_dimension_numbers<[1], [0], [0], [1], [0, 0, 1, 1], [], []>} : vector<2x32xf32>, vector<32x128xf32>, vector<2x128xf32> -> vector<2x128xf32>
    %205 = arith.addf %203, %204 : vector<2x128xf32>
    %206 = vector.extract_strided_slice %205 {offsets = [0, 0], sizes = [2, 32], strides = [1, 1]} : vector<2x128xf32> to vector<2x32xf32>
    %207 = arith.negf %206 : vector<2x32xf32>
    %208 = math.exp %207 : vector<2x32xf32>
    %cst_57 = arith.constant 1.000000e+00 : f32
    %209 = vector.broadcast %cst_57 : f32 to vector<2x32xf32>
    %210 = arith.addf %209, %208 : vector<2x32xf32>
    %211 = arith.divf %209, %210 : vector<2x32xf32>
    %212 = vector.extract_strided_slice %205 {offsets = [0, 64], sizes = [2, 32], strides = [1, 1]} : vector<2x128xf32> to vector<2x32xf32>
    %213 = math.tanh %212 : vector<2x32xf32>
    %214 = vector.extract_strided_slice %205 {offsets = [0, 96], sizes = [2, 32], strides = [1, 1]} : vector<2x128xf32> to vector<2x32xf32>
    %215 = arith.negf %214 : vector<2x32xf32>
    %216 = math.exp %215 : vector<2x32xf32>
    %cst_58 = arith.constant 1.000000e+00 : f32
    %217 = vector.broadcast %cst_58 : f32 to vector<2x32xf32>
    %218 = arith.addf %217, %216 : vector<2x32xf32>
    %219 = arith.divf %217, %218 : vector<2x32xf32>
    %220 = vector.extract_strided_slice %205 {offsets = [0, 32], sizes = [2, 32], strides = [1, 1]} : vector<2x128xf32> to vector<2x32xf32>
    %221 = arith.negf %220 : vector<2x32xf32>
    %222 = math.exp %221 : vector<2x32xf32>
    %cst_59 = arith.constant 1.000000e+00 : f32
    %223 = vector.broadcast %cst_59 : f32 to vector<2x32xf32>
    %224 = arith.addf %223, %222 : vector<2x32xf32>
    %225 = arith.divf %223, %224 : vector<2x32xf32>
    %226 = arith.mulf %225, %195 : vector<2x32xf32>
    %227 = arith.mulf %211, %213 : vector<2x32xf32>
    %228 = arith.addf %226, %227 : vector<2x32xf32>
    %229 = math.tanh %228 : vector<2x32xf32>
    %230 = arith.mulf %219, %229 : vector<2x32xf32>
    %c14_60 = arith.constant 14 : index
    %c0_61 = arith.constant 0 : index
    %231 = vector.load %arg15[%c14_60, %c0_61] : memref<16x128xf32, #tpu.memory_space<vmem>>, vector<2x128xf32>
    %c0_62 = arith.constant 0 : index
    %c0_63 = arith.constant 0 : index
    %232 = vector.load %arg15[%c0_62, %c0_63] : memref<16x128xf32, #tpu.memory_space<vmem>>, vector<2x128xf32>
    %233 = arith.subf %231, %232 : vector<2x128xf32>
    %234 = vector.broadcast %0 : vector<1x128xf32> to vector<2x128xf32>
    %235 = arith.mulf %234, %233 : vector<2x128xf32>
    %236 = arith.addf %232, %235 : vector<2x128xf32>
    %cst_64 = arith.constant dense<0.000000e+00> : vector<2x128xf32>
    %237 = tpu.matmul %230, %3, %cst_64 {dimension_numbers = #tpu.dot_dimension_numbers<[1], [0], [0], [1], [0, 0, 1, 1], [], []>} : vector<2x32xf32>, vector<32x128xf32>, vector<2x128xf32> -> vector<2x128xf32>
    %238 = arith.addf %236, %237 : vector<2x128xf32>
    %239 = vector.extract_strided_slice %238 {offsets = [0, 0], sizes = [2, 32], strides = [1, 1]} : vector<2x128xf32> to vector<2x32xf32>
    %240 = arith.negf %239 : vector<2x32xf32>
    %241 = math.exp %240 : vector<2x32xf32>
    %cst_65 = arith.constant 1.000000e+00 : f32
    %242 = vector.broadcast %cst_65 : f32 to vector<2x32xf32>
    %243 = arith.addf %242, %241 : vector<2x32xf32>
    %244 = arith.divf %242, %243 : vector<2x32xf32>
    %245 = vector.extract_strided_slice %238 {offsets = [0, 64], sizes = [2, 32], strides = [1, 1]} : vector<2x128xf32> to vector<2x32xf32>
    %246 = math.tanh %245 : vector<2x32xf32>
    %247 = vector.extract_strided_slice %238 {offsets = [0, 96], sizes = [2, 32], strides = [1, 1]} : vector<2x128xf32> to vector<2x32xf32>
    %248 = arith.negf %247 : vector<2x32xf32>
    %249 = math.exp %248 : vector<2x32xf32>
    %cst_66 = arith.constant 1.000000e+00 : f32
    %250 = vector.broadcast %cst_66 : f32 to vector<2x32xf32>
    %251 = arith.addf %250, %249 : vector<2x32xf32>
    %252 = arith.divf %250, %251 : vector<2x32xf32>
    %253 = vector.extract_strided_slice %238 {offsets = [0, 32], sizes = [2, 32], strides = [1, 1]} : vector<2x128xf32> to vector<2x32xf32>
    %254 = arith.negf %253 : vector<2x32xf32>
    %255 = math.exp %254 : vector<2x32xf32>
    %cst_67 = arith.constant 1.000000e+00 : f32
    %256 = vector.broadcast %cst_67 : f32 to vector<2x32xf32>
    %257 = arith.addf %256, %255 : vector<2x32xf32>
    %258 = arith.divf %256, %257 : vector<2x32xf32>
    %259 = arith.mulf %258, %228 : vector<2x32xf32>
    %260 = arith.mulf %244, %246 : vector<2x32xf32>
    %261 = arith.addf %259, %260 : vector<2x32xf32>
    %262 = math.tanh %261 : vector<2x32xf32>
    %263 = arith.mulf %252, %262 : vector<2x32xf32>
    %264 = arith.subf %32, %263 : vector<2x32xf32>
    %265 = vector.broadcast %1 : vector<1x32xf32> to vector<2x32xf32>
    %266 = arith.mulf %265, %264 : vector<2x32xf32>
    %267 = arith.addf %263, %266 : vector<2x32xf32>
    %c0_68 = arith.constant 0 : index
    %c0_69 = arith.constant 0 : index
    %268 = vector.load %arg16[%c0_68, %c0_69] : memref<16x32xf32, #tpu.memory_space<vmem>>, vector<2x32xf32>
    tpu.vector_store %arg16[%c0_68, %c0_69], %267 {strides = array<i32>} : memref<16x32xf32, #tpu.memory_space<vmem>>, vector<2x32xf32>,
    %269 = arith.subf %65, %230 : vector<2x32xf32>
    %270 = vector.broadcast %1 : vector<1x32xf32> to vector<2x32xf32>
    %271 = arith.mulf %270, %269 : vector<2x32xf32>
    %272 = arith.addf %230, %271 : vector<2x32xf32>
    %c2_70 = arith.constant 2 : index
    %c0_71 = arith.constant 0 : index
    %273 = vector.load %arg16[%c2_70, %c0_71] : memref<16x32xf32, #tpu.memory_space<vmem>>, vector<2x32xf32>
    tpu.vector_store %arg16[%c2_70, %c0_71], %272 {strides = array<i32>} : memref<16x32xf32, #tpu.memory_space<vmem>>, vector<2x32xf32>,
    %274 = arith.subf %98, %197 : vector<2x32xf32>
    %275 = vector.broadcast %1 : vector<1x32xf32> to vector<2x32xf32>
    %276 = arith.mulf %275, %274 : vector<2x32xf32>
    %277 = arith.addf %197, %276 : vector<2x32xf32>
    %c4_72 = arith.constant 4 : index
    %c0_73 = arith.constant 0 : index
    %278 = vector.load %arg16[%c4_72, %c0_73] : memref<16x32xf32, #tpu.memory_space<vmem>>, vector<2x32xf32>
    tpu.vector_store %arg16[%c4_72, %c0_73], %277 {strides = array<i32>} : memref<16x32xf32, #tpu.memory_space<vmem>>, vector<2x32xf32>,
    %279 = arith.subf %131, %164 : vector<2x32xf32>
    %280 = vector.broadcast %1 : vector<1x32xf32> to vector<2x32xf32>
    %281 = arith.mulf %280, %279 : vector<2x32xf32>
    %282 = arith.addf %164, %281 : vector<2x32xf32>
    %c6_74 = arith.constant 6 : index
    %c0_75 = arith.constant 0 : index
    %283 = vector.load %arg16[%c6_74, %c0_75] : memref<16x32xf32, #tpu.memory_space<vmem>>, vector<2x32xf32>
    tpu.vector_store %arg16[%c6_74, %c0_75], %282 {strides = array<i32>} : memref<16x32xf32, #tpu.memory_space<vmem>>, vector<2x32xf32>,
    %284 = arith.subf %164, %131 : vector<2x32xf32>
    %285 = vector.broadcast %1 : vector<1x32xf32> to vector<2x32xf32>
    %286 = arith.mulf %285, %284 : vector<2x32xf32>
    %287 = arith.addf %131, %286 : vector<2x32xf32>
    %c8_76 = arith.constant 8 : index
    %c0_77 = arith.constant 0 : index
    %288 = vector.load %arg16[%c8_76, %c0_77] : memref<16x32xf32, #tpu.memory_space<vmem>>, vector<2x32xf32>
    tpu.vector_store %arg16[%c8_76, %c0_77], %287 {strides = array<i32>} : memref<16x32xf32, #tpu.memory_space<vmem>>, vector<2x32xf32>,
    %289 = arith.subf %197, %98 : vector<2x32xf32>
    %290 = vector.broadcast %1 : vector<1x32xf32> to vector<2x32xf32>
    %291 = arith.mulf %290, %289 : vector<2x32xf32>
    %292 = arith.addf %98, %291 : vector<2x32xf32>
    %c10_78 = arith.constant 10 : index
    %c0_79 = arith.constant 0 : index
    %293 = vector.load %arg16[%c10_78, %c0_79] : memref<16x32xf32, #tpu.memory_space<vmem>>, vector<2x32xf32>
    tpu.vector_store %arg16[%c10_78, %c0_79], %292 {strides = array<i32>} : memref<16x32xf32, #tpu.memory_space<vmem>>, vector<2x32xf32>,
    %294 = arith.subf %230, %65 : vector<2x32xf32>
    %295 = vector.broadcast %1 : vector<1x32xf32> to vector<2x32xf32>
    %296 = arith.mulf %295, %294 : vector<2x32xf32>
    %297 = arith.addf %65, %296 : vector<2x32xf32>
    %c12_80 = arith.constant 12 : index
    %c0_81 = arith.constant 0 : index
    %298 = vector.load %arg16[%c12_80, %c0_81] : memref<16x32xf32, #tpu.memory_space<vmem>>, vector<2x32xf32>
    tpu.vector_store %arg16[%c12_80, %c0_81], %297 {strides = array<i32>} : memref<16x32xf32, #tpu.memory_space<vmem>>, vector<2x32xf32>,
    %299 = arith.subf %263, %32 : vector<2x32xf32>
    %300 = vector.broadcast %1 : vector<1x32xf32> to vector<2x32xf32>
    %301 = arith.mulf %300, %299 : vector<2x32xf32>
    %302 = arith.addf %32, %301 : vector<2x32xf32>
    %c14_82 = arith.constant 14 : index
    %c0_83 = arith.constant 0 : index
    %303 = vector.load %arg16[%c14_82, %c0_83] : memref<16x32xf32, #tpu.memory_space<vmem>>, vector<2x32xf32>
    tpu.vector_store %arg16[%c14_82, %c0_83], %302 {strides = array<i32>} : memref<16x32xf32, #tpu.memory_space<vmem>>, vector<2x32xf32>,
    %c0_84 = arith.constant 0 : index
    %c0_85 = arith.constant 0 : index
    %304 = vector.load %arg8[%c0_84, %c0_85] : memref<32x128xf32, #tpu.memory_space<vmem>>, vector<32x128xf32>
    %c0_86 = arith.constant 0 : index
    %c0_87 = arith.constant 0 : index
    %305 = vector.load %arg9[%c0_86, %c0_87] : memref<32x128xf32, #tpu.memory_space<vmem>>, vector<32x128xf32>
    %c0_88 = arith.constant 0 : index
    %c0_89 = arith.constant 0 : index
    %306 = vector.load %arg10[%c0_88, %c0_89] : memref<1x128xf32, #tpu.memory_space<vmem>>, vector<1x128xf32>
    %c0_90 = arith.constant 0 : index
    %c0_91 = arith.constant 0 : index
    %307 = vector.load %arg16[%c0_90, %c0_91] : memref<16x32xf32, #tpu.memory_space<vmem>>, vector<16x32xf32>
    %cst_92 = arith.constant dense<0.000000e+00> : vector<16x128xf32>
    %308 = tpu.matmul %307, %304, %cst_92 {dimension_numbers = #tpu.dot_dimension_numbers<[1], [0], [0], [1], [0, 0, 1, 1], [], []>} : vector<16x32xf32>, vector<32x128xf32>, vector<16x128xf32> -> vector<16x128xf32>
    %309 = vector.broadcast %306 : vector<1x128xf32> to vector<16x128xf32>
    %310 = arith.addf %308, %309 : vector<16x128xf32>
    %c0_93 = arith.constant 0 : index
    %c0_94 = arith.constant 0 : index
    %311 = vector.load %arg15[%c0_93, %c0_94] : memref<16x128xf32, #tpu.memory_space<vmem>>, vector<16x128xf32>
    tpu.vector_store %arg15[%c0_93, %c0_94], %310 {strides = array<i32>} : memref<16x128xf32, #tpu.memory_space<vmem>>, vector<16x128xf32>,
    %c0_95 = arith.constant 0 : index
    %c0_96 = arith.constant 0 : index
    %312 = vector.load %arg15[%c0_95, %c0_96] : memref<16x128xf32, #tpu.memory_space<vmem>>, vector<2x128xf32>
    %c14_97 = arith.constant 14 : index
    %c0_98 = arith.constant 0 : index
    %313 = vector.load %arg15[%c14_97, %c0_98] : memref<16x128xf32, #tpu.memory_space<vmem>>, vector<2x128xf32>
    %314 = arith.subf %312, %313 : vector<2x128xf32>
    %315 = vector.broadcast %0 : vector<1x128xf32> to vector<2x128xf32>
    %316 = arith.mulf %315, %314 : vector<2x128xf32>
    %317 = arith.addf %313, %316 : vector<2x128xf32>
    %318 = vector.extract_strided_slice %317 {offsets = [0, 0], sizes = [2, 32], strides = [1, 1]} : vector<2x128xf32> to vector<2x32xf32>
    %319 = arith.negf %318 : vector<2x32xf32>
    %320 = math.exp %319 : vector<2x32xf32>
    %cst_99 = arith.constant 1.000000e+00 : f32
    %321 = vector.broadcast %cst_99 : f32 to vector<2x32xf32>
    %322 = arith.addf %321, %320 : vector<2x32xf32>
    %323 = arith.divf %321, %322 : vector<2x32xf32>
    %324 = vector.extract_strided_slice %317 {offsets = [0, 64], sizes = [2, 32], strides = [1, 1]} : vector<2x128xf32> to vector<2x32xf32>
    %325 = math.tanh %324 : vector<2x32xf32>
    %326 = vector.extract_strided_slice %317 {offsets = [0, 96], sizes = [2, 32], strides = [1, 1]} : vector<2x128xf32> to vector<2x32xf32>
    %327 = arith.negf %326 : vector<2x32xf32>
    %328 = math.exp %327 : vector<2x32xf32>
    %cst_100 = arith.constant 1.000000e+00 : f32
    %329 = vector.broadcast %cst_100 : f32 to vector<2x32xf32>
    %330 = arith.addf %329, %328 : vector<2x32xf32>
    %331 = arith.divf %329, %330 : vector<2x32xf32>
    %332 = arith.mulf %323, %325 : vector<2x32xf32>
    %333 = math.tanh %332 : vector<2x32xf32>
    %334 = arith.mulf %331, %333 : vector<2x32xf32>
    %c2_101 = arith.constant 2 : index
    %c0_102 = arith.constant 0 : index
    %335 = vector.load %arg15[%c2_101, %c0_102] : memref<16x128xf32, #tpu.memory_space<vmem>>, vector<2x128xf32>
    %c12_103 = arith.constant 12 : index
    %c0_104 = arith.constant 0 : index
    %336 = vector.load %arg15[%c12_103, %c0_104] : memref<16x128xf32, #tpu.memory_space<vmem>>, vector<2x128xf32>
    %337 = arith.subf %335, %336 : vector<2x128xf32>
    %338 = vector.broadcast %0 : vector<1x128xf32> to vector<2x128xf32>
    %339 = arith.mulf %338, %337 : vector<2x128xf32>
    %340 = arith.addf %336, %339 : vector<2x128xf32>
    %cst_105 = arith.constant dense<0.000000e+00> : vector<2x128xf32>
    %341 = tpu.matmul %334, %305, %cst_105 {dimension_numbers = #tpu.dot_dimension_numbers<[1], [0], [0], [1], [0, 0, 1, 1], [], []>} : vector<2x32xf32>, vector<32x128xf32>, vector<2x128xf32> -> vector<2x128xf32>
    %342 = arith.addf %340, %341 : vector<2x128xf32>
    %343 = vector.extract_strided_slice %342 {offsets = [0, 0], sizes = [2, 32], strides = [1, 1]} : vector<2x128xf32> to vector<2x32xf32>
    %344 = arith.negf %343 : vector<2x32xf32>
    %345 = math.exp %344 : vector<2x32xf32>
    %cst_106 = arith.constant 1.000000e+00 : f32
    %346 = vector.broadcast %cst_106 : f32 to vector<2x32xf32>
    %347 = arith.addf %346, %345 : vector<2x32xf32>
    %348 = arith.divf %346, %347 : vector<2x32xf32>
    %349 = vector.extract_strided_slice %342 {offsets = [0, 64], sizes = [2, 32], strides = [1, 1]} : vector<2x128xf32> to vector<2x32xf32>
    %350 = math.tanh %349 : vector<2x32xf32>
    %351 = vector.extract_strided_slice %342 {offsets = [0, 96], sizes = [2, 32], strides = [1, 1]} : vector<2x128xf32> to vector<2x32xf32>
    %352 = arith.negf %351 : vector<2x32xf32>
    %353 = math.exp %352 : vector<2x32xf32>
    %cst_107 = arith.constant 1.000000e+00 : f32
    %354 = vector.broadcast %cst_107 : f32 to vector<2x32xf32>
    %355 = arith.addf %354, %353 : vector<2x32xf32>
    %356 = arith.divf %354, %355 : vector<2x32xf32>
    %357 = vector.extract_strided_slice %342 {offsets = [0, 32], sizes = [2, 32], strides = [1, 1]} : vector<2x128xf32> to vector<2x32xf32>
    %358 = arith.negf %357 : vector<2x32xf32>
    %359 = math.exp %358 : vector<2x32xf32>
    %cst_108 = arith.constant 1.000000e+00 : f32
    %360 = vector.broadcast %cst_108 : f32 to vector<2x32xf32>
    %361 = arith.addf %360, %359 : vector<2x32xf32>
    %362 = arith.divf %360, %361 : vector<2x32xf32>
    %363 = arith.mulf %362, %332 : vector<2x32xf32>
    %364 = arith.mulf %348, %350 : vector<2x32xf32>
    %365 = arith.addf %363, %364 : vector<2x32xf32>
    %366 = math.tanh %365 : vector<2x32xf32>
    %367 = arith.mulf %356, %366 : vector<2x32xf32>
    %c4_109 = arith.constant 4 : index
    %c0_110 = arith.constant 0 : index
    %368 = vector.load %arg15[%c4_109, %c0_110] : memref<16x128xf32, #tpu.memory_space<vmem>>, vector<2x128xf32>
    %c10_111 = arith.constant 10 : index
    %c0_112 = arith.constant 0 : index
    %369 = vector.load %arg15[%c10_111, %c0_112] : memref<16x128xf32, #tpu.memory_space<vmem>>, vector<2x128xf32>
    %370 = arith.subf %368, %369 : vector<2x128xf32>
    %371 = vector.broadcast %0 : vector<1x128xf32> to vector<2x128xf32>
    %372 = arith.mulf %371, %370 : vector<2x128xf32>
    %373 = arith.addf %369, %372 : vector<2x128xf32>
    %cst_113 = arith.constant dense<0.000000e+00> : vector<2x128xf32>
    %374 = tpu.matmul %367, %305, %cst_113 {dimension_numbers = #tpu.dot_dimension_numbers<[1], [0], [0], [1], [0, 0, 1, 1], [], []>} : vector<2x32xf32>, vector<32x128xf32>, vector<2x128xf32> -> vector<2x128xf32>
    %375 = arith.addf %373, %374 : vector<2x128xf32>
    %376 = vector.extract_strided_slice %375 {offsets = [0, 0], sizes = [2, 32], strides = [1, 1]} : vector<2x128xf32> to vector<2x32xf32>
    %377 = arith.negf %376 : vector<2x32xf32>
    %378 = math.exp %377 : vector<2x32xf32>
    %cst_114 = arith.constant 1.000000e+00 : f32
    %379 = vector.broadcast %cst_114 : f32 to vector<2x32xf32>
    %380 = arith.addf %379, %378 : vector<2x32xf32>
    %381 = arith.divf %379, %380 : vector<2x32xf32>
    %382 = vector.extract_strided_slice %375 {offsets = [0, 64], sizes = [2, 32], strides = [1, 1]} : vector<2x128xf32> to vector<2x32xf32>
    %383 = math.tanh %382 : vector<2x32xf32>
    %384 = vector.extract_strided_slice %375 {offsets = [0, 96], sizes = [2, 32], strides = [1, 1]} : vector<2x128xf32> to vector<2x32xf32>
    %385 = arith.negf %384 : vector<2x32xf32>
    %386 = math.exp %385 : vector<2x32xf32>
    %cst_115 = arith.constant 1.000000e+00 : f32
    %387 = vector.broadcast %cst_115 : f32 to vector<2x32xf32>
    %388 = arith.addf %387, %386 : vector<2x32xf32>
    %389 = arith.divf %387, %388 : vector<2x32xf32>
    %390 = vector.extract_strided_slice %375 {offsets = [0, 32], sizes = [2, 32], strides = [1, 1]} : vector<2x128xf32> to vector<2x32xf32>
    %391 = arith.negf %390 : vector<2x32xf32>
    %392 = math.exp %391 : vector<2x32xf32>
    %cst_116 = arith.constant 1.000000e+00 : f32
    %393 = vector.broadcast %cst_116 : f32 to vector<2x32xf32>
    %394 = arith.addf %393, %392 : vector<2x32xf32>
    %395 = arith.divf %393, %394 : vector<2x32xf32>
    %396 = arith.mulf %395, %365 : vector<2x32xf32>
    %397 = arith.mulf %381, %383 : vector<2x32xf32>
    %398 = arith.addf %396, %397 : vector<2x32xf32>
    %399 = math.tanh %398 : vector<2x32xf32>
    %400 = arith.mulf %389, %399 : vector<2x32xf32>
    %c6_117 = arith.constant 6 : index
    %c0_118 = arith.constant 0 : index
    %401 = vector.load %arg15[%c6_117, %c0_118] : memref<16x128xf32, #tpu.memory_space<vmem>>, vector<2x128xf32>
    %c8_119 = arith.constant 8 : index
    %c0_120 = arith.constant 0 : index
    %402 = vector.load %arg15[%c8_119, %c0_120] : memref<16x128xf32, #tpu.memory_space<vmem>>, vector<2x128xf32>
    %403 = arith.subf %401, %402 : vector<2x128xf32>
    %404 = vector.broadcast %0 : vector<1x128xf32> to vector<2x128xf32>
    %405 = arith.mulf %404, %403 : vector<2x128xf32>
    %406 = arith.addf %402, %405 : vector<2x128xf32>
    %cst_121 = arith.constant dense<0.000000e+00> : vector<2x128xf32>
    %407 = tpu.matmul %400, %305, %cst_121 {dimension_numbers = #tpu.dot_dimension_numbers<[1], [0], [0], [1], [0, 0, 1, 1], [], []>} : vector<2x32xf32>, vector<32x128xf32>, vector<2x128xf32> -> vector<2x128xf32>
    %408 = arith.addf %406, %407 : vector<2x128xf32>
    %409 = vector.extract_strided_slice %408 {offsets = [0, 0], sizes = [2, 32], strides = [1, 1]} : vector<2x128xf32> to vector<2x32xf32>
    %410 = arith.negf %409 : vector<2x32xf32>
    %411 = math.exp %410 : vector<2x32xf32>
    %cst_122 = arith.constant 1.000000e+00 : f32
    %412 = vector.broadcast %cst_122 : f32 to vector<2x32xf32>
    %413 = arith.addf %412, %411 : vector<2x32xf32>
    %414 = arith.divf %412, %413 : vector<2x32xf32>
    %415 = vector.extract_strided_slice %408 {offsets = [0, 64], sizes = [2, 32], strides = [1, 1]} : vector<2x128xf32> to vector<2x32xf32>
    %416 = math.tanh %415 : vector<2x32xf32>
    %417 = vector.extract_strided_slice %408 {offsets = [0, 96], sizes = [2, 32], strides = [1, 1]} : vector<2x128xf32> to vector<2x32xf32>
    %418 = arith.negf %417 : vector<2x32xf32>
    %419 = math.exp %418 : vector<2x32xf32>
    %cst_123 = arith.constant 1.000000e+00 : f32
    %420 = vector.broadcast %cst_123 : f32 to vector<2x32xf32>
    %421 = arith.addf %420, %419 : vector<2x32xf32>
    %422 = arith.divf %420, %421 : vector<2x32xf32>
    %423 = vector.extract_strided_slice %408 {offsets = [0, 32], sizes = [2, 32], strides = [1, 1]} : vector<2x128xf32> to vector<2x32xf32>
    %424 = arith.negf %423 : vector<2x32xf32>
    %425 = math.exp %424 : vector<2x32xf32>
    %cst_124 = arith.constant 1.000000e+00 : f32
    %426 = vector.broadcast %cst_124 : f32 to vector<2x32xf32>
    %427 = arith.addf %426, %425 : vector<2x32xf32>
    %428 = arith.divf %426, %427 : vector<2x32xf32>
    %429 = arith.mulf %428, %398 : vector<2x32xf32>
    %430 = arith.mulf %414, %416 : vector<2x32xf32>
    %431 = arith.addf %429, %430 : vector<2x32xf32>
    %432 = math.tanh %431 : vector<2x32xf32>
    %433 = arith.mulf %422, %432 : vector<2x32xf32>
    %c8_125 = arith.constant 8 : index
    %c0_126 = arith.constant 0 : index
    %434 = vector.load %arg15[%c8_125, %c0_126] : memref<16x128xf32, #tpu.memory_space<vmem>>, vector<2x128xf32>
    %c6_127 = arith.constant 6 : index
    %c0_128 = arith.constant 0 : index
    %435 = vector.load %arg15[%c6_127, %c0_128] : memref<16x128xf32, #tpu.memory_space<vmem>>, vector<2x128xf32>
    %436 = arith.subf %434, %435 : vector<2x128xf32>
    %437 = vector.broadcast %0 : vector<1x128xf32> to vector<2x128xf32>
    %438 = arith.mulf %437, %436 : vector<2x128xf32>
    %439 = arith.addf %435, %438 : vector<2x128xf32>
    %cst_129 = arith.constant dense<0.000000e+00> : vector<2x128xf32>
    %440 = tpu.matmul %433, %305, %cst_129 {dimension_numbers = #tpu.dot_dimension_numbers<[1], [0], [0], [1], [0, 0, 1, 1], [], []>} : vector<2x32xf32>, vector<32x128xf32>, vector<2x128xf32> -> vector<2x128xf32>
    %441 = arith.addf %439, %440 : vector<2x128xf32>
    %442 = vector.extract_strided_slice %441 {offsets = [0, 0], sizes = [2, 32], strides = [1, 1]} : vector<2x128xf32> to vector<2x32xf32>
    %443 = arith.negf %442 : vector<2x32xf32>
    %444 = math.exp %443 : vector<2x32xf32>
    %cst_130 = arith.constant 1.000000e+00 : f32
    %445 = vector.broadcast %cst_130 : f32 to vector<2x32xf32>
    %446 = arith.addf %445, %444 : vector<2x32xf32>
    %447 = arith.divf %445, %446 : vector<2x32xf32>
    %448 = vector.extract_strided_slice %441 {offsets = [0, 64], sizes = [2, 32], strides = [1, 1]} : vector<2x128xf32> to vector<2x32xf32>
    %449 = math.tanh %448 : vector<2x32xf32>
    %450 = vector.extract_strided_slice %441 {offsets = [0, 96], sizes = [2, 32], strides = [1, 1]} : vector<2x128xf32> to vector<2x32xf32>
    %451 = arith.negf %450 : vector<2x32xf32>
    %452 = math.exp %451 : vector<2x32xf32>
    %cst_131 = arith.constant 1.000000e+00 : f32
    %453 = vector.broadcast %cst_131 : f32 to vector<2x32xf32>
    %454 = arith.addf %453, %452 : vector<2x32xf32>
    %455 = arith.divf %453, %454 : vector<2x32xf32>
    %456 = vector.extract_strided_slice %441 {offsets = [0, 32], sizes = [2, 32], strides = [1, 1]} : vector<2x128xf32> to vector<2x32xf32>
    %457 = arith.negf %456 : vector<2x32xf32>
    %458 = math.exp %457 : vector<2x32xf32>
    %cst_132 = arith.constant 1.000000e+00 : f32
    %459 = vector.broadcast %cst_132 : f32 to vector<2x32xf32>
    %460 = arith.addf %459, %458 : vector<2x32xf32>
    %461 = arith.divf %459, %460 : vector<2x32xf32>
    %462 = arith.mulf %461, %431 : vector<2x32xf32>
    %463 = arith.mulf %447, %449 : vector<2x32xf32>
    %464 = arith.addf %462, %463 : vector<2x32xf32>
    %465 = math.tanh %464 : vector<2x32xf32>
    %466 = arith.mulf %455, %465 : vector<2x32xf32>
    %c10_133 = arith.constant 10 : index
    %c0_134 = arith.constant 0 : index
    %467 = vector.load %arg15[%c10_133, %c0_134] : memref<16x128xf32, #tpu.memory_space<vmem>>, vector<2x128xf32>
    %c4_135 = arith.constant 4 : index
    %c0_136 = arith.constant 0 : index
    %468 = vector.load %arg15[%c4_135, %c0_136] : memref<16x128xf32, #tpu.memory_space<vmem>>, vector<2x128xf32>
    %469 = arith.subf %467, %468 : vector<2x128xf32>
    %470 = vector.broadcast %0 : vector<1x128xf32> to vector<2x128xf32>
    %471 = arith.mulf %470, %469 : vector<2x128xf32>
    %472 = arith.addf %468, %471 : vector<2x128xf32>
    %cst_137 = arith.constant dense<0.000000e+00> : vector<2x128xf32>
    %473 = tpu.matmul %466, %305, %cst_137 {dimension_numbers = #tpu.dot_dimension_numbers<[1], [0], [0], [1], [0, 0, 1, 1], [], []>} : vector<2x32xf32>, vector<32x128xf32>, vector<2x128xf32> -> vector<2x128xf32>
    %474 = arith.addf %472, %473 : vector<2x128xf32>
    %475 = vector.extract_strided_slice %474 {offsets = [0, 0], sizes = [2, 32], strides = [1, 1]} : vector<2x128xf32> to vector<2x32xf32>
    %476 = arith.negf %475 : vector<2x32xf32>
    %477 = math.exp %476 : vector<2x32xf32>
    %cst_138 = arith.constant 1.000000e+00 : f32
    %478 = vector.broadcast %cst_138 : f32 to vector<2x32xf32>
    %479 = arith.addf %478, %477 : vector<2x32xf32>
    %480 = arith.divf %478, %479 : vector<2x32xf32>
    %481 = vector.extract_strided_slice %474 {offsets = [0, 64], sizes = [2, 32], strides = [1, 1]} : vector<2x128xf32> to vector<2x32xf32>
    %482 = math.tanh %481 : vector<2x32xf32>
    %483 = vector.extract_strided_slice %474 {offsets = [0, 96], sizes = [2, 32], strides = [1, 1]} : vector<2x128xf32> to vector<2x32xf32>
    %484 = arith.negf %483 : vector<2x32xf32>
    %485 = math.exp %484 : vector<2x32xf32>
    %cst_139 = arith.constant 1.000000e+00 : f32
    %486 = vector.broadcast %cst_139 : f32 to vector<2x32xf32>
    %487 = arith.addf %486, %485 : vector<2x32xf32>
    %488 = arith.divf %486, %487 : vector<2x32xf32>
    %489 = vector.extract_strided_slice %474 {offsets = [0, 32], sizes = [2, 32], strides = [1, 1]} : vector<2x128xf32> to vector<2x32xf32>
    %490 = arith.negf %489 : vector<2x32xf32>
    %491 = math.exp %490 : vector<2x32xf32>
    %cst_140 = arith.constant 1.000000e+00 : f32
    %492 = vector.broadcast %cst_140 : f32 to vector<2x32xf32>
    %493 = arith.addf %492, %491 : vector<2x32xf32>
    %494 = arith.divf %492, %493 : vector<2x32xf32>
    %495 = arith.mulf %494, %464 : vector<2x32xf32>
    %496 = arith.mulf %480, %482 : vector<2x32xf32>
    %497 = arith.addf %495, %496 : vector<2x32xf32>
    %498 = math.tanh %497 : vector<2x32xf32>
    %499 = arith.mulf %488, %498 : vector<2x32xf32>
    %c12_141 = arith.constant 12 : index
    %c0_142 = arith.constant 0 : index
    %500 = vector.load %arg15[%c12_141, %c0_142] : memref<16x128xf32, #tpu.memory_space<vmem>>, vector<2x128xf32>
    %c2_143 = arith.constant 2 : index
    %c0_144 = arith.constant 0 : index
    %501 = vector.load %arg15[%c2_143, %c0_144] : memref<16x128xf32, #tpu.memory_space<vmem>>, vector<2x128xf32>
    %502 = arith.subf %500, %501 : vector<2x128xf32>
    %503 = vector.broadcast %0 : vector<1x128xf32> to vector<2x128xf32>
    %504 = arith.mulf %503, %502 : vector<2x128xf32>
    %505 = arith.addf %501, %504 : vector<2x128xf32>
    %cst_145 = arith.constant dense<0.000000e+00> : vector<2x128xf32>
    %506 = tpu.matmul %499, %305, %cst_145 {dimension_numbers = #tpu.dot_dimension_numbers<[1], [0], [0], [1], [0, 0, 1, 1], [], []>} : vector<2x32xf32>, vector<32x128xf32>, vector<2x128xf32> -> vector<2x128xf32>
    %507 = arith.addf %505, %506 : vector<2x128xf32>
    %508 = vector.extract_strided_slice %507 {offsets = [0, 0], sizes = [2, 32], strides = [1, 1]} : vector<2x128xf32> to vector<2x32xf32>
    %509 = arith.negf %508 : vector<2x32xf32>
    %510 = math.exp %509 : vector<2x32xf32>
    %cst_146 = arith.constant 1.000000e+00 : f32
    %511 = vector.broadcast %cst_146 : f32 to vector<2x32xf32>
    %512 = arith.addf %511, %510 : vector<2x32xf32>
    %513 = arith.divf %511, %512 : vector<2x32xf32>
    %514 = vector.extract_strided_slice %507 {offsets = [0, 64], sizes = [2, 32], strides = [1, 1]} : vector<2x128xf32> to vector<2x32xf32>
    %515 = math.tanh %514 : vector<2x32xf32>
    %516 = vector.extract_strided_slice %507 {offsets = [0, 96], sizes = [2, 32], strides = [1, 1]} : vector<2x128xf32> to vector<2x32xf32>
    %517 = arith.negf %516 : vector<2x32xf32>
    %518 = math.exp %517 : vector<2x32xf32>
    %cst_147 = arith.constant 1.000000e+00 : f32
    %519 = vector.broadcast %cst_147 : f32 to vector<2x32xf32>
    %520 = arith.addf %519, %518 : vector<2x32xf32>
    %521 = arith.divf %519, %520 : vector<2x32xf32>
    %522 = vector.extract_strided_slice %507 {offsets = [0, 32], sizes = [2, 32], strides = [1, 1]} : vector<2x128xf32> to vector<2x32xf32>
    %523 = arith.negf %522 : vector<2x32xf32>
    %524 = math.exp %523 : vector<2x32xf32>
    %cst_148 = arith.constant 1.000000e+00 : f32
    %525 = vector.broadcast %cst_148 : f32 to vector<2x32xf32>
    %526 = arith.addf %525, %524 : vector<2x32xf32>
    %527 = arith.divf %525, %526 : vector<2x32xf32>
    %528 = arith.mulf %527, %497 : vector<2x32xf32>
    %529 = arith.mulf %513, %515 : vector<2x32xf32>
    %530 = arith.addf %528, %529 : vector<2x32xf32>
    %531 = math.tanh %530 : vector<2x32xf32>
    %532 = arith.mulf %521, %531 : vector<2x32xf32>
    %c14_149 = arith.constant 14 : index
    %c0_150 = arith.constant 0 : index
    %533 = vector.load %arg15[%c14_149, %c0_150] : memref<16x128xf32, #tpu.memory_space<vmem>>, vector<2x128xf32>
    %c0_151 = arith.constant 0 : index
    %c0_152 = arith.constant 0 : index
    %534 = vector.load %arg15[%c0_151, %c0_152] : memref<16x128xf32, #tpu.memory_space<vmem>>, vector<2x128xf32>
    %535 = arith.subf %533, %534 : vector<2x128xf32>
    %536 = vector.broadcast %0 : vector<1x128xf32> to vector<2x128xf32>
    %537 = arith.mulf %536, %535 : vector<2x128xf32>
    %538 = arith.addf %534, %537 : vector<2x128xf32>
    %cst_153 = arith.constant dense<0.000000e+00> : vector<2x128xf32>
    %539 = tpu.matmul %532, %305, %cst_153 {dimension_numbers = #tpu.dot_dimension_numbers<[1], [0], [0], [1], [0, 0, 1, 1], [], []>} : vector<2x32xf32>, vector<32x128xf32>, vector<2x128xf32> -> vector<2x128xf32>
    %540 = arith.addf %538, %539 : vector<2x128xf32>
    %541 = vector.extract_strided_slice %540 {offsets = [0, 0], sizes = [2, 32], strides = [1, 1]} : vector<2x128xf32> to vector<2x32xf32>
    %542 = arith.negf %541 : vector<2x32xf32>
    %543 = math.exp %542 : vector<2x32xf32>
    %cst_154 = arith.constant 1.000000e+00 : f32
    %544 = vector.broadcast %cst_154 : f32 to vector<2x32xf32>
    %545 = arith.addf %544, %543 : vector<2x32xf32>
    %546 = arith.divf %544, %545 : vector<2x32xf32>
    %547 = vector.extract_strided_slice %540 {offsets = [0, 64], sizes = [2, 32], strides = [1, 1]} : vector<2x128xf32> to vector<2x32xf32>
    %548 = math.tanh %547 : vector<2x32xf32>
    %549 = vector.extract_strided_slice %540 {offsets = [0, 96], sizes = [2, 32], strides = [1, 1]} : vector<2x128xf32> to vector<2x32xf32>
    %550 = arith.negf %549 : vector<2x32xf32>
    %551 = math.exp %550 : vector<2x32xf32>
    %cst_155 = arith.constant 1.000000e+00 : f32
    %552 = vector.broadcast %cst_155 : f32 to vector<2x32xf32>
    %553 = arith.addf %552, %551 : vector<2x32xf32>
    %554 = arith.divf %552, %553 : vector<2x32xf32>
    %555 = vector.extract_strided_slice %540 {offsets = [0, 32], sizes = [2, 32], strides = [1, 1]} : vector<2x128xf32> to vector<2x32xf32>
    %556 = arith.negf %555 : vector<2x32xf32>
    %557 = math.exp %556 : vector<2x32xf32>
    %cst_156 = arith.constant 1.000000e+00 : f32
    %558 = vector.broadcast %cst_156 : f32 to vector<2x32xf32>
    %559 = arith.addf %558, %557 : vector<2x32xf32>
    %560 = arith.divf %558, %559 : vector<2x32xf32>
    %561 = arith.mulf %560, %530 : vector<2x32xf32>
    %562 = arith.mulf %546, %548 : vector<2x32xf32>
    %563 = arith.addf %561, %562 : vector<2x32xf32>
    %564 = math.tanh %563 : vector<2x32xf32>
    %565 = arith.mulf %554, %564 : vector<2x32xf32>
    %566 = arith.subf %565, %334 : vector<2x32xf32>
    %567 = vector.broadcast %1 : vector<1x32xf32> to vector<2x32xf32>
    %568 = arith.mulf %567, %566 : vector<2x32xf32>
    %569 = arith.addf %334, %568 : vector<2x32xf32>
    %c0_157 = arith.constant 0 : index
    %c0_158 = arith.constant 0 : index
    %570 = vector.load %arg11[%c0_157, %c0_158] : memref<32x10xf32, #tpu.memory_space<vmem>>, vector<32x10xf32>
    %cst_159 = arith.constant dense<0.000000e+00> : vector<2x10xf32>
    %571 = tpu.matmul %569, %570, %cst_159 {dimension_numbers = #tpu.dot_dimension_numbers<[1], [0], [0], [1], [0, 0, 1, 1], [], []>} : vector<2x32xf32>, vector<32x10xf32>, vector<2x10xf32> -> vector<2x10xf32>
    %c0_160 = arith.constant 0 : index
    %c0_161 = arith.constant 0 : index
    %572 = vector.load %arg2[%c0_160, %c0_161] : memref<2x8xf32, #tpu.memory_space<vmem>>, vector<2x8xf32>
    %c0_162 = arith.constant 0 : index
    %c0_163 = arith.constant 0 : index
    %573 = vector.load %arg12[%c0_162, %c0_163] : memref<8x10xf32, #tpu.memory_space<vmem>>, vector<8x10xf32>
    %cst_164 = arith.constant dense<0.000000e+00> : vector<2x10xf32>
    %574 = tpu.matmul %572, %573, %cst_164 {dimension_numbers = #tpu.dot_dimension_numbers<[1], [0], [0], [1], [0, 0, 1, 1], [], []>} : vector<2x8xf32>, vector<8x10xf32>, vector<2x10xf32> -> vector<2x10xf32>
    %575 = arith.addf %571, %574 : vector<2x10xf32>
    %c0_165 = arith.constant 0 : index
    %c0_166 = arith.constant 0 : index
    %576 = vector.load %arg13[%c0_165, %c0_166] : memref<1x10xf32, #tpu.memory_space<vmem>>, vector<1x10xf32>
    %577 = vector.broadcast %576 : vector<1x10xf32> to vector<2x10xf32>
    %578 = arith.addf %575, %577 : vector<2x10xf32>
    %c0_167 = arith.constant 0 : index
    %c0_168 = arith.constant 0 : index
    %579 = vector.load %arg14[%c0_167, %c0_168] : memref<2x10xf32, #tpu.memory_space<vmem>>, vector<2x10xf32>
    tpu.vector_store %arg14[%c0_167, %c0_168], %578 {strides = array<i32>} : memref<2x10xf32, #tpu.memory_space<vmem>>, vector<2x10xf32>,
    return
  }
  func.func @transform_0(%arg0: i32) -> (i32, i32) {
    %c0_i32 = arith.constant 0 : i32
    %c0_i32_0 = arith.constant 0 : i32
    %c0_i32_1 = arith.constant 0 : i32
    return %c0_i32, %c0_i32_0 : i32, i32
  }
  func.func @transform_1(%arg0: i32) -> (i32, i32) {
    %c0_i32 = arith.constant 0 : i32
    %c0_i32_0 = arith.constant 0 : i32
    %c0_i32_1 = arith.constant 0 : i32
    return %c0_i32, %c0_i32_0 : i32, i32
  }
  func.func @transform_2(%arg0: i32) -> (i32, i32) {
    %c0_i32 = arith.constant 0 : i32
    %c0_i32_0 = arith.constant 0 : i32
    %c0_i32_1 = arith.constant 0 : i32
    return %c0_i32, %c0_i32_0 : i32, i32
  }
  func.func @transform_3(%arg0: i32) -> (i32, i32) {
    %c0_i32 = arith.constant 0 : i32
    %c0_i32_0 = arith.constant 0 : i32
    %c0_i32_1 = arith.constant 0 : i32
    return %c0_i32, %c0_i32_0 : i32, i32
  }
  func.func @transform_4(%arg0: i32) -> (i32, i32) {
    %c0_i32 = arith.constant 0 : i32
    %c0_i32_0 = arith.constant 0 : i32
    %c0_i32_1 = arith.constant 0 : i32
    return %c0_i32, %c0_i32_0 : i32, i32
  }
  func.func @transform_5(%arg0: i32) -> (i32, i32) {
    %c0_i32 = arith.constant 0 : i32
    %c0_i32_0 = arith.constant 0 : i32
    %c0_i32_1 = arith.constant 0 : i32
    return %c0_i32, %c0_i32_0 : i32, i32
  }
  func.func @transform_6(%arg0: i32) -> (i32, i32) {
    %c0_i32 = arith.constant 0 : i32
    %c0_i32_0 = arith.constant 0 : i32
    %c0_i32_1 = arith.constant 0 : i32
    return %c0_i32, %c0_i32_0 : i32, i32
  }
  func.func @transform_7(%arg0: i32) -> (i32, i32) {
    %c0_i32 = arith.constant 0 : i32
    %c0_i32_0 = arith.constant 0 : i32
    %c0_i32_1 = arith.constant 0 : i32
    return %c0_i32, %c0_i32_0 : i32, i32
  }
  func.func @transform_8(%arg0: i32) -> (i32, i32) {
    %c0_i32 = arith.constant 0 : i32
    %c0_i32_0 = arith.constant 0 : i32
    %c0_i32_1 = arith.constant 0 : i32
    return %c0_i32, %c0_i32_0 : i32, i32
  }
  func.func @transform_9(%arg0: i32) -> (i32, i32) {
    %c0_i32 = arith.constant 0 : i32
    %c0_i32_0 = arith.constant 0 : i32
    %c0_i32_1 = arith.constant 0 : i32
    return %c0_i32, %c0_i32_0 : i32, i32
  }
  func.func @transform_10(%arg0: i32) -> (i32, i32) {
    %c0_i32 = arith.constant 0 : i32
    %c0_i32_0 = arith.constant 0 : i32
    %c0_i32_1 = arith.constant 0 : i32
    return %c0_i32, %c0_i32_0 : i32, i32
  }
  func.func @transform_11(%arg0: i32) -> (i32, i32) {
    %c0_i32 = arith.constant 0 : i32
    %c0_i32_0 = arith.constant 0 : i32
    %c0_i32_1 = arith.constant 0 : i32
    return %c0_i32, %c0_i32_0 : i32, i32
  }
  func.func @transform_12(%arg0: i32) -> (i32, i32) {
    %c0_i32 = arith.constant 0 : i32
    %c0_i32_0 = arith.constant 0 : i32
    %c0_i32_1 = arith.constant 0 : i32
    return %c0_i32, %c0_i32_0 : i32, i32
  }
  func.func @transform_13(%arg0: i32) -> (i32, i32) {
    %c0_i32 = arith.constant 0 : i32
    %c0_i32_0 = arith.constant 0 : i32
    %c0_i32_1 = arith.constant 0 : i32
    return %c0_i32, %c0_i32_0 : i32, i32
  }
}

</mosaic_0001>

<llo_original>
// kernel: tpu_custom_call.1
$region0: #{tpu_custom_call.1}
  #allocation0 [shape = 'u32[]', space=smem, size = 0x4, offset = 0x4, fixed_abs, tag = 'smem constant byte address 0x4 - core index']
  #allocation1 [shape = 'u32[144,128]{1,0:T(1,128)}', space=vmem, size = 0x12000, scoped, tag = 'internal scratch']
  #allocation2 [shape = 'f32[16,128]{1,0:T(8,128)}', space=vmem, size = 0x2000, scoped, tag = 'scratch operand']
  #allocation3 [shape = 'f32[16,32]{1,0:T(8,128)}', space=vmem, size = 0x2000, scoped, tag = 'scratch operand']
  %s0 = inlined_call_operand.hbm [shape: f32[16,32], index: 0, kind: input, shape index: {}]
  %s1 = inlined_call_operand.hbm [shape: f32[2,8], index: 1, kind: input, shape index: {}]
  %s2 = inlined_call_operand.vmem [shape: f32[1,128], index: 2, kind: input, shape index: {}]
  %s3 = inlined_call_operand.hbm [shape: f32[1,32], index: 3, kind: input, shape index: {}]
  %s4 = inlined_call_operand.vmem [shape: f32[32,128], index: 4, kind: input, shape index: {}]
  %s5 = inlined_call_operand.vmem [shape: f32[32,128], index: 5, kind: input, shape index: {}]
  %s6 = inlined_call_operand.hbm [shape: f32[1,128], index: 6, kind: input, shape index: {}]
  %s7 = inlined_call_operand.hbm [shape: f32[32,128], index: 7, kind: input, shape index: {}]
  %s8 = inlined_call_operand.hbm [shape: f32[32,128], index: 8, kind: input, shape index: {}]
  %s9 = inlined_call_operand.hbm [shape: f32[1,128], index: 9, kind: input, shape index: {}]
  %s10 = inlined_call_operand.vmem [shape: f32[32,10], index: 10, kind: input, shape index: {}]
  %s11 = inlined_call_operand.vmem [shape: f32[8,10], index: 11, kind: input, shape index: {}]
  %s12 = inlined_call_operand.vmem [shape: f32[1,10], index: 12, kind: input, shape index: {}]
  %s13 = inlined_call_operand.hbm [shape: f32[2,10], index: 13, kind: output, shape index: {}]
  %s14 = sld [smem:[#allocation0]]
  $region90: #{tpu_custom_call.1} parent=0
    _
  %s16 = ssub.s32 1, %s14
  %s17 = scalar_select 0, %s16, %s14
  $region1: #{tpu_custom_call.1} parent=0
    #allocation4 [shape = 'u8[8192]{0}', space=vmem, size = 0x2000, scoped, tag = 'input window, operand 0, single buffered']
    #allocation5 [shape = 's32[1]{0}', space=sflag, size = 0x4, scoped, tag = 'scoped memory for tpu_custom_call.1']
    #allocation6 [shape = 's32[1]{0}', space=sflag, size = 0x4, scoped, tag = 'scoped memory for tpu_custom_call.1']
    #allocation7 [shape = 'u8[1024]{0}', space=vmem, size = 0x400, scoped, tag = 'input window, operand 1, single buffered']
    #allocation8 [shape = 's32[1]{0}', space=sflag, size = 0x4, scoped, tag = 'scoped memory for tpu_custom_call.1']
    #allocation9 [shape = 'u8[512]{0}', space=vmem, size = 0x400, scoped, tag = 'input window, operand 3, single buffered']
    #allocation10 [shape = 'u8[512]{0}', space=vmem, size = 0x400, scoped, tag = 'input window, operand 6, single buffered']
    #allocation11 [shape = 's32[1]{0}', space=sflag, size = 0x4, scoped, tag = 'scoped memory for tpu_custom_call.1']
    #allocation12 [shape = 'u8[16384]{0}', space=vmem, size = 0x4000, scoped, tag = 'input window, operand 7, single buffered']
    #allocation13 [shape = 'u8[16384]{0}', space=vmem, size = 0x4000, scoped, tag = 'input window, operand 8, single buffered']
    #allocation14 [shape = 's32[1]{0}', space=sflag, size = 0x4, scoped, tag = 'scoped memory for tpu_custom_call.1']
    #allocation15 [shape = 'u8[512]{0}', space=vmem, size = 0x400, scoped, tag = 'input window, operand 9, single buffered']
    #allocation16 [shape = 'u8[1024]{0}', space=vmem, size = 0x400, scoped, tag = 'output window, operand 0, single buffered']
    %18 = vsyncpa [#allocation5], 0
    %19 = vsyncpa [#allocation8], 0
    %20 = vsyncpa [#allocation11], 0
    %21 = vsyncpa [#allocation14], 0
    %22 = vsyncpa [#allocation6], 0
    // Predicated region
    $region2: #{tpu_custom_call.1} parent=1 // pred_check
      _
    $region3: #{tpu_custom_call.1} parent=1 // pred_check_branch
      %24 = sbr.rel (0) target = $region5
    $region4: #{tpu_custom_call.1} parent=1 // pred_region
      %s26 = ssub.s32 256, 256
      %27 = vsyncadd [#allocation5], %s26
      %s28 = sshll.u32 [#allocation4], 4
      %s29 = int_to_ptr.vmem [resolvable:$true] %s28
      %34 = dma.hbm_to_vmem [thread:$0]  %s0, 256, %s29, [#allocation5], 128, 128, 8
    $region5: #{tpu_custom_call.1} parent=1 // pred_fallthru
      _
    // Predicated region
    $region6: #{tpu_custom_call.1} parent=1 // pred_check
      _
    $region7: #{tpu_custom_call.1} parent=1 // pred_check_branch
      %36 = sbr.rel (0) target = $region9
    $region8: #{tpu_custom_call.1} parent=1 // pred_region
      %s38 = ssub.s32 32, 32
      %39 = vsyncadd [#allocation8], %s38
      %s41 = sshll.u32 [#allocation7], 4
      %s42 = int_to_ptr.vmem [resolvable:$true] %s41
      %44 = dma.hbm_to_vmem [thread:$0]  %s1, 32, %s42, [#allocation8]
    $region9: #{tpu_custom_call.1} parent=1 // pred_fallthru
      _
    // Predicated region
    $region10: #{tpu_custom_call.1} parent=1 // pred_check
      _
    $region11: #{tpu_custom_call.1} parent=1 // pred_check_branch
      %46 = sbr.rel (0) target = $region13
    $region12: #{tpu_custom_call.1} parent=1 // pred_region
      _
    $region13: #{tpu_custom_call.1} parent=1 // pred_fallthru
      _
    // Predicated region
    $region14: #{tpu_custom_call.1} parent=1 // pred_check
      _
    $region15: #{tpu_custom_call.1} parent=1 // pred_check_branch
      %48 = sbr.rel (0) target = $region17
    $region16: #{tpu_custom_call.1} parent=1 // pred_region
      %s50 = ssub.s32 16, 16
      %51 = vsyncadd [#allocation8], %s50
      %s53 = sshll.u32 [#allocation9], 4
      %s54 = int_to_ptr.vmem [resolvable:$true] %s53
      %56 = dma.hbm_to_vmem [thread:$0]  %s3, 16, %s54, [#allocation8]
    $region17: #{tpu_custom_call.1} parent=1 // pred_fallthru
      _
    // Predicated region
    $region18: #{tpu_custom_call.1} parent=1 // pred_check
      _
    $region19: #{tpu_custom_call.1} parent=1 // pred_check_branch
      %58 = sbr.rel (0) target = $region21
    $region20: #{tpu_custom_call.1} parent=1 // pred_region
      _
    $region21: #{tpu_custom_call.1} parent=1 // pred_fallthru
      _
    // Predicated region
    $region22: #{tpu_custom_call.1} parent=1 // pred_check
      _
    $region23: #{tpu_custom_call.1} parent=1 // pred_check_branch
      %60 = sbr.rel (0) target = $region25
    $region24: #{tpu_custom_call.1} parent=1 // pred_region
      _
    $region25: #{tpu_custom_call.1} parent=1 // pred_fallthru
      _
    // Predicated region
    $region26: #{tpu_custom_call.1} parent=1 // pred_check
      _
    $region27: #{tpu_custom_call.1} parent=1 // pred_check_branch
      %62 = sbr.rel (0) target = $region29
    $region28: #{tpu_custom_call.1} parent=1 // pred_region
      %s64 = ssub.s32 16, 16
      %65 = vsyncadd [#allocation11], %s64
      %s67 = sshll.u32 [#allocation10], 4
      %s68 = int_to_ptr.vmem [resolvable:$true] %s67
      %70 = dma.hbm_to_vmem [thread:$0]  %s6, 16, %s68, [#allocation11]
    $region29: #{tpu_custom_call.1} parent=1 // pred_fallthru
      _
    // Predicated region
    $region30: #{tpu_custom_call.1} parent=1 // pred_check
      _
    $region31: #{tpu_custom_call.1} parent=1 // pred_check_branch
      %72 = sbr.rel (0) target = $region33
    $region32: #{tpu_custom_call.1} parent=1 // pred_region
      %s74 = ssub.s32 512, 512
      %75 = vsyncadd [#allocation11], %s74
      %s76 = sshll.u32 [#allocation12], 4
      %s77 = int_to_ptr.vmem [resolvable:$true] %s76
      %82 = dma.hbm_to_vmem [thread:$0]  %s7, 512, %s77, [#allocation11], 128, 128, 8
    $region33: #{tpu_custom_call.1} parent=1 // pred_fallthru
      _
    // Predicated region
    $region34: #{tpu_custom_call.1} parent=1 // pred_check
      _
    $region35: #{tpu_custom_call.1} parent=1 // pred_check_branch
      %84 = sbr.rel (0) target = $region37
    $region36: #{tpu_custom_call.1} parent=1 // pred_region
      %s86 = ssub.s32 512, 512
      %87 = vsyncadd [#allocation14], %s86
      %s88 = sshll.u32 [#allocation13], 4
      %s89 = int_to_ptr.vmem [resolvable:$true] %s88
      %94 = dma.hbm_to_vmem [thread:$0]  %s8, 512, %s89, [#allocation14], 128, 128, 8
    $region37: #{tpu_custom_call.1} parent=1 // pred_fallthru
      _
    // Predicated region
    $region38: #{tpu_custom_call.1} parent=1 // pred_check
      _
    $region39: #{tpu_custom_call.1} parent=1 // pred_check_branch
      %96 = sbr.rel (0) target = $region41
    $region40: #{tpu_custom_call.1} parent=1 // pred_region
      %s98 = ssub.s32 16, 16
      %99 = vsyncadd [#allocation14], %s98
      %s101 = sshll.u32 [#allocation15], 4
      %s102 = int_to_ptr.vmem [resolvable:$true] %s101
      %104 = dma.hbm_to_vmem [thread:$0]  %s9, 16, %s102, [#allocation14]
    $region41: #{tpu_custom_call.1} parent=1 // pred_fallthru
      _
    // Predicated region
    $region42: #{tpu_custom_call.1} parent=1 // pred_check
      _
    $region43: #{tpu_custom_call.1} parent=1 // pred_check_branch
      %106 = sbr.rel (0) target = $region45
    $region44: #{tpu_custom_call.1} parent=1 // pred_region
      _
    $region45: #{tpu_custom_call.1} parent=1 // pred_fallthru
      _
    // Predicated region
    $region46: #{tpu_custom_call.1} parent=1 // pred_check
      _
    $region47: #{tpu_custom_call.1} parent=1 // pred_check_branch
      %108 = sbr.rel (0) target = $region49
    $region48: #{tpu_custom_call.1} parent=1 // pred_region
      _
    $region49: #{tpu_custom_call.1} parent=1 // pred_fallthru
      _
    // Predicated region
    $region50: #{tpu_custom_call.1} parent=1 // pred_check
      _
    $region51: #{tpu_custom_call.1} parent=1 // pred_check_branch
      %110 = sbr.rel (0) target = $region53
    $region52: #{tpu_custom_call.1} parent=1 // pred_region
      _
    $region53: #{tpu_custom_call.1} parent=1 // pred_fallthru
      _
    // Predicated region
    $region54: #{tpu_custom_call.1} parent=1 // pred_check
      _
    $region55: #{tpu_custom_call.1} parent=1 // pred_check_branch
      %112 = sbr.rel (0) target = $region57
    $region56: #{tpu_custom_call.1} parent=1 // pred_region
      %113 = dma.done [#allocation5], 256
    $region57: #{tpu_custom_call.1} parent=1 // pred_fallthru
      _
    // Predicated region
    $region58: #{tpu_custom_call.1} parent=1 // pred_check
      _
    $region59: #{tpu_custom_call.1} parent=1 // pred_check_branch
      %115 = sbr.rel (0) target = $region61
    $region60: #{tpu_custom_call.1} parent=1 // pred_region
      %116 = dma.done [#allocation8], 32
    $region61: #{tpu_custom_call.1} parent=1 // pred_fallthru
      _
    // Predicated region
    $region62: #{tpu_custom_call.1} parent=1 // pred_check
      _
    $region63: #{tpu_custom_call.1} parent=1 // pred_check_branch
      %118 = sbr.rel (0) target = $region65
    $region64: #{tpu_custom_call.1} parent=1 // pred_region
      %119 = dma.done [#allocation8], 16
    $region65: #{tpu_custom_call.1} parent=1 // pred_fallthru
      _
    // Predicated region
    $region66: #{tpu_custom_call.1} parent=1 // pred_check
      _
    $region67: #{tpu_custom_call.1} parent=1 // pred_check_branch
      %121 = sbr.rel (0) target = $region69
    $region68: #{tpu_custom_call.1} parent=1 // pred_region
      %122 = dma.done [#allocation11], 16
    $region69: #{tpu_custom_call.1} parent=1 // pred_fallthru
      _
    // Predicated region
    $region70: #{tpu_custom_call.1} parent=1 // pred_check
      _
    $region71: #{tpu_custom_call.1} parent=1 // pred_check_branch
      %124 = sbr.rel (0) target = $region73
    $region72: #{tpu_custom_call.1} parent=1 // pred_region
      %125 = dma.done [#allocation11], 512
    $region73: #{tpu_custom_call.1} parent=1 // pred_fallthru
      _
    // Predicated region
    $region74: #{tpu_custom_call.1} parent=1 // pred_check
      _
    $region75: #{tpu_custom_call.1} parent=1 // pred_check_branch
      %127 = sbr.rel (0) target = $region77
    $region76: #{tpu_custom_call.1} parent=1 // pred_region
      %128 = dma.done [#allocation14], 512
    $region77: #{tpu_custom_call.1} parent=1 // pred_fallthru
      _
    // Predicated region
    $region78: #{tpu_custom_call.1} parent=1 // pred_check
      _
    $region79: #{tpu_custom_call.1} parent=1 // pred_check_branch
      %130 = sbr.rel (0) target = $region81
    $region80: #{tpu_custom_call.1} parent=1 // pred_region
      %131 = dma.done [#allocation14], 16
    $region81: #{tpu_custom_call.1} parent=1 // pred_fallthru
      _
    %v132 = vld [vmem:[%s2] sm:$0x1]
    %v133 = vld [vmem:[#allocation9] sm:$0x1]
    %v134 = vld [vmem:[%s4] sm:$0xff]
    %v135 = vld [vmem:[%s4 + $0x8] sm:$0xff]
    %v136 = vld [vmem:[%s4 + $0x10] sm:$0xff]
    %v137 = vld [vmem:[%s4 + $0x18] sm:$0xff]
    %v138 = vld [vmem:[%s5] sm:$0xff]
    %v139 = vld [vmem:[%s5 + $0x8] sm:$0xff]
    %v140 = vld [vmem:[%s5 + $0x10] sm:$0xff]
    %v141 = vld [vmem:[%s5 + $0x18] sm:$0xff]
    %v142 = vld [vmem:[#allocation10] sm:$0x1]
    %v143 = vld [vmem:[#allocation4] sm:$0xff]
    %v144 = vld [vmem:[#allocation4 + $0x8] sm:$0xff]
    %v146 = vlaneseq
    %v147 = vshrl.u32 %v146, 7
    %v148 = vsub.s32 0, %v147
    %v149 = vrot.slane %v142, %v148
    %vm151 = vcmask 261120
    %v153 = vsel %vm151, %v143, 0
    %v156 = vsel %vm151, %v144, 0
    %158 = vmatprep.subr.mxu0 0.0
    %159 = vmatpush1.msra.mxu0 %v134
    %160 = vmatprep.subr.mxu0 0.0
    %161 = vmatpush1.msra.mxu0 %v135
    %162 = vmatprep.subr.mxu0 0.0
    %163 = vmatpush1.msra.mxu0 %v136
    %164 = vmatprep.subr.mxu0 0.0
    %165 = vmatpush1.msra.mxu0 %v137
    %166 = vmatprep.subr.mxu0 0.0
    %167 = vmatpush1.msra.mxu0 0.0
    %168 = vmatprep.subr.mxu0 0.0
    %169 = vmatpush1.msra.mxu0 0.0
    %170 = vmatprep.subr.mxu0 0.0
    %171 = vmatpush1.msra.mxu0 0.0
    %172 = vmatprep.subr.mxu0 0.0
    %173 = vmatpush1.msra.mxu0 0.0
    %174 = vmatprep.subr.mxu0 0.0
    %175 = vmatpush1.msra.mxu0 0.0
    %176 = vmatprep.subr.mxu0 0.0
    %177 = vmatpush1.msra.mxu0 0.0
    %178 = vmatprep.subr.mxu0 0.0
    %179 = vmatpush1.msra.mxu0 0.0
    %180 = vmatprep.subr.mxu0 0.0
    %181 = vmatpush1.msra.mxu0 0.0
    %182 = vmatprep.subr.mxu0 0.0
    %183 = vmatpush1.msra.mxu0 0.0
    %184 = vmatprep.subr.mxu0 0.0
    %185 = vmatpush1.msra.mxu0 0.0
    %186 = vmatprep.subr.mxu0 0.0
    %187 = vmatpush1.msra.mxu0 0.0
    %188 = vmatprep.subr.mxu0 0.0
    %189 = vmatpush1.msra.mxu0 0.0
    %190 = vmatprep.subr.mxu0 0.0
    %191 = vmatpush1.msra.mxu0 0.0
    %192 = vmatprep.subr.mxu0 0.0
    %193 = vmatpush1.msra.mxu0 0.0
    %194 = vmatprep.subr.mxu0 0.0
    %195 = vmatpush1.msra.mxu0 0.0
    %196 = vmatprep.subr.mxu0 0.0
    %197 = vmatpush1.msra.mxu0 0.0
    %198 = vmatprep.subr.mxu0 0.0
    %199 = vmatpush1.msra.mxu0 0.0
    %200 = vmatprep.subr.mxu0 0.0
    %201 = vmatpush1.msra.mxu0 0.0
    %202 = vmatprep.subr.mxu0 0.0
    %203 = vmatpush1.msra.mxu0 0.0
    %204 = vmatprep.subr.mxu0 0.0
    %205 = vmatpush1.msra.mxu0 0.0
    %206 = vmatprep.subr.mxu0 0.0
    %207 = vmatpush1.msra.mxu0 0.0
    %208 = vmatprep.subr.mxu0 0.0
    %209 = vmatpush1.msra.mxu0 0.0
    %210 = vmatprep.subr.mxu0 0.0
    %211 = vmatpush1.msra.mxu0 0.0
    %212 = vmatprep.subr.mxu0 0.0
    %213 = vmatpush1.msra.mxu0 0.0
    %214 = vmatprep.subr.mxu0 0.0
    %215 = vmatpush1.msra.mxu0 0.0
    %216 = vmatprep.subr.mxu0 0.0
    %217 = vmatpush1.msra.mxu0 0.0
    %218 = vmatprep.subr.mxu0 0.0
    %219 = vmatpush1.msra.mxu0 0.0
    %220 = vmatprep.subr.mxu0 0.0
    %221 = vmatpush1.msra.mxu0 0.0
    %222 = vmatprep.mubr.f32.mxu0 0.0
    %223 = vmatmul.mubr.f32.gmra.mrb[0].mxu0 %v153
    %v224 = vpop.f32.mrb[0].mxu0
    %v225 = vadd.f32 %v149, %v224
    %v226 = vpop.f32.mrb[0].mxu0
    %227 = vmatprep.mubr.f32.mxu0 0.0
    %228 = vmatmul.mubr.f32.gmra.mrb[0].mxu0 %v156
    %v229 = vpop.f32.mrb[0].mxu0
    %v230 = vadd.f32 %v149, %v229
    %v231 = vpop.f32.mrb[0].mxu0
    %232 = vdwg.mxu0
    %233 = vst [vmem:[#allocation2] sm:$0xff] %v225
    %234 = vst [vmem:[#allocation2 + $0x8] sm:$0xff] %v230
    %v235 = vld [vmem:[#allocation2] sm:$0x3]
    %v236 = vld [vmem:[#allocation2 + $0xe] sm:$0x3]
    %v237 = vsub.f32 %v235, %v236
    %v239 = vlaneseq
    %v240 = vshrl.u32 %v239, 7
    %v241 = vsub.s32 0, %v240
    %v242 = vrot.slane %v132, %v241
    %v244 = vmul.f32 %v242, %v237
    %v245 = vadd.f32 %v236, %v244
    %v246 = vxor.u32 %v245, 2147483648
    %v247 = vmul.f32 %v246, 1.442695
    %v248 = vpow.pop %v247
    %v249 = vadd.f32 %v248, 1.0
    %v250 = vrcp.pop %v249
    %v251 = vmul.f32 1.0, %v250
    %v252 = vtanh.pop %v245
    %254 = vrot.lane.b32.xlu0 %v252, 64
    %v255 = vpop.permute.xlu0 %254
    %v257 = vmul.f32 %v251, %v255
    %v258 = vtanh.pop %v257
    %260 = vrot.lane.b32.xlu0 %v258, 96
    %v261 = vpop.permute.xlu0 %260
    %v263 = vmul.f32 %v251, %v261
    %v264 = vld [vmem:[#allocation2 + $0x2] sm:$0x3]
    %v265 = vld [vmem:[#allocation2 + $0xc] sm:$0x3]
    %v266 = vsub.f32 %v264, %v265
    %v267 = vmul.f32 %v242, %v266
    %v268 = vadd.f32 %v265, %v267
    %270 = vrot.lane.b32.xlu0 %v263, 32
    %v271 = vpop.permute.xlu0 %270
    %v272 = vsel %vm151, %v271, 0
    %274 = vmatprep.subr.mxu0 0.0
    %275 = vmatpush1.msra.mxu0 %v138
    %276 = vmatprep.subr.mxu0 0.0
    %277 = vmatpush1.msra.mxu0 %v139
    %278 = vmatprep.subr.mxu0 0.0
    %279 = vmatpush1.msra.mxu0 %v140
    %280 = vmatprep.subr.mxu0 0.0
    %281 = vmatpush1.msra.mxu0 %v141
    %282 = vmatprep.subr.mxu0 0.0
    %283 = vmatpush1.msra.mxu0 0.0
    %284 = vmatprep.subr.mxu0 0.0
    %285 = vmatpush1.msra.mxu0 0.0
    %286 = vmatprep.subr.mxu0 0.0
    %287 = vmatpush1.msra.mxu0 0.0
    %288 = vmatprep.subr.mxu0 0.0
    %289 = vmatpush1.msra.mxu0 0.0
    %290 = vmatprep.subr.mxu0 0.0
    %291 = vmatpush1.msra.mxu0 0.0
    %292 = vmatprep.subr.mxu0 0.0
    %293 = vmatpush1.msra.mxu0 0.0
    %294 = vmatprep.subr.mxu0 0.0
    %295 = vmatpush1.msra.mxu0 0.0
    %296 = vmatprep.subr.mxu0 0.0
    %297 = vmatpush1.msra.mxu0 0.0
    %298 = vmatprep.subr.mxu0 0.0
    %299 = vmatpush1.msra.mxu0 0.0
    %300 = vmatprep.subr.mxu0 0.0
    %301 = vmatpush1.msra.mxu0 0.0
    %302 = vmatprep.subr.mxu0 0.0
    %303 = vmatpush1.msra.mxu0 0.0
    %304 = vmatprep.subr.mxu0 0.0
    %305 = vmatpush1.msra.mxu0 0.0
    %306 = vmatprep.subr.mxu0 0.0
    %307 = vmatpush1.msra.mxu0 0.0
    %308 = vmatprep.subr.mxu0 0.0
    %309 = vmatpush1.msra.mxu0 0.0
    %310 = vmatprep.subr.mxu0 0.0
    %311 = vmatpush1.msra.mxu0 0.0
    %312 = vmatprep.subr.mxu0 0.0
    %313 = vmatpush1.msra.mxu0 0.0
    %314 = vmatprep.subr.mxu0 0.0
    %315 = vmatpush1.msra.mxu0 0.0
    %316 = vmatprep.subr.mxu0 0.0
    %317 = vmatpush1.msra.mxu0 0.0
    %318 = vmatprep.subr.mxu0 0.0
    %319 = vmatpush1.msra.mxu0 0.0
    %320 = vmatprep.subr.mxu0 0.0
    %321 = vmatpush1.msra.mxu0 0.0
    %322 = vmatprep.subr.mxu0 0.0
    %323 = vmatpush1.msra.mxu0 0.0
    %324 = vmatprep.subr.mxu0 0.0
    %325 = vmatpush1.msra.mxu0 0.0
    %326 = vmatprep.subr.mxu0 0.0
    %327 = vmatpush1.msra.mxu0 0.0
    %328 = vmatprep.subr.mxu0 0.0
    %329 = vmatpush1.msra.mxu0 0.0
    %330 = vmatprep.subr.mxu0 0.0
    %331 = vmatpush1.msra.mxu0 0.0
    %332 = vmatprep.subr.mxu0 0.0
    %333 = vmatpush1.msra.mxu0 0.0
    %334 = vmatprep.subr.mxu0 0.0
    %335 = vmatpush1.msra.mxu0 0.0
    %336 = vmatprep.subr.mxu0 0.0
    %337 = vmatpush1.msra.mxu0 0.0
    %338 = vmatprep.mubr.f32.mxu0 0.0
    %339 = vmatmul.mubr.f32.gmra.mrb[0].mxu0 %v272
    %v340 = vpop.f32.mrb[0].mxu0
    %v341 = vadd.f32 0.0, %v340
    %v342 = vpop.f32.mrb[0].mxu0
    %343 = vdwg.mxu0
    %v344 = vadd.f32 %v268, %v341
    %v345 = vxor.u32 %v344, 2147483648
    %v346 = vmul.f32 %v345, 1.442695
    %v347 = vpow.pop %v346
    %v348 = vadd.f32 %v347, 1.0
    %v349 = vrcp.pop %v348
    %v350 = vmul.f32 1.0, %v349
    %v351 = vtanh.pop %v344
    %353 = vrot.lane.b32.xlu0 %v257, 32
    %v354 = vpop.permute.xlu0 %353
    %v356 = vmul.f32 %v350, %v354
    %358 = vrot.lane.b32.xlu0 %v351, 64
    %v359 = vpop.permute.xlu0 %358
    %v361 = vmul.f32 %v350, %v359
    %363 = vrot.lane.b32.xlu0 %v361, 32
    %v364 = vpop.permute.xlu0 %363
    %v366 = vadd.f32 %v356, %v364
    %v367 = vtanh.pop %v366
    %369 = vrot.lane.b32.xlu0 %v367, 64
    %v370 = vpop.permute.xlu0 %369
    %v372 = vmul.f32 %v350, %v370
    %v373 = vld [vmem:[#allocation2 + $0x4] sm:$0x3]
    %v374 = vld [vmem:[#allocation2 + $0xa] sm:$0x3]
    %v375 = vsub.f32 %v373, %v374
    %v376 = vmul.f32 %v242, %v375
    %v377 = vadd.f32 %v374, %v376
    %379 = vrot.lane.b32.xlu0 %v372, 32
    %v380 = vpop.permute.xlu0 %379
    %v381 = vsel %vm151, %v380, 0
    %383 = vmatprep.subr.mxu0 0.0
    %384 = vmatpush1.msra.mxu0 %v138
    %385 = vmatprep.subr.mxu0 0.0
    %386 = vmatpush1.msra.mxu0 %v139
    %387 = vmatprep.subr.mxu0 0.0
    %388 = vmatpush1.msra.mxu0 %v140
    %389 = vmatprep.subr.mxu0 0.0
    %390 = vmatpush1.msra.mxu0 %v141
    %391 = vmatprep.subr.mxu0 0.0
    %392 = vmatpush1.msra.mxu0 0.0
    %393 = vmatprep.subr.mxu0 0.0
    %394 = vmatpush1.msra.mxu0 0.0
    %395 = vmatprep.subr.mxu0 0.0
    %396 = vmatpush1.msra.mxu0 0.0
    %397 = vmatprep.subr.mxu0 0.0
    %398 = vmatpush1.msra.mxu0 0.0
    %399 = vmatprep.subr.mxu0 0.0
    %400 = vmatpush1.msra.mxu0 0.0
    %401 = vmatprep.subr.mxu0 0.0
    %402 = vmatpush1.msra.mxu0 0.0
    %403 = vmatprep.subr.mxu0 0.0
    %404 = vmatpush1.msra.mxu0 0.0
    %405 = vmatprep.subr.mxu0 0.0
    %406 = vmatpush1.msra.mxu0 0.0
    %407 = vmatprep.subr.mxu0 0.0
    %408 = vmatpush1.msra.mxu0 0.0
    %409 = vmatprep.subr.mxu0 0.0
    %410 = vmatpush1.msra.mxu0 0.0
    %411 = vmatprep.subr.mxu0 0.0
    %412 = vmatpush1.msra.mxu0 0.0
    %413 = vmatprep.subr.mxu0 0.0
    %414 = vmatpush1.msra.mxu0 0.0
    %415 = vmatprep.subr.mxu0 0.0
    %416 = vmatpush1.msra.mxu0 0.0
    %417 = vmatprep.subr.mxu0 0.0
    %418 = vmatpush1.msra.mxu0 0.0
    %419 = vmatprep.subr.mxu0 0.0
    %420 = vmatpush1.msra.mxu0 0.0
    %421 = vmatprep.subr.mxu0 0.0
    %422 = vmatpush1.msra.mxu0 0.0
    %423 = vmatprep.subr.mxu0 0.0
    %424 = vmatpush1.msra.mxu0 0.0
    %425 = vmatprep.subr.mxu0 0.0
    %426 = vmatpush1.msra.mxu0 0.0
    %427 = vmatprep.subr.mxu0 0.0
    %428 = vmatpush1.msra.mxu0 0.0
    %429 = vmatprep.subr.mxu0 0.0
    %430 = vmatpush1.msra.mxu0 0.0
    %431 = vmatprep.subr.mxu0 0.0
    %432 = vmatpush1.msra.mxu0 0.0
    %433 = vmatprep.subr.mxu0 0.0
    %434 = vmatpush1.msra.mxu0 0.0
    %435 = vmatprep.subr.mxu0 0.0
    %436 = vmatpush1.msra.mxu0 0.0
    %437 = vmatprep.subr.mxu0 0.0
    %438 = vmatpush1.msra.mxu0 0.0
    %439 = vmatprep.subr.mxu0 0.0
    %440 = vmatpush1.msra.mxu0 0.0
    %441 = vmatprep.subr.mxu0 0.0
    %442 = vmatpush1.msra.mxu0 0.0
    %443 = vmatprep.subr.mxu0 0.0
    %444 = vmatpush1.msra.mxu0 0.0
    %445 = vmatprep.subr.mxu0 0.0
    %446 = vmatpush1.msra.mxu0 0.0
    %447 = vmatprep.mubr.f32.mxu0 0.0
    %448 = vmatmul.mubr.f32.gmra.mrb[0].mxu0 %v381
    %v449 = vpop.f32.mrb[0].mxu0
    %v450 = vadd.f32 0.0, %v449
    %v451 = vpop.f32.mrb[0].mxu0
    %452 = vdwg.mxu0
    %v453 = vadd.f32 %v377, %v450
    %v454 = vxor.u32 %v453, 2147483648
    %v455 = vmul.f32 %v454, 1.442695
    %v456 = vpow.pop %v455
    %v457 = vadd.f32 %v456, 1.0
    %v458 = vrcp.pop %v457
    %v459 = vmul.f32 1.0, %v458
    %v460 = vtanh.pop %v453
    %v461 = vmul.f32 %v459, %v366
    %463 = vrot.lane.b32.xlu0 %v460, 64
    %v464 = vpop.permute.xlu0 %463
    %v466 = vmul.f32 %v459, %v464
    %468 = vrot.lane.b32.xlu0 %v466, 32
    %v469 = vpop.permute.xlu0 %468
    %v471 = vadd.f32 %v461, %v469
    %v472 = vtanh.pop %v471
    %474 = vrot.lane.b32.xlu0 %v472, 64
    %v475 = vpop.permute.xlu0 %474
    %v477 = vmul.f32 %v459, %v475
    %v478 = vld [vmem:[#allocation2 + $0x6] sm:$0x3]
    %v479 = vld [vmem:[#allocation2 + $0x8] sm:$0x3]
    %v480 = vsub.f32 %v478, %v479
    %v481 = vmul.f32 %v242, %v480
    %v482 = vadd.f32 %v479, %v481
    %484 = vrot.lane.b32.xlu0 %v477, 32
    %v485 = vpop.permute.xlu0 %484
    %v486 = vsel %vm151, %v485, 0
    %488 = vmatprep.subr.mxu0 0.0
    %489 = vmatpush1.msra.mxu0 %v138
    %490 = vmatprep.subr.mxu0 0.0
    %491 = vmatpush1.msra.mxu0 %v139
    %492 = vmatprep.subr.mxu0 0.0
    %493 = vmatpush1.msra.mxu0 %v140
    %494 = vmatprep.subr.mxu0 0.0
    %495 = vmatpush1.msra.mxu0 %v141
    %496 = vmatprep.subr.mxu0 0.0
    %497 = vmatpush1.msra.mxu0 0.0
    %498 = vmatprep.subr.mxu0 0.0
    %499 = vmatpush1.msra.mxu0 0.0
    %500 = vmatprep.subr.mxu0 0.0
    %501 = vmatpush1.msra.mxu0 0.0
    %502 = vmatprep.subr.mxu0 0.0
    %503 = vmatpush1.msra.mxu0 0.0
    %504 = vmatprep.subr.mxu0 0.0
    %505 = vmatpush1.msra.mxu0 0.0
    %506 = vmatprep.subr.mxu0 0.0
    %507 = vmatpush1.msra.mxu0 0.0
    %508 = vmatprep.subr.mxu0 0.0
    %509 = vmatpush1.msra.mxu0 0.0
    %510 = vmatprep.subr.mxu0 0.0
    %511 = vmatpush1.msra.mxu0 0.0
    %512 = vmatprep.subr.mxu0 0.0
    %513 = vmatpush1.msra.mxu0 0.0
    %514 = vmatprep.subr.mxu0 0.0
    %515 = vmatpush1.msra.mxu0 0.0
    %516 = vmatprep.subr.mxu0 0.0
    %517 = vmatpush1.msra.mxu0 0.0
    %518 = vmatprep.subr.mxu0 0.0
    %519 = vmatpush1.msra.mxu0 0.0
    %520 = vmatprep.subr.mxu0 0.0
    %521 = vmatpush1.msra.mxu0 0.0
    %522 = vmatprep.subr.mxu0 0.0
    %523 = vmatpush1.msra.mxu0 0.0
    %524 = vmatprep.subr.mxu0 0.0
    %525 = vmatpush1.msra.mxu0 0.0
    %526 = vmatprep.subr.mxu0 0.0
    %527 = vmatpush1.msra.mxu0 0.0
    %528 = vmatprep.subr.mxu0 0.0
    %529 = vmatpush1.msra.mxu0 0.0
    %530 = vmatprep.subr.mxu0 0.0
    %531 = vmatpush1.msra.mxu0 0.0
    %532 = vmatprep.subr.mxu0 0.0
    %533 = vmatpush1.msra.mxu0 0.0
    %534 = vmatprep.subr.mxu0 0.0
    %535 = vmatpush1.msra.mxu0 0.0
    %536 = vmatprep.subr.mxu0 0.0
    %537 = vmatpush1.msra.mxu0 0.0
    %538 = vmatprep.subr.mxu0 0.0
    %539 = vmatpush1.msra.mxu0 0.0
    %540 = vmatprep.subr.mxu0 0.0
    %541 = vmatpush1.msra.mxu0 0.0
    %542 = vmatprep.subr.mxu0 0.0
    %543 = vmatpush1.msra.mxu0 0.0
    %544 = vmatprep.subr.mxu0 0.0
    %545 = vmatpush1.msra.mxu0 0.0
    %546 = vmatprep.subr.mxu0 0.0
    %547 = vmatpush1.msra.mxu0 0.0
    %548 = vmatprep.subr.mxu0 0.0
    %549 = vmatpush1.msra.mxu0 0.0
    %550 = vmatprep.subr.mxu0 0.0
    %551 = vmatpush1.msra.mxu0 0.0
    %552 = vmatprep.mubr.f32.mxu0 0.0
    %553 = vmatmul.mubr.f32.gmra.mrb[0].mxu0 %v486
    %v554 = vpop.f32.mrb[0].mxu0
    %v555 = vadd.f32 0.0, %v554
    %v556 = vpop.f32.mrb[0].mxu0
    %557 = vdwg.mxu0
    %v558 = vadd.f32 %v482, %v555
    %v559 = vxor.u32 %v558, 2147483648
    %v560 = vmul.f32 %v559, 1.442695
    %v561 = vpow.pop %v560
    %v562 = vadd.f32 %v561, 1.0
    %v563 = vrcp.pop %v562
    %v564 = vmul.f32 1.0, %v563
    %v565 = vtanh.pop %v558
    %v566 = vmul.f32 %v564, %v471
    %568 = vrot.lane.b32.xlu0 %v565, 64
    %v569 = vpop.permute.xlu0 %568
    %v571 = vmul.f32 %v564, %v569
    %573 = vrot.lane.b32.xlu0 %v571, 32
    %v574 = vpop.permute.xlu0 %573
    %v576 = vadd.f32 %v566, %v574
    %v577 = vtanh.pop %v576
    %579 = vrot.lane.b32.xlu0 %v577, 64
    %v580 = vpop.permute.xlu0 %579
    %v582 = vmul.f32 %v564, %v580
    %v583 = vsub.f32 %v479, %v478
    %v584 = vmul.f32 %v242, %v583
    %v585 = vadd.f32 %v478, %v584
    %587 = vrot.lane.b32.xlu0 %v582, 32
    %v588 = vpop.permute.xlu0 %587
    %v589 = vsel %vm151, %v588, 0
    %591 = vmatprep.subr.mxu0 0.0
    %592 = vmatpush1.msra.mxu0 %v138
    %593 = vmatprep.subr.mxu0 0.0
    %594 = vmatpush1.msra.mxu0 %v139
    %595 = vmatprep.subr.mxu0 0.0
    %596 = vmatpush1.msra.mxu0 %v140
    %597 = vmatprep.subr.mxu0 0.0
    %598 = vmatpush1.msra.mxu0 %v141
    %599 = vmatprep.subr.mxu0 0.0
    %600 = vmatpush1.msra.mxu0 0.0
    %601 = vmatprep.subr.mxu0 0.0
    %602 = vmatpush1.msra.mxu0 0.0
    %603 = vmatprep.subr.mxu0 0.0
    %604 = vmatpush1.msra.mxu0 0.0
    %605 = vmatprep.subr.mxu0 0.0
    %606 = vmatpush1.msra.mxu0 0.0
    %607 = vmatprep.subr.mxu0 0.0
    %608 = vmatpush1.msra.mxu0 0.0
    %609 = vmatprep.subr.mxu0 0.0
    %610 = vmatpush1.msra.mxu0 0.0
    %611 = vmatprep.subr.mxu0 0.0
    %612 = vmatpush1.msra.mxu0 0.0
    %613 = vmatprep.subr.mxu0 0.0
    %614 = vmatpush1.msra.mxu0 0.0
    %615 = vmatprep.subr.mxu0 0.0
    %616 = vmatpush1.msra.mxu0 0.0
    %617 = vmatprep.subr.mxu0 0.0
    %618 = vmatpush1.msra.mxu0 0.0
    %619 = vmatprep.subr.mxu0 0.0
    %620 = vmatpush1.msra.mxu0 0.0
    %621 = vmatprep.subr.mxu0 0.0
    %622 = vmatpush1.msra.mxu0 0.0
    %623 = vmatprep.subr.mxu0 0.0
    %624 = vmatpush1.msra.mxu0 0.0
    %625 = vmatprep.subr.mxu0 0.0
    %626 = vmatpush1.msra.mxu0 0.0
    %627 = vmatprep.subr.mxu0 0.0
    %628 = vmatpush1.msra.mxu0 0.0
    %629 = vmatprep.subr.mxu0 0.0
    %630 = vmatpush1.msra.mxu0 0.0
    %631 = vmatprep.subr.mxu0 0.0
    %632 = vmatpush1.msra.mxu0 0.0
    %633 = vmatprep.subr.mxu0 0.0
    %634 = vmatpush1.msra.mxu0 0.0
    %635 = vmatprep.subr.mxu0 0.0
    %636 = vmatpush1.msra.mxu0 0.0
    %637 = vmatprep.subr.mxu0 0.0
    %638 = vmatpush1.msra.mxu0 0.0
    %639 = vmatprep.subr.mxu0 0.0
    %640 = vmatpush1.msra.mxu0 0.0
    %641 = vmatprep.subr.mxu0 0.0
    %642 = vmatpush1.msra.mxu0 0.0
    %643 = vmatprep.subr.mxu0 0.0
    %644 = vmatpush1.msra.mxu0 0.0
    %645 = vmatprep.subr.mxu0 0.0
    %646 = vmatpush1.msra.mxu0 0.0
    %647 = vmatprep.subr.mxu0 0.0
    %648 = vmatpush1.msra.mxu0 0.0
    %649 = vmatprep.subr.mxu0 0.0
    %650 = vmatpush1.msra.mxu0 0.0
    %651 = vmatprep.subr.mxu0 0.0
    %652 = vmatpush1.msra.mxu0 0.0
    %653 = vmatprep.subr.mxu0 0.0
    %654 = vmatpush1.msra.mxu0 0.0
    %655 = vmatprep.mubr.f32.mxu0 0.0
    %656 = vmatmul.mubr.f32.gmra.mrb[0].mxu0 %v589
    %v657 = vpop.f32.mrb[0].mxu0
    %v658 = vadd.f32 0.0, %v657
    %v659 = vpop.f32.mrb[0].mxu0
    %660 = vdwg.mxu0
    %v661 = vadd.f32 %v585, %v658
    %v662 = vxor.u32 %v661, 2147483648
    %v663 = vmul.f32 %v662, 1.442695
    %v664 = vpow.pop %v663
    %v665 = vadd.f32 %v664, 1.0
    %v666 = vrcp.pop %v665
    %v667 = vmul.f32 1.0, %v666
    %v668 = vtanh.pop %v661
    %v669 = vmul.f32 %v667, %v576
    %671 = vrot.lane.b32.xlu0 %v668, 64
    %v672 = vpop.permute.xlu0 %671
    %v674 = vmul.f32 %v667, %v672
    %676 = vrot.lane.b32.xlu0 %v674, 32
    %v677 = vpop.permute.xlu0 %676
    %v679 = vadd.f32 %v669, %v677
    %v680 = vtanh.pop %v679
    %682 = vrot.lane.b32.xlu0 %v680, 64
    %v683 = vpop.permute.xlu0 %682
    %v685 = vmul.f32 %v667, %v683
    %v686 = vsub.f32 %v374, %v373
    %v687 = vmul.f32 %v242, %v686
    %v688 = vadd.f32 %v373, %v687
    %690 = vrot.lane.b32.xlu0 %v685, 32
    %v691 = vpop.permute.xlu0 %690
    %v692 = vsel %vm151, %v691, 0
    %694 = vmatprep.subr.mxu0 0.0
    %695 = vmatpush1.msra.mxu0 %v138
    %696 = vmatprep.subr.mxu0 0.0
    %697 = vmatpush1.msra.mxu0 %v139
    %698 = vmatprep.subr.mxu0 0.0
    %699 = vmatpush1.msra.mxu0 %v140
    %700 = vmatprep.subr.mxu0 0.0
    %701 = vmatpush1.msra.mxu0 %v141
    %702 = vmatprep.subr.mxu0 0.0
    %703 = vmatpush1.msra.mxu0 0.0
    %704 = vmatprep.subr.mxu0 0.0
    %705 = vmatpush1.msra.mxu0 0.0
    %706 = vmatprep.subr.mxu0 0.0
    %707 = vmatpush1.msra.mxu0 0.0
    %708 = vmatprep.subr.mxu0 0.0
    %709 = vmatpush1.msra.mxu0 0.0
    %710 = vmatprep.subr.mxu0 0.0
    %711 = vmatpush1.msra.mxu0 0.0
    %712 = vmatprep.subr.mxu0 0.0
    %713 = vmatpush1.msra.mxu0 0.0
    %714 = vmatprep.subr.mxu0 0.0
    %715 = vmatpush1.msra.mxu0 0.0
    %716 = vmatprep.subr.mxu0 0.0
    %717 = vmatpush1.msra.mxu0 0.0
    %718 = vmatprep.subr.mxu0 0.0
    %719 = vmatpush1.msra.mxu0 0.0
    %720 = vmatprep.subr.mxu0 0.0
    %721 = vmatpush1.msra.mxu0 0.0
    %722 = vmatprep.subr.mxu0 0.0
    %723 = vmatpush1.msra.mxu0 0.0
    %724 = vmatprep.subr.mxu0 0.0
    %725 = vmatpush1.msra.mxu0 0.0
    %726 = vmatprep.subr.mxu0 0.0
    %727 = vmatpush1.msra.mxu0 0.0
    %728 = vmatprep.subr.mxu0 0.0
    %729 = vmatpush1.msra.mxu0 0.0
    %730 = vmatprep.subr.mxu0 0.0
    %731 = vmatpush1.msra.mxu0 0.0
    %732 = vmatprep.subr.mxu0 0.0
    %733 = vmatpush1.msra.mxu0 0.0
    %734 = vmatprep.subr.mxu0 0.0
    %735 = vmatpush1.msra.mxu0 0.0
    %736 = vmatprep.subr.mxu0 0.0
    %737 = vmatpush1.msra.mxu0 0.0
    %738 = vmatprep.subr.mxu0 0.0
    %739 = vmatpush1.msra.mxu0 0.0
    %740 = vmatprep.subr.mxu0 0.0
    %741 = vmatpush1.msra.mxu0 0.0
    %742 = vmatprep.subr.mxu0 0.0
    %743 = vmatpush1.msra.mxu0 0.0
    %744 = vmatprep.subr.mxu0 0.0
    %745 = vmatpush1.msra.mxu0 0.0
    %746 = vmatprep.subr.mxu0 0.0
    %747 = vmatpush1.msra.mxu0 0.0
    %748 = vmatprep.subr.mxu0 0.0
    %749 = vmatpush1.msra.mxu0 0.0
    %750 = vmatprep.subr.mxu0 0.0
    %751 = vmatpush1.msra.mxu0 0.0
    %752 = vmatprep.subr.mxu0 0.0
    %753 = vmatpush1.msra.mxu0 0.0
    %754 = vmatprep.subr.mxu0 0.0
    %755 = vmatpush1.msra.mxu0 0.0
    %756 = vmatprep.subr.mxu0 0.0
    %757 = vmatpush1.msra.mxu0 0.0
    %758 = vmatprep.mubr.f32.mxu0 0.0
    %759 = vmatmul.mubr.f32.gmra.mrb[0].mxu0 %v692
    %v760 = vpop.f32.mrb[0].mxu0
    %v761 = vadd.f32 0.0, %v760
    %v762 = vpop.f32.mrb[0].mxu0
    %763 = vdwg.mxu0
    %v764 = vadd.f32 %v688, %v761
    %v765 = vxor.u32 %v764, 2147483648
    %v766 = vmul.f32 %v765, 1.442695
    %v767 = vpow.pop %v766
    %v768 = vadd.f32 %v767, 1.0
    %v769 = vrcp.pop %v768
    %v770 = vmul.f32 1.0, %v769
    %v771 = vtanh.pop %v764
    %v772 = vmul.f32 %v770, %v679
    %774 = vrot.lane.b32.xlu0 %v771, 64
    %v775 = vpop.permute.xlu0 %774
    %v777 = vmul.f32 %v770, %v775
    %779 = vrot.lane.b32.xlu0 %v777, 32
    %v780 = vpop.permute.xlu0 %779
    %v782 = vadd.f32 %v772, %v780
    %v783 = vtanh.pop %v782
    %785 = vrot.lane.b32.xlu0 %v783, 64
    %v786 = vpop.permute.xlu0 %785
    %v788 = vmul.f32 %v770, %v786
    %v789 = vsub.f32 %v265, %v264
    %v790 = vmul.f32 %v242, %v789
    %v791 = vadd.f32 %v264, %v790
    %793 = vrot.lane.b32.xlu0 %v788, 32
    %v794 = vpop.permute.xlu0 %793
    %v795 = vsel %vm151, %v794, 0
    %797 = vmatprep.subr.mxu0 0.0
    %798 = vmatpush1.msra.mxu0 %v138
    %799 = vmatprep.subr.mxu0 0.0
    %800 = vmatpush1.msra.mxu0 %v139
    %801 = vmatprep.subr.mxu0 0.0
    %802 = vmatpush1.msra.mxu0 %v140
    %803 = vmatprep.subr.mxu0 0.0
    %804 = vmatpush1.msra.mxu0 %v141
    %805 = vmatprep.subr.mxu0 0.0
    %806 = vmatpush1.msra.mxu0 0.0
    %807 = vmatprep.subr.mxu0 0.0
    %808 = vmatpush1.msra.mxu0 0.0
    %809 = vmatprep.subr.mxu0 0.0
    %810 = vmatpush1.msra.mxu0 0.0
    %811 = vmatprep.subr.mxu0 0.0
    %812 = vmatpush1.msra.mxu0 0.0
    %813 = vmatprep.subr.mxu0 0.0
    %814 = vmatpush1.msra.mxu0 0.0
    %815 = vmatprep.subr.mxu0 0.0
    %816 = vmatpush1.msra.mxu0 0.0
    %817 = vmatprep.subr.mxu0 0.0
    %818 = vmatpush1.msra.mxu0 0.0
    %819 = vmatprep.subr.mxu0 0.0
    %820 = vmatpush1.msra.mxu0 0.0
    %821 = vmatprep.subr.mxu0 0.0
    %822 = vmatpush1.msra.mxu0 0.0
    %823 = vmatprep.subr.mxu0 0.0
    %824 = vmatpush1.msra.mxu0 0.0
    %825 = vmatprep.subr.mxu0 0.0
    %826 = vmatpush1.msra.mxu0 0.0
    %827 = vmatprep.subr.mxu0 0.0
    %828 = vmatpush1.msra.mxu0 0.0
    %829 = vmatprep.subr.mxu0 0.0
    %830 = vmatpush1.msra.mxu0 0.0
    %831 = vmatprep.subr.mxu0 0.0
    %832 = vmatpush1.msra.mxu0 0.0
    %833 = vmatprep.subr.mxu0 0.0
    %834 = vmatpush1.msra.mxu0 0.0
    %835 = vmatprep.subr.mxu0 0.0
    %836 = vmatpush1.msra.mxu0 0.0
    %837 = vmatprep.subr.mxu0 0.0
    %838 = vmatpush1.msra.mxu0 0.0
    %839 = vmatprep.subr.mxu0 0.0
    %840 = vmatpush1.msra.mxu0 0.0
    %841 = vmatprep.subr.mxu0 0.0
    %842 = vmatpush1.msra.mxu0 0.0
    %843 = vmatprep.subr.mxu0 0.0
    %844 = vmatpush1.msra.mxu0 0.0
    %845 = vmatprep.subr.mxu0 0.0
    %846 = vmatpush1.msra.mxu0 0.0
    %847 = vmatprep.subr.mxu0 0.0
    %848 = vmatpush1.msra.mxu0 0.0
    %849 = vmatprep.subr.mxu0 0.0
    %850 = vmatpush1.msra.mxu0 0.0
    %851 = vmatprep.subr.mxu0 0.0
    %852 = vmatpush1.msra.mxu0 0.0
    %853 = vmatprep.subr.mxu0 0.0
    %854 = vmatpush1.msra.mxu0 0.0
    %855 = vmatprep.subr.mxu0 0.0
    %856 = vmatpush1.msra.mxu0 0.0
    %857 = vmatprep.subr.mxu0 0.0
    %858 = vmatpush1.msra.mxu0 0.0
    %859 = vmatprep.subr.mxu0 0.0
    %860 = vmatpush1.msra.mxu0 0.0
    %861 = vmatprep.mubr.f32.mxu0 0.0
    %862 = vmatmul.mubr.f32.gmra.mrb[0].mxu0 %v795
    %v863 = vpop.f32.mrb[0].mxu0
    %v864 = vadd.f32 0.0, %v863
    %v865 = vpop.f32.mrb[0].mxu0
    %866 = vdwg.mxu0
    %v867 = vadd.f32 %v791, %v864
    %v868 = vxor.u32 %v867, 2147483648
    %v869 = vmul.f32 %v868, 1.442695
    %v870 = vpow.pop %v869
    %v871 = vadd.f32 %v870, 1.0
    %v872 = vrcp.pop %v871
    %v873 = vmul.f32 1.0, %v872
    %v874 = vtanh.pop %v867
    %v875 = vmul.f32 %v873, %v782
    %877 = vrot.lane.b32.xlu0 %v874, 64
    %v878 = vpop.permute.xlu0 %877
    %v880 = vmul.f32 %v873, %v878
    %882 = vrot.lane.b32.xlu0 %v880, 32
    %v883 = vpop.permute.xlu0 %882
    %v885 = vadd.f32 %v875, %v883
    %v886 = vtanh.pop %v885
    %888 = vrot.lane.b32.xlu0 %v886, 64
    %v889 = vpop.permute.xlu0 %888
    %v891 = vmul.f32 %v873, %v889
    %v892 = vsub.f32 %v236, %v235
    %v893 = vmul.f32 %v242, %v892
    %v894 = vadd.f32 %v235, %v893
    %896 = vrot.lane.b32.xlu0 %v891, 32
    %v897 = vpop.permute.xlu0 %896
    %v898 = vsel %vm151, %v897, 0
    %900 = vmatprep.subr.mxu0 0.0
    %901 = vmatpush1.msra.mxu0 %v138
    %902 = vmatprep.subr.mxu0 0.0
    %903 = vmatpush1.msra.mxu0 %v139
    %904 = vmatprep.subr.mxu0 0.0
    %905 = vmatpush1.msra.mxu0 %v140
    %906 = vmatprep.subr.mxu0 0.0
    %907 = vmatpush1.msra.mxu0 %v141
    %908 = vmatprep.subr.mxu0 0.0
    %909 = vmatpush1.msra.mxu0 0.0
    %910 = vmatprep.subr.mxu0 0.0
    %911 = vmatpush1.msra.mxu0 0.0
    %912 = vmatprep.subr.mxu0 0.0
    %913 = vmatpush1.msra.mxu0 0.0
    %914 = vmatprep.subr.mxu0 0.0
    %915 = vmatpush1.msra.mxu0 0.0
    %916 = vmatprep.subr.mxu0 0.0
    %917 = vmatpush1.msra.mxu0 0.0
    %918 = vmatprep.subr.mxu0 0.0
    %919 = vmatpush1.msra.mxu0 0.0
    %920 = vmatprep.subr.mxu0 0.0
    %921 = vmatpush1.msra.mxu0 0.0
    %922 = vmatprep.subr.mxu0 0.0
    %923 = vmatpush1.msra.mxu0 0.0
    %924 = vmatprep.subr.mxu0 0.0
    %925 = vmatpush1.msra.mxu0 0.0
    %926 = vmatprep.subr.mxu0 0.0
    %927 = vmatpush1.msra.mxu0 0.0
    %928 = vmatprep.subr.mxu0 0.0
    %929 = vmatpush1.msra.mxu0 0.0
    %930 = vmatprep.subr.mxu0 0.0
    %931 = vmatpush1.msra.mxu0 0.0
    %932 = vmatprep.subr.mxu0 0.0
    %933 = vmatpush1.msra.mxu0 0.0
    %934 = vmatprep.subr.mxu0 0.0
    %935 = vmatpush1.msra.mxu0 0.0
    %936 = vmatprep.subr.mxu0 0.0
    %937 = vmatpush1.msra.mxu0 0.0
    %938 = vmatprep.subr.mxu0 0.0
    %939 = vmatpush1.msra.mxu0 0.0
    %940 = vmatprep.subr.mxu0 0.0
    %941 = vmatpush1.msra.mxu0 0.0
    %942 = vmatprep.subr.mxu0 0.0
    %943 = vmatpush1.msra.mxu0 0.0
    %944 = vmatprep.subr.mxu0 0.0
    %945 = vmatpush1.msra.mxu0 0.0
    %946 = vmatprep.subr.mxu0 0.0
    %947 = vmatpush1.msra.mxu0 0.0
    %948 = vmatprep.subr.mxu0 0.0
    %949 = vmatpush1.msra.mxu0 0.0
    %950 = vmatprep.subr.mxu0 0.0
    %951 = vmatpush1.msra.mxu0 0.0
    %952 = vmatprep.subr.mxu0 0.0
    %953 = vmatpush1.msra.mxu0 0.0
    %954 = vmatprep.subr.mxu0 0.0
    %955 = vmatpush1.msra.mxu0 0.0
    %956 = vmatprep.subr.mxu0 0.0
    %957 = vmatpush1.msra.mxu0 0.0
    %958 = vmatprep.subr.mxu0 0.0
    %959 = vmatpush1.msra.mxu0 0.0
    %960 = vmatprep.subr.mxu0 0.0
    %961 = vmatpush1.msra.mxu0 0.0
    %962 = vmatprep.subr.mxu0 0.0
    %963 = vmatpush1.msra.mxu0 0.0
    %964 = vmatprep.mubr.f32.mxu0 0.0
    %965 = vmatmul.mubr.f32.gmra.mrb[0].mxu0 %v898
    %v966 = vpop.f32.mrb[0].mxu0
    %v967 = vadd.f32 0.0, %v966
    %v968 = vpop.f32.mrb[0].mxu0
    %969 = vdwg.mxu0
    %v970 = vadd.f32 %v894, %v967
    %v971 = vxor.u32 %v970, 2147483648
    %v972 = vmul.f32 %v971, 1.442695
    %v973 = vpow.pop %v972
    %v974 = vadd.f32 %v973, 1.0
    %v975 = vrcp.pop %v974
    %v976 = vmul.f32 1.0, %v975
    %v977 = vtanh.pop %v970
    %v978 = vmul.f32 %v976, %v885
    %980 = vrot.lane.b32.xlu0 %v977, 64
    %v981 = vpop.permute.xlu0 %980
    %v983 = vmul.f32 %v976, %v981
    %985 = vrot.lane.b32.xlu0 %v983, 32
    %v986 = vpop.permute.xlu0 %985
    %v988 = vadd.f32 %v978, %v986
    %v989 = vtanh.pop %v988
    %991 = vrot.lane.b32.xlu0 %v989, 64
    %v992 = vpop.permute.xlu0 %991
    %v994 = vmul.f32 %v976, %v992
    %v995 = vsub.f32 %v263, %v994
    %v997 = vlaneseq
    %v998 = vshrl.u32 %v997, 7
    %v999 = vsub.s32 0, %v998
    %v1000 = vrot.slane %v133, %v999
    %1003 = vrot.lane.b32.xlu0 %v995, 32
    %v1004 = vpop.permute.xlu0 %1003
    %v1006 = vmul.f32 %v1000, %v1004
    %1008 = vrot.lane.b32.xlu0 %v1006, 96
    %v1009 = vpop.permute.xlu0 %1008
    %v1011 = vadd.f32 %v994, %v1009
    %1013 = vrot.lane.b32.xlu0 %v1011, 32
    %v1014 = vpop.permute.xlu0 %1013
    %vm1016 = vcmask 254976
    %1017 = vst.msk [vmem:[#allocation3] sm:$0x3] %vm1016, %v1014
    %v1018 = vsub.f32 %v372, %v891
    %1020 = vrot.lane.b32.xlu0 %v1018, 32
    %v1021 = vpop.permute.xlu0 %1020
    %v1023 = vmul.f32 %v1000, %v1021
    %1025 = vrot.lane.b32.xlu0 %v1023, 96
    %v1026 = vpop.permute.xlu0 %1025
    %v1028 = vadd.f32 %v891, %v1026
    %1030 = vrot.lane.b32.xlu0 %v1028, 32
    %v1031 = vpop.permute.xlu0 %1030
    %1033 = vst.msk [vmem:[#allocation3 + $0x2] sm:$0x3] %vm1016, %v1031
    %v1034 = vsub.f32 %v477, %v788
    %1036 = vrot.lane.b32.xlu0 %v1034, 32
    %v1037 = vpop.permute.xlu0 %1036
    %v1039 = vmul.f32 %v1000, %v1037
    %1041 = vrot.lane.b32.xlu0 %v1039, 96
    %v1042 = vpop.permute.xlu0 %1041
    %v1044 = vadd.f32 %v788, %v1042
    %1046 = vrot.lane.b32.xlu0 %v1044, 32
    %v1047 = vpop.permute.xlu0 %1046
    %1049 = vst.msk [vmem:[#allocation3 + $0x4] sm:$0x3] %vm1016, %v1047
    %v1050 = vsub.f32 %v582, %v685
    %1052 = vrot.lane.b32.xlu0 %v1050, 32
    %v1053 = vpop.permute.xlu0 %1052
    %v1055 = vmul.f32 %v1000, %v1053
    %1057 = vrot.lane.b32.xlu0 %v1055, 96
    %v1058 = vpop.permute.xlu0 %1057
    %v1060 = vadd.f32 %v685, %v1058
    %1062 = vrot.lane.b32.xlu0 %v1060, 32
    %v1063 = vpop.permute.xlu0 %1062
    %1065 = vst.msk [vmem:[#allocation3 + $0x6] sm:$0x3] %vm1016, %v1063
    %v1066 = vsub.f32 %v685, %v582
    %1068 = vrot.lane.b32.xlu0 %v1066, 32
    %v1069 = vpop.permute.xlu0 %1068
    %v1071 = vmul.f32 %v1000, %v1069
    %1073 = vrot.lane.b32.xlu0 %v1071, 96
    %v1074 = vpop.permute.xlu0 %1073
    %v1076 = vadd.f32 %v582, %v1074
    %1078 = vrot.lane.b32.xlu0 %v1076, 32
    %v1079 = vpop.permute.xlu0 %1078
    %1081 = vst.msk [vmem:[#allocation3 + $0x8] sm:$0x3] %vm1016, %v1079
    %v1082 = vsub.f32 %v788, %v477
    %1084 = vrot.lane.b32.xlu0 %v1082, 32
    %v1085 = vpop.permute.xlu0 %1084
    %v1087 = vmul.f32 %v1000, %v1085
    %1089 = vrot.lane.b32.xlu0 %v1087, 96
    %v1090 = vpop.permute.xlu0 %1089
    %v1092 = vadd.f32 %v477, %v1090
    %1094 = vrot.lane.b32.xlu0 %v1092, 32
    %v1095 = vpop.permute.xlu0 %1094
    %1097 = vst.msk [vmem:[#allocation3 + $0xa] sm:$0x3] %vm1016, %v1095
    %v1098 = vsub.f32 %v891, %v372
    %1100 = vrot.lane.b32.xlu0 %v1098, 32
    %v1101 = vpop.permute.xlu0 %1100
    %v1103 = vmul.f32 %v1000, %v1101
    %1105 = vrot.lane.b32.xlu0 %v1103, 96
    %v1106 = vpop.permute.xlu0 %1105
    %v1108 = vadd.f32 %v372, %v1106
    %1110 = vrot.lane.b32.xlu0 %v1108, 32
    %v1111 = vpop.permute.xlu0 %1110
    %1113 = vst.msk [vmem:[#allocation3 + $0xc] sm:$0x3] %vm1016, %v1111
    %v1114 = vsub.f32 %v994, %v263
    %1116 = vrot.lane.b32.xlu0 %v1114, 32
    %v1117 = vpop.permute.xlu0 %1116
    %v1119 = vmul.f32 %v1000, %v1117
    %1121 = vrot.lane.b32.xlu0 %v1119, 96
    %v1122 = vpop.permute.xlu0 %1121
    %v1124 = vadd.f32 %v263, %v1122
    %1126 = vrot.lane.b32.xlu0 %v1124, 32
    %v1127 = vpop.permute.xlu0 %1126
    %1129 = vst.msk [vmem:[#allocation3 + $0xe] sm:$0x3] %vm1016, %v1127
    %v1130 = vld [vmem:[#allocation12] sm:$0xff]
    %v1131 = vld [vmem:[#allocation12 + $0x8] sm:$0xff]
    %v1132 = vld [vmem:[#allocation12 + $0x10] sm:$0xff]
    %v1133 = vld [vmem:[#allocation12 + $0x18] sm:$0xff]
    %v1134 = vld [vmem:[#allocation13] sm:$0xff]
    %v1135 = vld [vmem:[#allocation13 + $0x8] sm:$0xff]
    %v1136 = vld [vmem:[#allocation13 + $0x10] sm:$0xff]
    %v1137 = vld [vmem:[#allocation13 + $0x18] sm:$0xff]
    %v1138 = vld [vmem:[#allocation15] sm:$0x1]
    %v1139 = vld [vmem:[#allocation3] sm:$0xff]
    %v1140 = vld [vmem:[#allocation3 + $0x8] sm:$0xff]
    %v1142 = vlaneseq
    %v1143 = vshrl.u32 %v1142, 7
    %v1144 = vsub.s32 0, %v1143
    %v1145 = vrot.slane %v1138, %v1144
    %v1148 = vsel %vm151, %v1139, 0
    %v1151 = vsel %vm151, %v1140, 0
    %1153 = vmatprep.subr.mxu0 0.0
    %1154 = vmatpush1.msra.mxu0 %v1130
    %1155 = vmatprep.subr.mxu0 0.0
    %1156 = vmatpush1.msra.mxu0 %v1131
    %1157 = vmatprep.subr.mxu0 0.0
    %1158 = vmatpush1.msra.mxu0 %v1132
    %1159 = vmatprep.subr.mxu0 0.0
    %1160 = vmatpush1.msra.mxu0 %v1133
    %1161 = vmatprep.subr.mxu0 0.0
    %1162 = vmatpush1.msra.mxu0 0.0
    %1163 = vmatprep.subr.mxu0 0.0
    %1164 = vmatpush1.msra.mxu0 0.0
    %1165 = vmatprep.subr.mxu0 0.0
    %1166 = vmatpush1.msra.mxu0 0.0
    %1167 = vmatprep.subr.mxu0 0.0
    %1168 = vmatpush1.msra.mxu0 0.0
    %1169 = vmatprep.subr.mxu0 0.0
    %1170 = vmatpush1.msra.mxu0 0.0
    %1171 = vmatprep.subr.mxu0 0.0
    %1172 = vmatpush1.msra.mxu0 0.0
    %1173 = vmatprep.subr.mxu0 0.0
    %1174 = vmatpush1.msra.mxu0 0.0
    %1175 = vmatprep.subr.mxu0 0.0
    %1176 = vmatpush1.msra.mxu0 0.0
    %1177 = vmatprep.subr.mxu0 0.0
    %1178 = vmatpush1.msra.mxu0 0.0
    %1179 = vmatprep.subr.mxu0 0.0
    %1180 = vmatpush1.msra.mxu0 0.0
    %1181 = vmatprep.subr.mxu0 0.0
    %1182 = vmatpush1.msra.mxu0 0.0
    %1183 = vmatprep.subr.mxu0 0.0
    %1184 = vmatpush1.msra.mxu0 0.0
    %1185 = vmatprep.subr.mxu0 0.0
    %1186 = vmatpush1.msra.mxu0 0.0
    %1187 = vmatprep.subr.mxu0 0.0
    %1188 = vmatpush1.msra.mxu0 0.0
    %1189 = vmatprep.subr.mxu0 0.0
    %1190 = vmatpush1.msra.mxu0 0.0
    %1191 = vmatprep.subr.mxu0 0.0
    %1192 = vmatpush1.msra.mxu0 0.0
    %1193 = vmatprep.subr.mxu0 0.0
    %1194 = vmatpush1.msra.mxu0 0.0
    %1195 = vmatprep.subr.mxu0 0.0
    %1196 = vmatpush1.msra.mxu0 0.0
    %1197 = vmatprep.subr.mxu0 0.0
    %1198 = vmatpush1.msra.mxu0 0.0
    %1199 = vmatprep.subr.mxu0 0.0
    %1200 = vmatpush1.msra.mxu0 0.0
    %1201 = vmatprep.subr.mxu0 0.0
    %1202 = vmatpush1.msra.mxu0 0.0
    %1203 = vmatprep.subr.mxu0 0.0
    %1204 = vmatpush1.msra.mxu0 0.0
    %1205 = vmatprep.subr.mxu0 0.0
    %1206 = vmatpush1.msra.mxu0 0.0
    %1207 = vmatprep.subr.mxu0 0.0
    %1208 = vmatpush1.msra.mxu0 0.0
    %1209 = vmatprep.subr.mxu0 0.0
    %1210 = vmatpush1.msra.mxu0 0.0
    %1211 = vmatprep.subr.mxu0 0.0
    %1212 = vmatpush1.msra.mxu0 0.0
    %1213 = vmatprep.subr.mxu0 0.0
    %1214 = vmatpush1.msra.mxu0 0.0
    %1215 = vmatprep.subr.mxu0 0.0
    %1216 = vmatpush1.msra.mxu0 0.0
    %1217 = vmatprep.mubr.f32.mxu0 0.0
    %1218 = vmatmul.mubr.f32.gmra.mrb[0].mxu0 %v1148
    %v1219 = vpop.f32.mrb[0].mxu0
    %v1220 = vadd.f32 %v1145, %v1219
    %v1221 = vpop.f32.mrb[0].mxu0
    %1222 = vmatprep.mubr.f32.mxu0 0.0
    %1223 = vmatmul.mubr.f32.gmra.mrb[0].mxu0 %v1151
    %v1224 = vpop.f32.mrb[0].mxu0
    %v1225 = vadd.f32 %v1145, %v1224
    %v1226 = vpop.f32.mrb[0].mxu0
    %1227 = vdwg.mxu0
    %1228 = vst [vmem:[#allocation2] sm:$0xff] %v1220
    %1229 = vst [vmem:[#allocation2 + $0x8] sm:$0xff] %v1225
    %v1230 = vld [vmem:[#allocation2] sm:$0x3]
    %v1231 = vld [vmem:[#allocation2 + $0xe] sm:$0x3]
    %v1232 = vsub.f32 %v1230, %v1231
    %v1233 = vmul.f32 %v242, %v1232
    %v1234 = vadd.f32 %v1231, %v1233
    %v1235 = vxor.u32 %v1234, 2147483648
    %v1236 = vmul.f32 %v1235, 1.442695
    %v1237 = vpow.pop %v1236
    %v1238 = vadd.f32 %v1237, 1.0
    %v1239 = vrcp.pop %v1238
    %v1240 = vmul.f32 1.0, %v1239
    %v1241 = vtanh.pop %v1234
    %1243 = vrot.lane.b32.xlu0 %v1241, 64
    %v1244 = vpop.permute.xlu0 %1243
    %v1246 = vmul.f32 %v1240, %v1244
    %v1247 = vtanh.pop %v1246
    %1249 = vrot.lane.b32.xlu0 %v1247, 96
    %v1250 = vpop.permute.xlu0 %1249
    %v1252 = vmul.f32 %v1240, %v1250
    %v1253 = vld [vmem:[#allocation2 + $0x2] sm:$0x3]
    %v1254 = vld [vmem:[#allocation2 + $0xc] sm:$0x3]
    %v1255 = vsub.f32 %v1253, %v1254
    %v1256 = vmul.f32 %v242, %v1255
    %v1257 = vadd.f32 %v1254, %v1256
    %1259 = vrot.lane.b32.xlu0 %v1252, 32
    %v1260 = vpop.permute.xlu0 %1259
    %v1261 = vsel %vm151, %v1260, 0
    %1263 = vmatprep.subr.mxu0 0.0
    %1264 = vmatpush1.msra.mxu0 %v1134
    %1265 = vmatprep.subr.mxu0 0.0
    %1266 = vmatpush1.msra.mxu0 %v1135
    %1267 = vmatprep.subr.mxu0 0.0
    %1268 = vmatpush1.msra.mxu0 %v1136
    %1269 = vmatprep.subr.mxu0 0.0
    %1270 = vmatpush1.msra.mxu0 %v1137
    %1271 = vmatprep.subr.mxu0 0.0
    %1272 = vmatpush1.msra.mxu0 0.0
    %1273 = vmatprep.subr.mxu0 0.0
    %1274 = vmatpush1.msra.mxu0 0.0
    %1275 = vmatprep.subr.mxu0 0.0
    %1276 = vmatpush1.msra.mxu0 0.0
    %1277 = vmatprep.subr.mxu0 0.0
    %1278 = vmatpush1.msra.mxu0 0.0
    %1279 = vmatprep.subr.mxu0 0.0
    %1280 = vmatpush1.msra.mxu0 0.0
    %1281 = vmatprep.subr.mxu0 0.0
    %1282 = vmatpush1.msra.mxu0 0.0
    %1283 = vmatprep.subr.mxu0 0.0
    %1284 = vmatpush1.msra.mxu0 0.0
    %1285 = vmatprep.subr.mxu0 0.0
    %1286 = vmatpush1.msra.mxu0 0.0
    %1287 = vmatprep.subr.mxu0 0.0
    %1288 = vmatpush1.msra.mxu0 0.0
    %1289 = vmatprep.subr.mxu0 0.0
    %1290 = vmatpush1.msra.mxu0 0.0
    %1291 = vmatprep.subr.mxu0 0.0
    %1292 = vmatpush1.msra.mxu0 0.0
    %1293 = vmatprep.subr.mxu0 0.0
    %1294 = vmatpush1.msra.mxu0 0.0
    %1295 = vmatprep.subr.mxu0 0.0
    %1296 = vmatpush1.msra.mxu0 0.0
    %1297 = vmatprep.subr.mxu0 0.0
    %1298 = vmatpush1.msra.mxu0 0.0
    %1299 = vmatprep.subr.mxu0 0.0
    %1300 = vmatpush1.msra.mxu0 0.0
    %1301 = vmatprep.subr.mxu0 0.0
    %1302 = vmatpush1.msra.mxu0 0.0
    %1303 = vmatprep.subr.mxu0 0.0
    %1304 = vmatpush1.msra.mxu0 0.0
    %1305 = vmatprep.subr.mxu0 0.0
    %1306 = vmatpush1.msra.mxu0 0.0
    %1307 = vmatprep.subr.mxu0 0.0
    %1308 = vmatpush1.msra.mxu0 0.0
    %1309 = vmatprep.subr.mxu0 0.0
    %1310 = vmatpush1.msra.mxu0 0.0
    %1311 = vmatprep.subr.mxu0 0.0
    %1312 = vmatpush1.msra.mxu0 0.0
    %1313 = vmatprep.subr.mxu0 0.0
    %1314 = vmatpush1.msra.mxu0 0.0
    %1315 = vmatprep.subr.mxu0 0.0
    %1316 = vmatpush1.msra.mxu0 0.0
    %1317 = vmatprep.subr.mxu0 0.0
    %1318 = vmatpush1.msra.mxu0 0.0
    %1319 = vmatprep.subr.mxu0 0.0
    %1320 = vmatpush1.msra.mxu0 0.0
    %1321 = vmatprep.subr.mxu0 0.0
    %1322 = vmatpush1.msra.mxu0 0.0
    %1323 = vmatprep.subr.mxu0 0.0
    %1324 = vmatpush1.msra.mxu0 0.0
    %1325 = vmatprep.subr.mxu0 0.0
    %1326 = vmatpush1.msra.mxu0 0.0
    %1327 = vmatprep.mubr.f32.mxu0 0.0
    %1328 = vmatmul.mubr.f32.gmra.mrb[0].mxu0 %v1261
    %v1329 = vpop.f32.mrb[0].mxu0
    %v1330 = vadd.f32 0.0, %v1329
    %v1331 = vpop.f32.mrb[0].mxu0
    %1332 = vdwg.mxu0
    %v1333 = vadd.f32 %v1257, %v1330
    %v1334 = vxor.u32 %v1333, 2147483648
    %v1335 = vmul.f32 %v1334, 1.442695
    %v1336 = vpow.pop %v1335
    %v1337 = vadd.f32 %v1336, 1.0
    %v1338 = vrcp.pop %v1337
    %v1339 = vmul.f32 1.0, %v1338
    %v1340 = vtanh.pop %v1333
    %1342 = vrot.lane.b32.xlu0 %v1246, 32
    %v1343 = vpop.permute.xlu0 %1342
    %v1345 = vmul.f32 %v1339, %v1343
    %1347 = vrot.lane.b32.xlu0 %v1340, 64
    %v1348 = vpop.permute.xlu0 %1347
    %v1350 = vmul.f32 %v1339, %v1348
    %1352 = vrot.lane.b32.xlu0 %v1350, 32
    %v1353 = vpop.permute.xlu0 %1352
    %v1355 = vadd.f32 %v1345, %v1353
    %v1356 = vtanh.pop %v1355
    %1358 = vrot.lane.b32.xlu0 %v1356, 64
    %v1359 = vpop.permute.xlu0 %1358
    %v1361 = vmul.f32 %v1339, %v1359
    %v1362 = vld [vmem:[#allocation2 + $0x4] sm:$0x3]
    %v1363 = vld [vmem:[#allocation2 + $0xa] sm:$0x3]
    %v1364 = vsub.f32 %v1362, %v1363
    %v1365 = vmul.f32 %v242, %v1364
    %v1366 = vadd.f32 %v1363, %v1365
    %1368 = vrot.lane.b32.xlu0 %v1361, 32
    %v1369 = vpop.permute.xlu0 %1368
    %v1370 = vsel %vm151, %v1369, 0
    %1372 = vmatprep.subr.mxu0 0.0
    %1373 = vmatpush1.msra.mxu0 %v1134
    %1374 = vmatprep.subr.mxu0 0.0
    %1375 = vmatpush1.msra.mxu0 %v1135
    %1376 = vmatprep.subr.mxu0 0.0
    %1377 = vmatpush1.msra.mxu0 %v1136
    %1378 = vmatprep.subr.mxu0 0.0
    %1379 = vmatpush1.msra.mxu0 %v1137
    %1380 = vmatprep.subr.mxu0 0.0
    %1381 = vmatpush1.msra.mxu0 0.0
    %1382 = vmatprep.subr.mxu0 0.0
    %1383 = vmatpush1.msra.mxu0 0.0
    %1384 = vmatprep.subr.mxu0 0.0
    %1385 = vmatpush1.msra.mxu0 0.0
    %1386 = vmatprep.subr.mxu0 0.0
    %1387 = vmatpush1.msra.mxu0 0.0
    %1388 = vmatprep.subr.mxu0 0.0
    %1389 = vmatpush1.msra.mxu0 0.0
    %1390 = vmatprep.subr.mxu0 0.0
    %1391 = vmatpush1.msra.mxu0 0.0
    %1392 = vmatprep.subr.mxu0 0.0
    %1393 = vmatpush1.msra.mxu0 0.0
    %1394 = vmatprep.subr.mxu0 0.0
    %1395 = vmatpush1.msra.mxu0 0.0
    %1396 = vmatprep.subr.mxu0 0.0
    %1397 = vmatpush1.msra.mxu0 0.0
    %1398 = vmatprep.subr.mxu0 0.0
    %1399 = vmatpush1.msra.mxu0 0.0
    %1400 = vmatprep.subr.mxu0 0.0
    %1401 = vmatpush1.msra.mxu0 0.0
    %1402 = vmatprep.subr.mxu0 0.0
    %1403 = vmatpush1.msra.mxu0 0.0
    %1404 = vmatprep.subr.mxu0 0.0
    %1405 = vmatpush1.msra.mxu0 0.0
    %1406 = vmatprep.subr.mxu0 0.0
    %1407 = vmatpush1.msra.mxu0 0.0
    %1408 = vmatprep.subr.mxu0 0.0
    %1409 = vmatpush1.msra.mxu0 0.0
    %1410 = vmatprep.subr.mxu0 0.0
    %1411 = vmatpush1.msra.mxu0 0.0
    %1412 = vmatprep.subr.mxu0 0.0
    %1413 = vmatpush1.msra.mxu0 0.0
    %1414 = vmatprep.subr.mxu0 0.0
    %1415 = vmatpush1.msra.mxu0 0.0
    %1416 = vmatprep.subr.mxu0 0.0
    %1417 = vmatpush1.msra.mxu0 0.0
    %1418 = vmatprep.subr.mxu0 0.0
    %1419 = vmatpush1.msra.mxu0 0.0
    %1420 = vmatprep.subr.mxu0 0.0
    %1421 = vmatpush1.msra.mxu0 0.0
    %1422 = vmatprep.subr.mxu0 0.0
    %1423 = vmatpush1.msra.mxu0 0.0
    %1424 = vmatprep.subr.mxu0 0.0
    %1425 = vmatpush1.msra.mxu0 0.0
    %1426 = vmatprep.subr.mxu0 0.0
    %1427 = vmatpush1.msra.mxu0 0.0
    %1428 = vmatprep.subr.mxu0 0.0
    %1429 = vmatpush1.msra.mxu0 0.0
    %1430 = vmatprep.subr.mxu0 0.0
    %1431 = vmatpush1.msra.mxu0 0.0
    %1432 = vmatprep.subr.mxu0 0.0
    %1433 = vmatpush1.msra.mxu0 0.0
    %1434 = vmatprep.subr.mxu0 0.0
    %1435 = vmatpush1.msra.mxu0 0.0
    %1436 = vmatprep.mubr.f32.mxu0 0.0
    %1437 = vmatmul.mubr.f32.gmra.mrb[0].mxu0 %v1370
    %v1438 = vpop.f32.mrb[0].mxu0
    %v1439 = vadd.f32 0.0, %v1438
    %v1440 = vpop.f32.mrb[0].mxu0
    %1441 = vdwg.mxu0
    %v1442 = vadd.f32 %v1366, %v1439
    %v1443 = vxor.u32 %v1442, 2147483648
    %v1444 = vmul.f32 %v1443, 1.442695
    %v1445 = vpow.pop %v1444
    %v1446 = vadd.f32 %v1445, 1.0
    %v1447 = vrcp.pop %v1446
    %v1448 = vmul.f32 1.0, %v1447
    %v1449 = vtanh.pop %v1442
    %v1450 = vmul.f32 %v1448, %v1355
    %1452 = vrot.lane.b32.xlu0 %v1449, 64
    %v1453 = vpop.permute.xlu0 %1452
    %v1455 = vmul.f32 %v1448, %v1453
    %1457 = vrot.lane.b32.xlu0 %v1455, 32
    %v1458 = vpop.permute.xlu0 %1457
    %v1460 = vadd.f32 %v1450, %v1458
    %v1461 = vtanh.pop %v1460
    %1463 = vrot.lane.b32.xlu0 %v1461, 64
    %v1464 = vpop.permute.xlu0 %1463
    %v1466 = vmul.f32 %v1448, %v1464
    %v1467 = vld [vmem:[#allocation2 + $0x6] sm:$0x3]
    %v1468 = vld [vmem:[#allocation2 + $0x8] sm:$0x3]
    %v1469 = vsub.f32 %v1467, %v1468
    %v1470 = vmul.f32 %v242, %v1469
    %v1471 = vadd.f32 %v1468, %v1470
    %1473 = vrot.lane.b32.xlu0 %v1466, 32
    %v1474 = vpop.permute.xlu0 %1473
    %v1475 = vsel %vm151, %v1474, 0
    %1477 = vmatprep.subr.mxu0 0.0
    %1478 = vmatpush1.msra.mxu0 %v1134
    %1479 = vmatprep.subr.mxu0 0.0
    %1480 = vmatpush1.msra.mxu0 %v1135
    %1481 = vmatprep.subr.mxu0 0.0
    %1482 = vmatpush1.msra.mxu0 %v1136
    %1483 = vmatprep.subr.mxu0 0.0
    %1484 = vmatpush1.msra.mxu0 %v1137
    %1485 = vmatprep.subr.mxu0 0.0
    %1486 = vmatpush1.msra.mxu0 0.0
    %1487 = vmatprep.subr.mxu0 0.0
    %1488 = vmatpush1.msra.mxu0 0.0
    %1489 = vmatprep.subr.mxu0 0.0
    %1490 = vmatpush1.msra.mxu0 0.0
    %1491 = vmatprep.subr.mxu0 0.0
    %1492 = vmatpush1.msra.mxu0 0.0
    %1493 = vmatprep.subr.mxu0 0.0
    %1494 = vmatpush1.msra.mxu0 0.0
    %1495 = vmatprep.subr.mxu0 0.0
    %1496 = vmatpush1.msra.mxu0 0.0
    %1497 = vmatprep.subr.mxu0 0.0
    %1498 = vmatpush1.msra.mxu0 0.0
    %1499 = vmatprep.subr.mxu0 0.0
    %1500 = vmatpush1.msra.mxu0 0.0
    %1501 = vmatprep.subr.mxu0 0.0
    %1502 = vmatpush1.msra.mxu0 0.0
    %1503 = vmatprep.subr.mxu0 0.0
    %1504 = vmatpush1.msra.mxu0 0.0
    %1505 = vmatprep.subr.mxu0 0.0
    %1506 = vmatpush1.msra.mxu0 0.0
    %1507 = vmatprep.subr.mxu0 0.0
    %1508 = vmatpush1.msra.mxu0 0.0
    %1509 = vmatprep.subr.mxu0 0.0
    %1510 = vmatpush1.msra.mxu0 0.0
    %1511 = vmatprep.subr.mxu0 0.0
    %1512 = vmatpush1.msra.mxu0 0.0
    %1513 = vmatprep.subr.mxu0 0.0
    %1514 = vmatpush1.msra.mxu0 0.0
    %1515 = vmatprep.subr.mxu0 0.0
    %1516 = vmatpush1.msra.mxu0 0.0
    %1517 = vmatprep.subr.mxu0 0.0
    %1518 = vmatpush1.msra.mxu0 0.0
    %1519 = vmatprep.subr.mxu0 0.0
    %1520 = vmatpush1.msra.mxu0 0.0
    %1521 = vmatprep.subr.mxu0 0.0
    %1522 = vmatpush1.msra.mxu0 0.0
    %1523 = vmatprep.subr.mxu0 0.0
    %1524 = vmatpush1.msra.mxu0 0.0
    %1525 = vmatprep.subr.mxu0 0.0
    %1526 = vmatpush1.msra.mxu0 0.0
    %1527 = vmatprep.subr.mxu0 0.0
    %1528 = vmatpush1.msra.mxu0 0.0
    %1529 = vmatprep.subr.mxu0 0.0
    %1530 = vmatpush1.msra.mxu0 0.0
    %1531 = vmatprep.subr.mxu0 0.0
    %1532 = vmatpush1.msra.mxu0 0.0
    %1533 = vmatprep.subr.mxu0 0.0
    %1534 = vmatpush1.msra.mxu0 0.0
    %1535 = vmatprep.subr.mxu0 0.0
    %1536 = vmatpush1.msra.mxu0 0.0
    %1537 = vmatprep.subr.mxu0 0.0
    %1538 = vmatpush1.msra.mxu0 0.0
    %1539 = vmatprep.subr.mxu0 0.0
    %1540 = vmatpush1.msra.mxu0 0.0
    %1541 = vmatprep.mubr.f32.mxu0 0.0
    %1542 = vmatmul.mubr.f32.gmra.mrb[0].mxu0 %v1475
    %v1543 = vpop.f32.mrb[0].mxu0
    %v1544 = vadd.f32 0.0, %v1543
    %v1545 = vpop.f32.mrb[0].mxu0
    %1546 = vdwg.mxu0
    %v1547 = vadd.f32 %v1471, %v1544
    %v1548 = vxor.u32 %v1547, 2147483648
    %v1549 = vmul.f32 %v1548, 1.442695
    %v1550 = vpow.pop %v1549
    %v1551 = vadd.f32 %v1550, 1.0
    %v1552 = vrcp.pop %v1551
    %v1553 = vmul.f32 1.0, %v1552
    %v1554 = vtanh.pop %v1547
    %v1555 = vmul.f32 %v1553, %v1460
    %1557 = vrot.lane.b32.xlu0 %v1554, 64
    %v1558 = vpop.permute.xlu0 %1557
    %v1560 = vmul.f32 %v1553, %v1558
    %1562 = vrot.lane.b32.xlu0 %v1560, 32
    %v1563 = vpop.permute.xlu0 %1562
    %v1565 = vadd.f32 %v1555, %v1563
    %v1566 = vtanh.pop %v1565
    %1568 = vrot.lane.b32.xlu0 %v1566, 64
    %v1569 = vpop.permute.xlu0 %1568
    %v1571 = vmul.f32 %v1553, %v1569
    %v1572 = vsub.f32 %v1468, %v1467
    %v1573 = vmul.f32 %v242, %v1572
    %v1574 = vadd.f32 %v1467, %v1573
    %1576 = vrot.lane.b32.xlu0 %v1571, 32
    %v1577 = vpop.permute.xlu0 %1576
    %v1578 = vsel %vm151, %v1577, 0
    %1580 = vmatprep.subr.mxu0 0.0
    %1581 = vmatpush1.msra.mxu0 %v1134
    %1582 = vmatprep.subr.mxu0 0.0
    %1583 = vmatpush1.msra.mxu0 %v1135
    %1584 = vmatprep.subr.mxu0 0.0
    %1585 = vmatpush1.msra.mxu0 %v1136
    %1586 = vmatprep.subr.mxu0 0.0
    %1587 = vmatpush1.msra.mxu0 %v1137
    %1588 = vmatprep.subr.mxu0 0.0
    %1589 = vmatpush1.msra.mxu0 0.0
    %1590 = vmatprep.subr.mxu0 0.0
    %1591 = vmatpush1.msra.mxu0 0.0
    %1592 = vmatprep.subr.mxu0 0.0
    %1593 = vmatpush1.msra.mxu0 0.0
    %1594 = vmatprep.subr.mxu0 0.0
    %1595 = vmatpush1.msra.mxu0 0.0
    %1596 = vmatprep.subr.mxu0 0.0
    %1597 = vmatpush1.msra.mxu0 0.0
    %1598 = vmatprep.subr.mxu0 0.0
    %1599 = vmatpush1.msra.mxu0 0.0
    %1600 = vmatprep.subr.mxu0 0.0
    %1601 = vmatpush1.msra.mxu0 0.0
    %1602 = vmatprep.subr.mxu0 0.0
    %1603 = vmatpush1.msra.mxu0 0.0
    %1604 = vmatprep.subr.mxu0 0.0
    %1605 = vmatpush1.msra.mxu0 0.0
    %1606 = vmatprep.subr.mxu0 0.0
    %1607 = vmatpush1.msra.mxu0 0.0
    %1608 = vmatprep.subr.mxu0 0.0
    %1609 = vmatpush1.msra.mxu0 0.0
    %1610 = vmatprep.subr.mxu0 0.0
    %1611 = vmatpush1.msra.mxu0 0.0
    %1612 = vmatprep.subr.mxu0 0.0
    %1613 = vmatpush1.msra.mxu0 0.0
    %1614 = vmatprep.subr.mxu0 0.0
    %1615 = vmatpush1.msra.mxu0 0.0
    %1616 = vmatprep.subr.mxu0 0.0
    %1617 = vmatpush1.msra.mxu0 0.0
    %1618 = vmatprep.subr.mxu0 0.0
    %1619 = vmatpush1.msra.mxu0 0.0
    %1620 = vmatprep.subr.mxu0 0.0
    %1621 = vmatpush1.msra.mxu0 0.0
    %1622 = vmatprep.subr.mxu0 0.0
    %1623 = vmatpush1.msra.mxu0 0.0
    %1624 = vmatprep.subr.mxu0 0.0
    %1625 = vmatpush1.msra.mxu0 0.0
    %1626 = vmatprep.subr.mxu0 0.0
    %1627 = vmatpush1.msra.mxu0 0.0
    %1628 = vmatprep.subr.mxu0 0.0
    %1629 = vmatpush1.msra.mxu0 0.0
    %1630 = vmatprep.subr.mxu0 0.0
    %1631 = vmatpush1.msra.mxu0 0.0
    %1632 = vmatprep.subr.mxu0 0.0
    %1633 = vmatpush1.msra.mxu0 0.0
    %1634 = vmatprep.subr.mxu0 0.0
    %1635 = vmatpush1.msra.mxu0 0.0
    %1636 = vmatprep.subr.mxu0 0.0
    %1637 = vmatpush1.msra.mxu0 0.0
    %1638 = vmatprep.subr.mxu0 0.0
    %1639 = vmatpush1.msra.mxu0 0.0
    %1640 = vmatprep.subr.mxu0 0.0
    %1641 = vmatpush1.msra.mxu0 0.0
    %1642 = vmatprep.subr.mxu0 0.0
    %1643 = vmatpush1.msra.mxu0 0.0
    %1644 = vmatprep.mubr.f32.mxu0 0.0
    %1645 = vmatmul.mubr.f32.gmra.mrb[0].mxu0 %v1578
    %v1646 = vpop.f32.mrb[0].mxu0
    %v1647 = vadd.f32 0.0, %v1646
    %v1648 = vpop.f32.mrb[0].mxu0
    %1649 = vdwg.mxu0
    %v1650 = vadd.f32 %v1574, %v1647
    %v1651 = vxor.u32 %v1650, 2147483648
    %v1652 = vmul.f32 %v1651, 1.442695
    %v1653 = vpow.pop %v1652
    %v1654 = vadd.f32 %v1653, 1.0
    %v1655 = vrcp.pop %v1654
    %v1656 = vmul.f32 1.0, %v1655
    %v1657 = vtanh.pop %v1650
    %v1658 = vmul.f32 %v1656, %v1565
    %1660 = vrot.lane.b32.xlu0 %v1657, 64
    %v1661 = vpop.permute.xlu0 %1660
    %v1663 = vmul.f32 %v1656, %v1661
    %1665 = vrot.lane.b32.xlu0 %v1663, 32
    %v1666 = vpop.permute.xlu0 %1665
    %v1668 = vadd.f32 %v1658, %v1666
    %v1669 = vtanh.pop %v1668
    %1671 = vrot.lane.b32.xlu0 %v1669, 64
    %v1672 = vpop.permute.xlu0 %1671
    %v1674 = vmul.f32 %v1656, %v1672
    %v1675 = vsub.f32 %v1363, %v1362
    %v1676 = vmul.f32 %v242, %v1675
    %v1677 = vadd.f32 %v1362, %v1676
    %1679 = vrot.lane.b32.xlu0 %v1674, 32
    %v1680 = vpop.permute.xlu0 %1679
    %v1681 = vsel %vm151, %v1680, 0
    %1683 = vmatprep.subr.mxu0 0.0
    %1684 = vmatpush1.msra.mxu0 %v1134
    %1685 = vmatprep.subr.mxu0 0.0
    %1686 = vmatpush1.msra.mxu0 %v1135
    %1687 = vmatprep.subr.mxu0 0.0
    %1688 = vmatpush1.msra.mxu0 %v1136
    %1689 = vmatprep.subr.mxu0 0.0
    %1690 = vmatpush1.msra.mxu0 %v1137
    %1691 = vmatprep.subr.mxu0 0.0
    %1692 = vmatpush1.msra.mxu0 0.0
    %1693 = vmatprep.subr.mxu0 0.0
    %1694 = vmatpush1.msra.mxu0 0.0
    %1695 = vmatprep.subr.mxu0 0.0
    %1696 = vmatpush1.msra.mxu0 0.0
    %1697 = vmatprep.subr.mxu0 0.0
    %1698 = vmatpush1.msra.mxu0 0.0
    %1699 = vmatprep.subr.mxu0 0.0
    %1700 = vmatpush1.msra.mxu0 0.0
    %1701 = vmatprep.subr.mxu0 0.0
    %1702 = vmatpush1.msra.mxu0 0.0
    %1703 = vmatprep.subr.mxu0 0.0
    %1704 = vmatpush1.msra.mxu0 0.0
    %1705 = vmatprep.subr.mxu0 0.0
    %1706 = vmatpush1.msra.mxu0 0.0
    %1707 = vmatprep.subr.mxu0 0.0
    %1708 = vmatpush1.msra.mxu0 0.0
    %1709 = vmatprep.subr.mxu0 0.0
    %1710 = vmatpush1.msra.mxu0 0.0
    %1711 = vmatprep.subr.mxu0 0.0
    %1712 = vmatpush1.msra.mxu0 0.0
    %1713 = vmatprep.subr.mxu0 0.0
    %1714 = vmatpush1.msra.mxu0 0.0
    %1715 = vmatprep.subr.mxu0 0.0
    %1716 = vmatpush1.msra.mxu0 0.0
    %1717 = vmatprep.subr.mxu0 0.0
    %1718 = vmatpush1.msra.mxu0 0.0
    %1719 = vmatprep.subr.mxu0 0.0
    %1720 = vmatpush1.msra.mxu0 0.0
    %1721 = vmatprep.subr.mxu0 0.0
    %1722 = vmatpush1.msra.mxu0 0.0
    %1723 = vmatprep.subr.mxu0 0.0
    %1724 = vmatpush1.msra.mxu0 0.0
    %1725 = vmatprep.subr.mxu0 0.0
    %1726 = vmatpush1.msra.mxu0 0.0
    %1727 = vmatprep.subr.mxu0 0.0
    %1728 = vmatpush1.msra.mxu0 0.0
    %1729 = vmatprep.subr.mxu0 0.0
    %1730 = vmatpush1.msra.mxu0 0.0
    %1731 = vmatprep.subr.mxu0 0.0
    %1732 = vmatpush1.msra.mxu0 0.0
    %1733 = vmatprep.subr.mxu0 0.0
    %1734 = vmatpush1.msra.mxu0 0.0
    %1735 = vmatprep.subr.mxu0 0.0
    %1736 = vmatpush1.msra.mxu0 0.0
    %1737 = vmatprep.subr.mxu0 0.0
    %1738 = vmatpush1.msra.mxu0 0.0
    %1739 = vmatprep.subr.mxu0 0.0
    %1740 = vmatpush1.msra.mxu0 0.0
    %1741 = vmatprep.subr.mxu0 0.0
    %1742 = vmatpush1.msra.mxu0 0.0
    %1743 = vmatprep.subr.mxu0 0.0
    %1744 = vmatpush1.msra.mxu0 0.0
    %1745 = vmatprep.subr.mxu0 0.0
    %1746 = vmatpush1.msra.mxu0 0.0
    %1747 = vmatprep.mubr.f32.mxu0 0.0
    %1748 = vmatmul.mubr.f32.gmra.mrb[0].mxu0 %v1681
    %v1749 = vpop.f32.mrb[0].mxu0
    %v1750 = vadd.f32 0.0, %v1749
    %v1751 = vpop.f32.mrb[0].mxu0
    %1752 = vdwg.mxu0
    %v1753 = vadd.f32 %v1677, %v1750
    %v1754 = vxor.u32 %v1753, 2147483648
    %v1755 = vmul.f32 %v1754, 1.442695
    %v1756 = vpow.pop %v1755
    %v1757 = vadd.f32 %v1756, 1.0
    %v1758 = vrcp.pop %v1757
    %v1759 = vmul.f32 1.0, %v1758
    %v1760 = vtanh.pop %v1753
    %v1761 = vmul.f32 %v1759, %v1668
    %1763 = vrot.lane.b32.xlu0 %v1760, 64
    %v1764 = vpop.permute.xlu0 %1763
    %v1766 = vmul.f32 %v1759, %v1764
    %1768 = vrot.lane.b32.xlu0 %v1766, 32
    %v1769 = vpop.permute.xlu0 %1768
    %v1771 = vadd.f32 %v1761, %v1769
    %v1772 = vtanh.pop %v1771
    %1774 = vrot.lane.b32.xlu0 %v1772, 64
    %v1775 = vpop.permute.xlu0 %1774
    %v1777 = vmul.f32 %v1759, %v1775
    %v1778 = vsub.f32 %v1254, %v1253
    %v1779 = vmul.f32 %v242, %v1778
    %v1780 = vadd.f32 %v1253, %v1779
    %1782 = vrot.lane.b32.xlu0 %v1777, 32
    %v1783 = vpop.permute.xlu0 %1782
    %v1784 = vsel %vm151, %v1783, 0
    %1786 = vmatprep.subr.mxu0 0.0
    %1787 = vmatpush1.msra.mxu0 %v1134
    %1788 = vmatprep.subr.mxu0 0.0
    %1789 = vmatpush1.msra.mxu0 %v1135
    %1790 = vmatprep.subr.mxu0 0.0
    %1791 = vmatpush1.msra.mxu0 %v1136
    %1792 = vmatprep.subr.mxu0 0.0
    %1793 = vmatpush1.msra.mxu0 %v1137
    %1794 = vmatprep.subr.mxu0 0.0
    %1795 = vmatpush1.msra.mxu0 0.0
    %1796 = vmatprep.subr.mxu0 0.0
    %1797 = vmatpush1.msra.mxu0 0.0
    %1798 = vmatprep.subr.mxu0 0.0
    %1799 = vmatpush1.msra.mxu0 0.0
    %1800 = vmatprep.subr.mxu0 0.0
    %1801 = vmatpush1.msra.mxu0 0.0
    %1802 = vmatprep.subr.mxu0 0.0
    %1803 = vmatpush1.msra.mxu0 0.0
    %1804 = vmatprep.subr.mxu0 0.0
    %1805 = vmatpush1.msra.mxu0 0.0
    %1806 = vmatprep.subr.mxu0 0.0
    %1807 = vmatpush1.msra.mxu0 0.0
    %1808 = vmatprep.subr.mxu0 0.0
    %1809 = vmatpush1.msra.mxu0 0.0
    %1810 = vmatprep.subr.mxu0 0.0
    %1811 = vmatpush1.msra.mxu0 0.0
    %1812 = vmatprep.subr.mxu0 0.0
    %1813 = vmatpush1.msra.mxu0 0.0
    %1814 = vmatprep.subr.mxu0 0.0
    %1815 = vmatpush1.msra.mxu0 0.0
    %1816 = vmatprep.subr.mxu0 0.0
    %1817 = vmatpush1.msra.mxu0 0.0
    %1818 = vmatprep.subr.mxu0 0.0
    %1819 = vmatpush1.msra.mxu0 0.0
    %1820 = vmatprep.subr.mxu0 0.0
    %1821 = vmatpush1.msra.mxu0 0.0
    %1822 = vmatprep.subr.mxu0 0.0
    %1823 = vmatpush1.msra.mxu0 0.0
    %1824 = vmatprep.subr.mxu0 0.0
    %1825 = vmatpush1.msra.mxu0 0.0
    %1826 = vmatprep.subr.mxu0 0.0
    %1827 = vmatpush1.msra.mxu0 0.0
    %1828 = vmatprep.subr.mxu0 0.0
    %1829 = vmatpush1.msra.mxu0 0.0
    %1830 = vmatprep.subr.mxu0 0.0
    %1831 = vmatpush1.msra.mxu0 0.0
    %1832 = vmatprep.subr.mxu0 0.0
    %1833 = vmatpush1.msra.mxu0 0.0
    %1834 = vmatprep.subr.mxu0 0.0
    %1835 = vmatpush1.msra.mxu0 0.0
    %1836 = vmatprep.subr.mxu0 0.0
    %1837 = vmatpush1.msra.mxu0 0.0
    %1838 = vmatprep.subr.mxu0 0.0
    %1839 = vmatpush1.msra.mxu0 0.0
    %1840 = vmatprep.subr.mxu0 0.0
    %1841 = vmatpush1.msra.mxu0 0.0
    %1842 = vmatprep.subr.mxu0 0.0
    %1843 = vmatpush1.msra.mxu0 0.0
    %1844 = vmatprep.subr.mxu0 0.0
    %1845 = vmatpush1.msra.mxu0 0.0
    %1846 = vmatprep.subr.mxu0 0.0
    %1847 = vmatpush1.msra.mxu0 0.0
    %1848 = vmatprep.subr.mxu0 0.0
    %1849 = vmatpush1.msra.mxu0 0.0
    %1850 = vmatprep.mubr.f32.mxu0 0.0
    %1851 = vmatmul.mubr.f32.gmra.mrb[0].mxu0 %v1784
    %v1852 = vpop.f32.mrb[0].mxu0
    %v1853 = vadd.f32 0.0, %v1852
    %v1854 = vpop.f32.mrb[0].mxu0
    %1855 = vdwg.mxu0
    %v1856 = vadd.f32 %v1780, %v1853
    %v1857 = vxor.u32 %v1856, 2147483648
    %v1858 = vmul.f32 %v1857, 1.442695
    %v1859 = vpow.pop %v1858
    %v1860 = vadd.f32 %v1859, 1.0
    %v1861 = vrcp.pop %v1860
    %v1862 = vmul.f32 1.0, %v1861
    %v1863 = vtanh.pop %v1856
    %v1864 = vmul.f32 %v1862, %v1771
    %1866 = vrot.lane.b32.xlu0 %v1863, 64
    %v1867 = vpop.permute.xlu0 %1866
    %v1869 = vmul.f32 %v1862, %v1867
    %1871 = vrot.lane.b32.xlu0 %v1869, 32
    %v1872 = vpop.permute.xlu0 %1871
    %v1874 = vadd.f32 %v1864, %v1872
    %v1875 = vtanh.pop %v1874
    %1877 = vrot.lane.b32.xlu0 %v1875, 64
    %v1878 = vpop.permute.xlu0 %1877
    %v1880 = vmul.f32 %v1862, %v1878
    %v1881 = vsub.f32 %v1231, %v1230
    %v1882 = vmul.f32 %v242, %v1881
    %v1883 = vadd.f32 %v1230, %v1882
    %1885 = vrot.lane.b32.xlu0 %v1880, 32
    %v1886 = vpop.permute.xlu0 %1885
    %v1887 = vsel %vm151, %v1886, 0
    %1889 = vmatprep.subr.mxu0 0.0
    %1890 = vmatpush1.msra.mxu0 %v1134
    %1891 = vmatprep.subr.mxu0 0.0
    %1892 = vmatpush1.msra.mxu0 %v1135
    %1893 = vmatprep.subr.mxu0 0.0
    %1894 = vmatpush1.msra.mxu0 %v1136
    %1895 = vmatprep.subr.mxu0 0.0
    %1896 = vmatpush1.msra.mxu0 %v1137
    %1897 = vmatprep.subr.mxu0 0.0
    %1898 = vmatpush1.msra.mxu0 0.0
    %1899 = vmatprep.subr.mxu0 0.0
    %1900 = vmatpush1.msra.mxu0 0.0
    %1901 = vmatprep.subr.mxu0 0.0
    %1902 = vmatpush1.msra.mxu0 0.0
    %1903 = vmatprep.subr.mxu0 0.0
    %1904 = vmatpush1.msra.mxu0 0.0
    %1905 = vmatprep.subr.mxu0 0.0
    %1906 = vmatpush1.msra.mxu0 0.0
    %1907 = vmatprep.subr.mxu0 0.0
    %1908 = vmatpush1.msra.mxu0 0.0
    %1909 = vmatprep.subr.mxu0 0.0
    %1910 = vmatpush1.msra.mxu0 0.0
    %1911 = vmatprep.subr.mxu0 0.0
    %1912 = vmatpush1.msra.mxu0 0.0
    %1913 = vmatprep.subr.mxu0 0.0
    %1914 = vmatpush1.msra.mxu0 0.0
    %1915 = vmatprep.subr.mxu0 0.0
    %1916 = vmatpush1.msra.mxu0 0.0
    %1917 = vmatprep.subr.mxu0 0.0
    %1918 = vmatpush1.msra.mxu0 0.0
    %1919 = vmatprep.subr.mxu0 0.0
    %1920 = vmatpush1.msra.mxu0 0.0
    %1921 = vmatprep.subr.mxu0 0.0
    %1922 = vmatpush1.msra.mxu0 0.0
    %1923 = vmatprep.subr.mxu0 0.0
    %1924 = vmatpush1.msra.mxu0 0.0
    %1925 = vmatprep.subr.mxu0 0.0
    %1926 = vmatpush1.msra.mxu0 0.0
    %1927 = vmatprep.subr.mxu0 0.0
    %1928 = vmatpush1.msra.mxu0 0.0
    %1929 = vmatprep.subr.mxu0 0.0
    %1930 = vmatpush1.msra.mxu0 0.0
    %1931 = vmatprep.subr.mxu0 0.0
    %1932 = vmatpush1.msra.mxu0 0.0
    %1933 = vmatprep.subr.mxu0 0.0
    %1934 = vmatpush1.msra.mxu0 0.0
    %1935 = vmatprep.subr.mxu0 0.0
    %1936 = vmatpush1.msra.mxu0 0.0
    %1937 = vmatprep.subr.mxu0 0.0
    %1938 = vmatpush1.msra.mxu0 0.0
    %1939 = vmatprep.subr.mxu0 0.0
    %1940 = vmatpush1.msra.mxu0 0.0
    %1941 = vmatprep.subr.mxu0 0.0
    %1942 = vmatpush1.msra.mxu0 0.0
    %1943 = vmatprep.subr.mxu0 0.0
    %1944 = vmatpush1.msra.mxu0 0.0
    %1945 = vmatprep.subr.mxu0 0.0
    %1946 = vmatpush1.msra.mxu0 0.0
    %1947 = vmatprep.subr.mxu0 0.0
    %1948 = vmatpush1.msra.mxu0 0.0
    %1949 = vmatprep.subr.mxu0 0.0
    %1950 = vmatpush1.msra.mxu0 0.0
    %1951 = vmatprep.subr.mxu0 0.0
    %1952 = vmatpush1.msra.mxu0 0.0
    %1953 = vmatprep.mubr.f32.mxu0 0.0
    %1954 = vmatmul.mubr.f32.gmra.mrb[0].mxu0 %v1887
    %v1955 = vpop.f32.mrb[0].mxu0
    %v1956 = vadd.f32 0.0, %v1955
    %v1957 = vpop.f32.mrb[0].mxu0
    %1958 = vdwg.mxu0
    %v1959 = vadd.f32 %v1883, %v1956
    %v1960 = vxor.u32 %v1959, 2147483648
    %v1961 = vmul.f32 %v1960, 1.442695
    %v1962 = vpow.pop %v1961
    %v1963 = vadd.f32 %v1962, 1.0
    %v1964 = vrcp.pop %v1963
    %v1965 = vmul.f32 1.0, %v1964
    %v1966 = vtanh.pop %v1959
    %v1967 = vmul.f32 %v1965, %v1874
    %1969 = vrot.lane.b32.xlu0 %v1966, 64
    %v1970 = vpop.permute.xlu0 %1969
    %v1972 = vmul.f32 %v1965, %v1970
    %1974 = vrot.lane.b32.xlu0 %v1972, 32
    %v1975 = vpop.permute.xlu0 %1974
    %v1977 = vadd.f32 %v1967, %v1975
    %v1978 = vtanh.pop %v1977
    %1980 = vrot.lane.b32.xlu0 %v1978, 64
    %v1981 = vpop.permute.xlu0 %1980
    %v1983 = vmul.f32 %v1965, %v1981
    %v1984 = vsub.f32 %v1983, %v1252
    %1986 = vrot.lane.b32.xlu0 %v1984, 32
    %v1987 = vpop.permute.xlu0 %1986
    %v1989 = vmul.f32 %v1000, %v1987
    %1991 = vrot.lane.b32.xlu0 %v1989, 96
    %v1992 = vpop.permute.xlu0 %1991
    %v1994 = vadd.f32 %v1252, %v1992
    %v1995 = vld [vmem:[%s10] sm:$0xff]
    %v1996 = vld [vmem:[%s10 + $0x8] sm:$0xff]
    %v1997 = vld [vmem:[%s10 + $0x10] sm:$0xff]
    %v1998 = vld [vmem:[%s10 + $0x18] sm:$0xff]
    %v1999 = vld [vmem:[#allocation7] sm:$0x3]
    %v2000 = vld [vmem:[%s11] sm:$0xff]
    %vm2001 = vcmask 64512
    %v2003 = vsel %vm2001, %v1999, 0
    %2005 = vmatprep.subr.mxu0 0.0
    %2006 = vmatpush1.msra.mxu0 %v2000
    %2007 = vmatprep.subr.mxu0 0.0
    %2008 = vmatpush1.msra.mxu0 0.0
    %2009 = vmatprep.subr.mxu0 0.0
    %2010 = vmatpush1.msra.mxu0 0.0
    %2011 = vmatprep.subr.mxu0 0.0
    %2012 = vmatpush1.msra.mxu0 0.0
    %2013 = vmatprep.subr.mxu0 0.0
    %2014 = vmatpush1.msra.mxu0 0.0
    %2015 = vmatprep.subr.mxu0 0.0
    %2016 = vmatpush1.msra.mxu0 0.0
    %2017 = vmatprep.subr.mxu0 0.0
    %2018 = vmatpush1.msra.mxu0 0.0
    %2019 = vmatprep.subr.mxu0 0.0
    %2020 = vmatpush1.msra.mxu0 0.0
    %2021 = vmatprep.subr.mxu0 0.0
    %2022 = vmatpush1.msra.mxu0 0.0
    %2023 = vmatprep.subr.mxu0 0.0
    %2024 = vmatpush1.msra.mxu0 0.0
    %2025 = vmatprep.subr.mxu0 0.0
    %2026 = vmatpush1.msra.mxu0 0.0
    %2027 = vmatprep.subr.mxu0 0.0
    %2028 = vmatpush1.msra.mxu0 0.0
    %2029 = vmatprep.subr.mxu0 0.0
    %2030 = vmatpush1.msra.mxu0 0.0
    %2031 = vmatprep.subr.mxu0 0.0
    %2032 = vmatpush1.msra.mxu0 0.0
    %2033 = vmatprep.subr.mxu0 0.0
    %2034 = vmatpush1.msra.mxu0 0.0
    %2035 = vmatprep.subr.mxu0 0.0
    %2036 = vmatpush1.msra.mxu0 0.0
    %2037 = vmatprep.subr.mxu0 0.0
    %2038 = vmatpush1.msra.mxu0 0.0
    %2039 = vmatprep.subr.mxu0 0.0
    %2040 = vmatpush1.msra.mxu0 0.0
    %2041 = vmatprep.subr.mxu0 0.0
    %2042 = vmatpush1.msra.mxu0 0.0
    %2043 = vmatprep.subr.mxu0 0.0
    %2044 = vmatpush1.msra.mxu0 0.0
    %2045 = vmatprep.subr.mxu0 0.0
    %2046 = vmatpush1.msra.mxu0 0.0
    %2047 = vmatprep.subr.mxu0 0.0
    %2048 = vmatpush1.msra.mxu0 0.0
    %2049 = vmatprep.subr.mxu0 0.0
    %2050 = vmatpush1.msra.mxu0 0.0
    %2051 = vmatprep.subr.mxu0 0.0
    %2052 = vmatpush1.msra.mxu0 0.0
    %2053 = vmatprep.subr.mxu0 0.0
    %2054 = vmatpush1.msra.mxu0 0.0
    %2055 = vmatprep.subr.mxu0 0.0
    %2056 = vmatpush1.msra.mxu0 0.0
    %2057 = vmatprep.subr.mxu0 0.0
    %2058 = vmatpush1.msra.mxu0 0.0
    %2059 = vmatprep.subr.mxu0 0.0
    %2060 = vmatpush1.msra.mxu0 0.0
    %2061 = vmatprep.subr.mxu0 0.0
    %2062 = vmatpush1.msra.mxu0 0.0
    %2063 = vmatprep.subr.mxu0 0.0
    %2064 = vmatpush1.msra.mxu0 0.0
    %2065 = vmatprep.subr.mxu0 0.0
    %2066 = vmatpush1.msra.mxu0 0.0
    %2067 = vmatprep.subr.mxu0 0.0
    %2068 = vmatpush1.msra.mxu0 0.0
    %2069 = vmatprep.mubr.f32.mxu0 0.0
    %2070 = vmatmul.mubr.f32.gmra.mrb[0].mxu0 %v2003
    %v2071 = vpop.f32.mrb[0].mxu0
    %v2072 = vadd.f32 0.0, %v2071
    %v2073 = vpop.f32.mrb[0].mxu0
    %2074 = vdwg.mxu0
    %2076 = vrot.lane.b32.xlu0 %v1994, 32
    %v2077 = vpop.permute.xlu0 %2076
    %v2078 = vsel %vm151, %v2077, 0
    %2080 = vmatprep.subr.mxu0 0.0
    %2081 = vmatpush1.msra.mxu0 %v1995
    %2082 = vmatprep.subr.mxu0 0.0
    %2083 = vmatpush1.msra.mxu0 %v1996
    %2084 = vmatprep.subr.mxu0 0.0
    %2085 = vmatpush1.msra.mxu0 %v1997
    %2086 = vmatprep.subr.mxu0 0.0
    %2087 = vmatpush1.msra.mxu0 %v1998
    %2088 = vmatprep.subr.mxu0 0.0
    %2089 = vmatpush1.msra.mxu0 0.0
    %2090 = vmatprep.subr.mxu0 0.0
    %2091 = vmatpush1.msra.mxu0 0.0
    %2092 = vmatprep.subr.mxu0 0.0
    %2093 = vmatpush1.msra.mxu0 0.0
    %2094 = vmatprep.subr.mxu0 0.0
    %2095 = vmatpush1.msra.mxu0 0.0
    %2096 = vmatprep.subr.mxu0 0.0
    %2097 = vmatpush1.msra.mxu0 0.0
    %2098 = vmatprep.subr.mxu0 0.0
    %2099 = vmatpush1.msra.mxu0 0.0
    %2100 = vmatprep.subr.mxu0 0.0
    %2101 = vmatpush1.msra.mxu0 0.0
    %2102 = vmatprep.subr.mxu0 0.0
    %2103 = vmatpush1.msra.mxu0 0.0
    %2104 = vmatprep.subr.mxu0 0.0
    %2105 = vmatpush1.msra.mxu0 0.0
    %2106 = vmatprep.subr.mxu0 0.0
    %2107 = vmatpush1.msra.mxu0 0.0
    %2108 = vmatprep.subr.mxu0 0.0
    %2109 = vmatpush1.msra.mxu0 0.0
    %2110 = vmatprep.subr.mxu0 0.0
    %2111 = vmatpush1.msra.mxu0 0.0
    %2112 = vmatprep.subr.mxu0 0.0
    %2113 = vmatpush1.msra.mxu0 0.0
    %2114 = vmatprep.subr.mxu0 0.0
    %2115 = vmatpush1.msra.mxu0 0.0
    %2116 = vmatprep.subr.mxu0 0.0
    %2117 = vmatpush1.msra.mxu0 0.0
    %2118 = vmatprep.subr.mxu0 0.0
    %2119 = vmatpush1.msra.mxu0 0.0
    %2120 = vmatprep.subr.mxu0 0.0
    %2121 = vmatpush1.msra.mxu0 0.0
    %2122 = vmatprep.subr.mxu0 0.0
    %2123 = vmatpush1.msra.mxu0 0.0
    %2124 = vmatprep.subr.mxu0 0.0
    %2125 = vmatpush1.msra.mxu0 0.0
    %2126 = vmatprep.subr.mxu0 0.0
    %2127 = vmatpush1.msra.mxu0 0.0
    %2128 = vmatprep.subr.mxu0 0.0
    %2129 = vmatpush1.msra.mxu0 0.0
    %2130 = vmatprep.subr.mxu0 0.0
    %2131 = vmatpush1.msra.mxu0 0.0
    %2132 = vmatprep.subr.mxu0 0.0
    %2133 = vmatpush1.msra.mxu0 0.0
    %2134 = vmatprep.subr.mxu0 0.0
    %2135 = vmatpush1.msra.mxu0 0.0
    %2136 = vmatprep.subr.mxu0 0.0
    %2137 = vmatpush1.msra.mxu0 0.0
    %2138 = vmatprep.subr.mxu0 0.0
    %2139 = vmatpush1.msra.mxu0 0.0
    %2140 = vmatprep.subr.mxu0 0.0
    %2141 = vmatpush1.msra.mxu0 0.0
    %2142 = vmatprep.subr.mxu0 0.0
    %2143 = vmatpush1.msra.mxu0 0.0
    %2144 = vmatprep.mubr.f32.mxu0 0.0
    %2145 = vmatmul.mubr.f32.gmra.mrb[0].mxu0 %v2078
    %v2146 = vpop.f32.mrb[0].mxu0
    %v2147 = vadd.f32 %v2072, %v2146
    %v2148 = vpop.f32.mrb[0].mxu0
    %2149 = vdwg.mxu0
    %v2150 = vld [vmem:[%s12] sm:$0x1]
    %v2152 = vlaneseq
    %v2153 = vshrl.u32 %v2152, 7
    %v2154 = vsub.s32 0, %v2153
    %v2155 = vrot.slane %v2150, %v2154
    %v2157 = vadd.f32 %v2147, %v2155
    %vm2158 = vcmask 74752
    %2159 = vst.msk [vmem:[#allocation16] sm:$0x3] %vm2158, %v2157
    // Predicated region
    $region82: #{tpu_custom_call.1} parent=1 // pred_check
      _
    $region83: #{tpu_custom_call.1} parent=1 // pred_check_branch
      %2161 = sbr.rel (0) target = $region85
    $region84: #{tpu_custom_call.1} parent=1 // pred_region
      %s2163 = ssub.s32 32, 32
      %2164 = vsyncadd [#allocation6], %s2163
      %s2166 = sshll.u32 [#allocation16], 4
      %s2167 = int_to_ptr.vmem [resolvable:$true] %s2166
      %2169 = dma.vmem_to_hbm [thread:$0]  %s2167, 32, %s13, [#allocation6]
    $region85: #{tpu_custom_call.1} parent=1 // pred_fallthru
      _
    // Predicated region
    $region86: #{tpu_custom_call.1} parent=1 // pred_check
      _
    $region87: #{tpu_custom_call.1} parent=1 // pred_check_branch
      %2171 = sbr.rel (0) target = $region89
    $region88: #{tpu_custom_call.1} parent=1 // pred_region
      %2172 = dma.done [#allocation6], 32
    $region89: #{tpu_custom_call.1} parent=1 // pred_fallthru
      _
    %2173 = vsyncpa [#allocation5], 1
    %2174 = vsyncpa [#allocation8], 1
    %2175 = vsyncpa [#allocation11], 1
    %2176 = vsyncpa [#allocation14], 1
    %2177 = vsyncpa [#allocation6], 1

</llo_original>
